<compile_context>
chip_gen: v7x
topology: tpu7x:2x2x1
jax: 0.10.0
libtpu: 0.0.40
codegen_flags: <defaults>
</compile_context>

<pallas_src>
import functools

import jax
import jax.numpy as jnp
from jax.experimental import pallas as pl
from jax.experimental.pallas import tpu as pltpu


def _cloud_inception_kernel(a0_ref, a1p_ref, w1_ref, w2_ref, b_ref, o_ref, *, width):
    """One batch image per grid step.

    a0_ref : (1, HW, Cp)          bf16  branch1 input, pixel-flattened NHWC
    a1p_ref: (1, HW + 2W+2, Cp)   bf16  branch2 input, pixel-flattened + halo pad
    w1_ref : (Cp, C1)             bf16  1x1 conv weight
    w2_ref : (9, Cp, C2)          bf16  3x3 conv weight, tap-major (kh*3 + kw)
    b_ref  : (1, C1+C2)           f32   concatenated bias
    o_ref  : (1, HW, C1+C2)       bf16  channel-concatenated output
    """
    hw = a0_ref.shape[1]
    c1 = w1_ref.shape[1]
    c2 = w2_ref.shape[2]

    # ---- branch 1: 1x1 conv == per-pixel channel matmul ----
    y1 = jnp.dot(a0_ref[0], w1_ref[...], preferred_element_type=jnp.float32)
    y1 = jnp.maximum(y1 + b_ref[:, :c1], 0.0)
    o_ref[0, :, :c1] = y1.astype(o_ref.dtype)

    # ---- branch 2: 3x3 'SAME' conv as 9 accumulating dots over shifted views ----
    # The padded pixel-flattened slab turns every conv tap into a static sublane
    # slice of one buffer; only row-wrap taps at the image's left/right edges
    # need masking (top/bottom taps fall into the zero pad automatically).
    col = jax.lax.broadcasted_iota(jnp.int32, (hw, 1), 0) % width
    left_edge = col == 0            # output pixels in image column 0
    right_edge = col == width - 1   # output pixels in image column W-1

    acc = jnp.zeros((hw, c2), jnp.float32)
    for kh in range(3):
        for kw in range(3):
            off = kh * width + kw   # static offset into the padded pixel axis
            patch = a1p_ref[0, off:off + hw, :]
            if kw == 0:             # tap at column w-1: invalid (row wrap) when w == 0
                patch = jnp.where(left_edge, 0.0, patch)
            elif kw == 2:           # tap at column w+1: invalid when w == W-1
                patch = jnp.where(right_edge, 0.0, patch)
            acc = acc + jnp.dot(patch, w2_ref[kh * 3 + kw],
                                preferred_element_type=jnp.float32)
    y2 = jnp.maximum(acc + b_ref[:, c1:], 0.0)
    o_ref[0, :, c1:] = y2.astype(o_ref.dtype)


def cloud_inception(x0_nchw, x1_nchw, params):
    """CloudInception forward: cat([ReLU(conv1x1(x0)), ReLU(conv3x3(x1))], channel)."""
    w1, b1, w2, b2 = params["w1"], params["b1"], params["w2"], params["b2"]  # OIHW / (C,)
    N, C, H, W = x0_nchw.shape
    C1 = w1.shape[0]
    C2 = w2.shape[0]
    C_out = C1 + C2
    HW = H * W
    P = W + 1                       # halo pad: covers all taps kh, kw in {-1, 0, +1}
    Cp = max(8, ((C + 7) // 8) * 8)  # small-shape guard for the MXU contraction
    cpad = Cp - C

    # --- layout glue (each a single cheap pass) ---
    # TODO(synk): if callers can supply/consume NHWC directly, these transposes
    # (and the final one) disappear; kept only to preserve the NCHW module API.
    a0 = jnp.transpose(x0_nchw, (0, 2, 3, 1)).reshape(N, HW, C).astype(jnp.bfloat16)
    a1 = jnp.transpose(x1_nchw, (0, 2, 3, 1)).reshape(N, HW, C).astype(jnp.bfloat16)
    if cpad:
        a0 = jnp.pad(a0, ((0, 0), (0, 0), (0, cpad)))
        a1 = jnp.pad(a1, ((0, 0), (0, 0), (0, cpad)))
    # Single copy of x1 with a zero halo on the flattened pixel axis; the kernel
    # reads it exactly once per image.
    a1p = jnp.pad(a1, ((0, 0), (P, P), (0, 0)))

    # Weights: PyTorch OIHW -> matmul layouts (branches stay separate; no
    # block-diagonal zeros on the MXU).
    w1m = jnp.transpose(w1.reshape(C1, C), (1, 0)).astype(jnp.bfloat16)            # (C, C1)
    w2m = jnp.transpose(w2, (2, 3, 1, 0)).reshape(9, C, C2).astype(jnp.bfloat16)   # (9, C, C2)
    if cpad:
        w1m = jnp.pad(w1m, ((0, cpad), (0, 0)))
        w2m = jnp.pad(w2m, ((0, 0), (0, cpad), (0, 0)))
    bias = jnp.concatenate([b1, b2]).reshape(1, C_out).astype(jnp.float32)

    # TODO(synk): for very large H*W, tile the pixel axis per image (overlapping
    # halo via manual DMA) instead of whole-image blocks.
    out = pl.pallas_call(
        functools.partial(_cloud_inception_kernel, width=W),
        out_shape=jax.ShapeDtypeStruct((N, HW, C_out), jnp.bfloat16),
        grid_spec=pltpu.PrefetchScalarGridSpec(
            num_scalar_prefetch=0,
            grid=(N,),
            in_specs=[
                pl.BlockSpec((1, HW, Cp), lambda n: (n, 0, 0)),          # streamed
                pl.BlockSpec((1, HW + 2 * P, Cp), lambda n: (n, 0, 0)),  # streamed
                pl.BlockSpec((Cp, C1), lambda n: (0, 0)),                # resident
                pl.BlockSpec((9, Cp, C2), lambda n: (0, 0, 0)),          # resident
                pl.BlockSpec((1, C_out), lambda n: (0, 0)),              # resident
            ],
            out_specs=pl.BlockSpec((1, HW, C_out), lambda n: (n, 0, 0)),
        ),
        compiler_params=pltpu.CompilerParams(
            dimension_semantics=("parallel",),   # shard batch across TCs on v7x
        ),
    )(a0, a1p, w1m, w2m, bias)

    out = out.reshape(N, H, W, C_out)
    return jnp.transpose(out, (0, 3, 1, 2))      # NCHW, bf16


def _reference(x0_nchw, x1_nchw, params):
    """Pure-JAX conv reference, quantized to match the kernel's numerics
    (bf16 operands, f32 accumulation, bf16 output store)."""
    w1, b1, w2, b2 = params["w1"], params["b1"], params["w2"], params["b2"]
    q = lambda t: t.astype(jnp.bfloat16).astype(jnp.float32)
    dn = ("NCHW", "OIHW", "NCHW")
    y1 = jax.lax.conv_general_dilated(
        q(x0_nchw), q(w1), (1, 1), "SAME", dimension_numbers=dn,
        precision=jax.lax.Precision.HIGHEST)
    y1 = jnp.maximum(y1 + b1.reshape(1, -1, 1, 1), 0.0)
    y2 = jax.lax.conv_general_dilated(
        q(x1_nchw), q(w2), (1, 1), "SAME", dimension_numbers=dn,
        precision=jax.lax.Precision.HIGHEST)
    y2 = jnp.maximum(y2 + b2.reshape(1, -1, 1, 1), 0.0)
    y = jnp.concatenate([y1, y2], axis=1)
    return y.astype(jnp.bfloat16).astype(jnp.float32)


if __name__ == "__main__":
    key = jax.random.PRNGKey(0)
    kw1, kb1, kw2, kb2, kx0, kx1 = jax.random.split(key, 6)

    N, C_in, H, W = 2, 4, 16, 16
    C1, C2 = 8, 8

    params = {
        # PyTorch Conv2d layouts: (C_out, C_in, kH, kW)
        "w1": 0.1 * jax.random.normal(kw1, (C1, C_in, 1, 1), jnp.float32),
        "b1": 0.1 * jax.random.normal(kb1, (C1,), jnp.float32),
        "w2": 0.1 * jax.random.normal(kw2, (C2, C_in, 3, 3), jnp.float32),
        "b2": 0.1 * jax.random.normal(kb2, (C2,), jnp.float32),
    }

    # x is a list of two NCHW tensors (one per cloud branch)
    x0 = jax.random.normal(kx0, (N, C_in, H, W), jnp.float32)
    x1 = jax.random.normal(kx1, (N, C_in, H, W), jnp.float32)

    out = jax.block_until_ready(cloud_inception(x0, x1, params))
    ref = jax.block_until_ready(_reference(x0, x1, params))

    assert out.shape == (N, C1 + C2, H, W), out.shape
    assert jnp.allclose(out.astype(jnp.float32), ref, atol=2e-2, rtol=2e-2), \
        "mismatch vs reference"

    print("KERNEL_OK")
</pallas_src>

<mosaic_0001>
module attributes {stable_mosaic.version = 11 : i64} {
  func.func @_cloud_inception_kernel(%arg0: i32, %arg1: memref<1x256x8xbf16, #tpu.memory_space<vmem>>, %arg2: memref<1x290x8xbf16, #tpu.memory_space<vmem>>, %arg3: memref<8x8xbf16, #tpu.memory_space<vmem>>, %arg4: memref<9x8x8xbf16, #tpu.memory_space<vmem>>, %arg5: memref<1x16xf32, #tpu.memory_space<vmem>>, %arg6: memref<1x256x16xbf16, #tpu.memory_space<vmem>>) attributes {dimension_semantics = [#tpu.dimension_semantics<parallel>], iteration_bounds = array<i64: 2>, scalar_prefetch = 0 : i64, scratch_operands = 0 : i64, tpu.core_type = #tpu.core_type<tc>, window_params = [{transform_indices = @transform_0, window_bounds = array<i64: 1, 256, 8>}, {transform_indices = @transform_1, window_bounds = array<i64: 1, 290, 8>}, {pipeline_mode = #tpu.pipeline_mode<synchronous>, transform_indices = @transform_2, window_bounds = array<i64: 8, 8>}, {pipeline_mode = #tpu.pipeline_mode<synchronous>, transform_indices = @transform_3, window_bounds = array<i64: 9, 8, 8>}, {pipeline_mode = #tpu.pipeline_mode<synchronous>, transform_indices = @transform_4, window_bounds = array<i64: 1, 16>}, {transform_indices = @transform_5, window_bounds = array<i64: 1, 256, 16>}]} {
    %c0 = arith.constant 0 : index
    %c0_0 = arith.constant 0 : index
    %c0_1 = arith.constant 0 : index
    %0 = vector.load %arg1[%c0, %c0_0, %c0_1] : memref<1x256x8xbf16, #tpu.memory_space<vmem>>, vector<1x256x8xbf16>
    %1 = vector.shape_cast %0 : vector<1x256x8xbf16> to vector<256x8xbf16>
    %c0_2 = arith.constant 0 : index
    %c0_3 = arith.constant 0 : index
    %2 = vector.load %arg3[%c0_2, %c0_3] : memref<8x8xbf16, #tpu.memory_space<vmem>>, vector<8x8xbf16>
    %cst = arith.constant dense<0.000000e+00> : vector<256x8xf32>
    %3 = tpu.matmul %1, %2, %cst {dimension_numbers = #tpu.dot_dimension_numbers<[1], [0], [0], [1], [0, 0, 1, 1], [], []>} : vector<256x8xbf16>, vector<8x8xbf16>, vector<256x8xf32> -> vector<256x8xf32>
    %c0_4 = arith.constant 0 : index
    %c0_5 = arith.constant 0 : index
    %4 = vector.load %arg5[%c0_4, %c0_5] : memref<1x16xf32, #tpu.memory_space<vmem>>, vector<1x8xf32>
    %5 = vector.broadcast %4 : vector<1x8xf32> to vector<256x8xf32>
    %6 = arith.addf %3, %5 : vector<256x8xf32>
    %cst_6 = arith.constant 0.000000e+00 : f32
    %7 = vector.broadcast %cst_6 : f32 to vector<256x8xf32>
    %8 = arith.maximumf %6, %7 : vector<256x8xf32>
    %9 = arith.truncf %8 : vector<256x8xf32> to vector<256x8xbf16>
    %c0_7 = arith.constant 0 : index
    %c0_8 = arith.constant 0 : index
    %c0_9 = arith.constant 0 : index
    %10 = vector.load %arg6[%c0_7, %c0_8, %c0_9] : memref<1x256x16xbf16, #tpu.memory_space<vmem>>, vector<1x256x8xbf16>
    %11 = vector.shape_cast %10 : vector<1x256x8xbf16> to vector<256x8xbf16>
    %12 = vector.shape_cast %9 : vector<256x8xbf16> to vector<1x256x8xbf16>
    tpu.vector_store %arg6[%c0_7, %c0_8, %c0_9], %12 {strides = array<i32>} : memref<1x256x16xbf16, #tpu.memory_space<vmem>>, vector<1x256x8xbf16>,
    %13 = tpu.iota {dimensions = array<i32: 0>} : vector<256x1xi32>
    %c16_i32 = arith.constant 16 : i32
    %c0_i32 = arith.constant 0 : i32
    %14 = arith.cmpi eq, %c16_i32, %c0_i32 : i32
    %c1_i32 = arith.constant 1 : i32
    %15 = arith.select %14, %c1_i32, %c16_i32 : i32
    %16 = vector.broadcast %15 : i32 to vector<256x1xi32>
    %17 = arith.remsi %13, %16 : vector<256x1xi32>
    %c0_i32_10 = arith.constant 0 : i32
    %18 = vector.broadcast %c0_i32_10 : i32 to vector<256x1xi32>
    %19 = arith.cmpi ne, %17, %18 : vector<256x1xi32>
    %c0_i32_11 = arith.constant 0 : i32
    %20 = vector.broadcast %c0_i32_11 : i32 to vector<256x1xi32>
    %21 = arith.cmpi slt, %17, %20 : vector<256x1xi32>
    %c0_i32_12 = arith.constant 0 : i32
    %22 = arith.cmpi slt, %15, %c0_i32_12 : i32
    %23 = vector.broadcast %22 : i1 to vector<256x1xi1>
    %24 = vector.broadcast %23 : vector<256x1xi1> to vector<256x1xi1>
    %25 = arith.xori %21, %24 : vector<256x1xi1>
    %26 = arith.andi %25, %19 : vector<256x1xi1>
    %27 = vector.broadcast %15 : i32 to vector<256x1xi32>
    %28 = arith.addi %17, %27 : vector<256x1xi32>
    %29 = arith.select %26, %28, %17 : vector<256x1xi1>, vector<256x1xi32>
    %c0_i32_13 = arith.constant 0 : i32
    %30 = vector.broadcast %c0_i32_13 : i32 to vector<256x1xi32>
    %31 = arith.cmpi eq, %29, %30 : vector<256x1xi32>
    %c15_i32 = arith.constant 15 : i32
    %32 = vector.broadcast %c15_i32 : i32 to vector<256x1xi32>
    %33 = arith.cmpi eq, %29, %32 : vector<256x1xi32>
    %cst_14 = arith.constant 0.000000e+00 : f32
    %34 = vector.broadcast %cst_14 : f32 to vector<256x8xf32>
    %c0_15 = arith.constant 0 : index
    %c0_16 = arith.constant 0 : index
    %c0_17 = arith.constant 0 : index
    %35 = vector.load %arg2[%c0_15, %c0_16, %c0_17] : memref<1x290x8xbf16, #tpu.memory_space<vmem>>, vector<1x256x8xbf16>
    %36 = vector.shape_cast %35 : vector<1x256x8xbf16> to vector<256x8xbf16>
    %cst_18 = arith.constant 0.000000e+00 : f32
    %37 = arith.truncf %cst_18 : f32 to bf16
    %38 = vector.shape_cast %31 : vector<256x1xi1> to vector<256x1xi1>
    %39 = vector.broadcast %38 : vector<256x1xi1> to vector<256x8xi1>
    %40 = vector.broadcast %37 : bf16 to vector<256x8xbf16>
    %41 = arith.select %39, %40, %36 : vector<256x8xi1>, vector<256x8xbf16>
    %c0_19 = arith.constant 0 : index
    %c0_20 = arith.constant 0 : index
    %c0_21 = arith.constant 0 : index
    %42 = vector.load %arg4[%c0_19, %c0_20, %c0_21] : memref<9x8x8xbf16, #tpu.memory_space<vmem>>, vector<1x8x8xbf16>
    %43 = vector.shape_cast %42 : vector<1x8x8xbf16> to vector<8x8xbf16>
    %cst_22 = arith.constant dense<0.000000e+00> : vector<256x8xf32>
    %44 = tpu.matmul %41, %43, %cst_22 {dimension_numbers = #tpu.dot_dimension_numbers<[1], [0], [0], [1], [0, 0, 1, 1], [], []>} : vector<256x8xbf16>, vector<8x8xbf16>, vector<256x8xf32> -> vector<256x8xf32>
    %45 = arith.addf %34, %44 : vector<256x8xf32>
    %c0_23 = arith.constant 0 : index
    %c1 = arith.constant 1 : index
    %c0_24 = arith.constant 0 : index
    %46 = vector.load %arg2[%c0_23, %c1, %c0_24] : memref<1x290x8xbf16, #tpu.memory_space<vmem>>, vector<1x256x8xbf16>
    %47 = vector.shape_cast %46 : vector<1x256x8xbf16> to vector<256x8xbf16>
    %c1_25 = arith.constant 1 : index
    %c0_26 = arith.constant 0 : index
    %c0_27 = arith.constant 0 : index
    %48 = vector.load %arg4[%c1_25, %c0_26, %c0_27] : memref<9x8x8xbf16, #tpu.memory_space<vmem>>, vector<1x8x8xbf16>
    %49 = vector.shape_cast %48 : vector<1x8x8xbf16> to vector<8x8xbf16>
    %cst_28 = arith.constant dense<0.000000e+00> : vector<256x8xf32>
    %50 = tpu.matmul %47, %49, %cst_28 {dimension_numbers = #tpu.dot_dimension_numbers<[1], [0], [0], [1], [0, 0, 1, 1], [], []>} : vector<256x8xbf16>, vector<8x8xbf16>, vector<256x8xf32> -> vector<256x8xf32>
    %51 = arith.addf %45, %50 : vector<256x8xf32>
    %c0_29 = arith.constant 0 : index
    %c2 = arith.constant 2 : index
    %c0_30 = arith.constant 0 : index
    %52 = vector.load %arg2[%c0_29, %c2, %c0_30] : memref<1x290x8xbf16, #tpu.memory_space<vmem>>, vector<1x256x8xbf16>
    %53 = vector.shape_cast %52 : vector<1x256x8xbf16> to vector<256x8xbf16>
    %cst_31 = arith.constant 0.000000e+00 : f32
    %54 = arith.truncf %cst_31 : f32 to bf16
    %55 = vector.shape_cast %33 : vector<256x1xi1> to vector<256x1xi1>
    %56 = vector.broadcast %55 : vector<256x1xi1> to vector<256x8xi1>
    %57 = vector.broadcast %54 : bf16 to vector<256x8xbf16>
    %58 = arith.select %56, %57, %53 : vector<256x8xi1>, vector<256x8xbf16>
    %c2_32 = arith.constant 2 : index
    %c0_33 = arith.constant 0 : index
    %c0_34 = arith.constant 0 : index
    %59 = vector.load %arg4[%c2_32, %c0_33, %c0_34] : memref<9x8x8xbf16, #tpu.memory_space<vmem>>, vector<1x8x8xbf16>
    %60 = vector.shape_cast %59 : vector<1x8x8xbf16> to vector<8x8xbf16>
    %cst_35 = arith.constant dense<0.000000e+00> : vector<256x8xf32>
    %61 = tpu.matmul %58, %60, %cst_35 {dimension_numbers = #tpu.dot_dimension_numbers<[1], [0], [0], [1], [0, 0, 1, 1], [], []>} : vector<256x8xbf16>, vector<8x8xbf16>, vector<256x8xf32> -> vector<256x8xf32>
    %62 = arith.addf %51, %61 : vector<256x8xf32>
    %c0_36 = arith.constant 0 : index
    %c16 = arith.constant 16 : index
    %c0_37 = arith.constant 0 : index
    %63 = vector.load %arg2[%c0_36, %c16, %c0_37] : memref<1x290x8xbf16, #tpu.memory_space<vmem>>, vector<1x256x8xbf16>
    %64 = vector.shape_cast %63 : vector<1x256x8xbf16> to vector<256x8xbf16>
    %cst_38 = arith.constant 0.000000e+00 : f32
    %65 = arith.truncf %cst_38 : f32 to bf16
    %66 = vector.shape_cast %31 : vector<256x1xi1> to vector<256x1xi1>
    %67 = vector.broadcast %66 : vector<256x1xi1> to vector<256x8xi1>
    %68 = vector.broadcast %65 : bf16 to vector<256x8xbf16>
    %69 = arith.select %67, %68, %64 : vector<256x8xi1>, vector<256x8xbf16>
    %c3 = arith.constant 3 : index
    %c0_39 = arith.constant 0 : index
    %c0_40 = arith.constant 0 : index
    %70 = vector.load %arg4[%c3, %c0_39, %c0_40] : memref<9x8x8xbf16, #tpu.memory_space<vmem>>, vector<1x8x8xbf16>
    %71 = vector.shape_cast %70 : vector<1x8x8xbf16> to vector<8x8xbf16>
    %cst_41 = arith.constant dense<0.000000e+00> : vector<256x8xf32>
    %72 = tpu.matmul %69, %71, %cst_41 {dimension_numbers = #tpu.dot_dimension_numbers<[1], [0], [0], [1], [0, 0, 1, 1], [], []>} : vector<256x8xbf16>, vector<8x8xbf16>, vector<256x8xf32> -> vector<256x8xf32>
    %73 = arith.addf %62, %72 : vector<256x8xf32>
    %c0_42 = arith.constant 0 : index
    %c17 = arith.constant 17 : index
    %c0_43 = arith.constant 0 : index
    %74 = vector.load %arg2[%c0_42, %c17, %c0_43] : memref<1x290x8xbf16, #tpu.memory_space<vmem>>, vector<1x256x8xbf16>
    %75 = vector.shape_cast %74 : vector<1x256x8xbf16> to vector<256x8xbf16>
    %c4 = arith.constant 4 : index
    %c0_44 = arith.constant 0 : index
    %c0_45 = arith.constant 0 : index
    %76 = vector.load %arg4[%c4, %c0_44, %c0_45] : memref<9x8x8xbf16, #tpu.memory_space<vmem>>, vector<1x8x8xbf16>
    %77 = vector.shape_cast %76 : vector<1x8x8xbf16> to vector<8x8xbf16>
    %cst_46 = arith.constant dense<0.000000e+00> : vector<256x8xf32>
    %78 = tpu.matmul %75, %77, %cst_46 {dimension_numbers = #tpu.dot_dimension_numbers<[1], [0], [0], [1], [0, 0, 1, 1], [], []>} : vector<256x8xbf16>, vector<8x8xbf16>, vector<256x8xf32> -> vector<256x8xf32>
    %79 = arith.addf %73, %78 : vector<256x8xf32>
    %c0_47 = arith.constant 0 : index
    %c18 = arith.constant 18 : index
    %c0_48 = arith.constant 0 : index
    %80 = vector.load %arg2[%c0_47, %c18, %c0_48] : memref<1x290x8xbf16, #tpu.memory_space<vmem>>, vector<1x256x8xbf16>
    %81 = vector.shape_cast %80 : vector<1x256x8xbf16> to vector<256x8xbf16>
    %cst_49 = arith.constant 0.000000e+00 : f32
    %82 = arith.truncf %cst_49 : f32 to bf16
    %83 = vector.shape_cast %33 : vector<256x1xi1> to vector<256x1xi1>
    %84 = vector.broadcast %83 : vector<256x1xi1> to vector<256x8xi1>
    %85 = vector.broadcast %82 : bf16 to vector<256x8xbf16>
    %86 = arith.select %84, %85, %81 : vector<256x8xi1>, vector<256x8xbf16>
    %c5 = arith.constant 5 : index
    %c0_50 = arith.constant 0 : index
    %c0_51 = arith.constant 0 : index
    %87 = vector.load %arg4[%c5, %c0_50, %c0_51] : memref<9x8x8xbf16, #tpu.memory_space<vmem>>, vector<1x8x8xbf16>
    %88 = vector.shape_cast %87 : vector<1x8x8xbf16> to vector<8x8xbf16>
    %cst_52 = arith.constant dense<0.000000e+00> : vector<256x8xf32>
    %89 = tpu.matmul %86, %88, %cst_52 {dimension_numbers = #tpu.dot_dimension_numbers<[1], [0], [0], [1], [0, 0, 1, 1], [], []>} : vector<256x8xbf16>, vector<8x8xbf16>, vector<256x8xf32> -> vector<256x8xf32>
    %90 = arith.addf %79, %89 : vector<256x8xf32>
    %c0_53 = arith.constant 0 : index
    %c32 = arith.constant 32 : index
    %c0_54 = arith.constant 0 : index
    %91 = vector.load %arg2[%c0_53, %c32, %c0_54] : memref<1x290x8xbf16, #tpu.memory_space<vmem>>, vector<1x256x8xbf16>
    %92 = vector.shape_cast %91 : vector<1x256x8xbf16> to vector<256x8xbf16>
    %cst_55 = arith.constant 0.000000e+00 : f32
    %93 = arith.truncf %cst_55 : f32 to bf16
    %94 = vector.shape_cast %31 : vector<256x1xi1> to vector<256x1xi1>
    %95 = vector.broadcast %94 : vector<256x1xi1> to vector<256x8xi1>
    %96 = vector.broadcast %93 : bf16 to vector<256x8xbf16>
    %97 = arith.select %95, %96, %92 : vector<256x8xi1>, vector<256x8xbf16>
    %c6 = arith.constant 6 : index
    %c0_56 = arith.constant 0 : index
    %c0_57 = arith.constant 0 : index
    %98 = vector.load %arg4[%c6, %c0_56, %c0_57] : memref<9x8x8xbf16, #tpu.memory_space<vmem>>, vector<1x8x8xbf16>
    %99 = vector.shape_cast %98 : vector<1x8x8xbf16> to vector<8x8xbf16>
    %cst_58 = arith.constant dense<0.000000e+00> : vector<256x8xf32>
    %100 = tpu.matmul %97, %99, %cst_58 {dimension_numbers = #tpu.dot_dimension_numbers<[1], [0], [0], [1], [0, 0, 1, 1], [], []>} : vector<256x8xbf16>, vector<8x8xbf16>, vector<256x8xf32> -> vector<256x8xf32>
    %101 = arith.addf %90, %100 : vector<256x8xf32>
    %c0_59 = arith.constant 0 : index
    %c33 = arith.constant 33 : index
    %c0_60 = arith.constant 0 : index
    %102 = vector.load %arg2[%c0_59, %c33, %c0_60] : memref<1x290x8xbf16, #tpu.memory_space<vmem>>, vector<1x256x8xbf16>
    %103 = vector.shape_cast %102 : vector<1x256x8xbf16> to vector<256x8xbf16>
    %c7 = arith.constant 7 : index
    %c0_61 = arith.constant 0 : index
    %c0_62 = arith.constant 0 : index
    %104 = vector.load %arg4[%c7, %c0_61, %c0_62] : memref<9x8x8xbf16, #tpu.memory_space<vmem>>, vector<1x8x8xbf16>
    %105 = vector.shape_cast %104 : vector<1x8x8xbf16> to vector<8x8xbf16>
    %cst_63 = arith.constant dense<0.000000e+00> : vector<256x8xf32>
    %106 = tpu.matmul %103, %105, %cst_63 {dimension_numbers = #tpu.dot_dimension_numbers<[1], [0], [0], [1], [0, 0, 1, 1], [], []>} : vector<256x8xbf16>, vector<8x8xbf16>, vector<256x8xf32> -> vector<256x8xf32>
    %107 = arith.addf %101, %106 : vector<256x8xf32>
    %c0_64 = arith.constant 0 : index
    %c34 = arith.constant 34 : index
    %c0_65 = arith.constant 0 : index
    %108 = vector.load %arg2[%c0_64, %c34, %c0_65] : memref<1x290x8xbf16, #tpu.memory_space<vmem>>, vector<1x256x8xbf16>
    %109 = vector.shape_cast %108 : vector<1x256x8xbf16> to vector<256x8xbf16>
    %cst_66 = arith.constant 0.000000e+00 : f32
    %110 = arith.truncf %cst_66 : f32 to bf16
    %111 = vector.shape_cast %33 : vector<256x1xi1> to vector<256x1xi1>
    %112 = vector.broadcast %111 : vector<256x1xi1> to vector<256x8xi1>
    %113 = vector.broadcast %110 : bf16 to vector<256x8xbf16>
    %114 = arith.select %112, %113, %109 : vector<256x8xi1>, vector<256x8xbf16>
    %c8 = arith.constant 8 : index
    %c0_67 = arith.constant 0 : index
    %c0_68 = arith.constant 0 : index
    %115 = vector.load %arg4[%c8, %c0_67, %c0_68] : memref<9x8x8xbf16, #tpu.memory_space<vmem>>, vector<1x8x8xbf16>
    %116 = vector.shape_cast %115 : vector<1x8x8xbf16> to vector<8x8xbf16>
    %cst_69 = arith.constant dense<0.000000e+00> : vector<256x8xf32>
    %117 = tpu.matmul %114, %116, %cst_69 {dimension_numbers = #tpu.dot_dimension_numbers<[1], [0], [0], [1], [0, 0, 1, 1], [], []>} : vector<256x8xbf16>, vector<8x8xbf16>, vector<256x8xf32> -> vector<256x8xf32>
    %118 = arith.addf %107, %117 : vector<256x8xf32>
    %c0_70 = arith.constant 0 : index
    %c8_71 = arith.constant 8 : index
    %119 = vector.load %arg5[%c0_70, %c8_71] : memref<1x16xf32, #tpu.memory_space<vmem>>, vector<1x8xf32>
    %120 = vector.broadcast %119 : vector<1x8xf32> to vector<256x8xf32>
    %121 = arith.addf %118, %120 : vector<256x8xf32>
    %cst_72 = arith.constant 0.000000e+00 : f32
    %122 = vector.broadcast %cst_72 : f32 to vector<256x8xf32>
    %123 = arith.maximumf %121, %122 : vector<256x8xf32>
    %124 = arith.truncf %123 : vector<256x8xf32> to vector<256x8xbf16>
    %c0_73 = arith.constant 0 : index
    %c0_74 = arith.constant 0 : index
    %c8_75 = arith.constant 8 : index
    %125 = vector.load %arg6[%c0_73, %c0_74, %c8_75] : memref<1x256x16xbf16, #tpu.memory_space<vmem>>, vector<1x256x8xbf16>
    %126 = vector.shape_cast %125 : vector<1x256x8xbf16> to vector<256x8xbf16>
    %127 = vector.shape_cast %124 : vector<256x8xbf16> to vector<1x256x8xbf16>
    tpu.vector_store %arg6[%c0_73, %c0_74, %c8_75], %127 {strides = array<i32>} : memref<1x256x16xbf16, #tpu.memory_space<vmem>>, vector<1x256x8xbf16>,
    return
  }
  func.func @transform_0(%arg0: i32) -> (i32, i32, i32) {
    %c0_i32 = arith.constant 0 : i32
    %c0_i32_0 = arith.constant 0 : i32
    %c0_i32_1 = arith.constant 0 : i32
    return %arg0, %c0_i32, %c0_i32_0 : i32, i32, i32
  }
  func.func @transform_1(%arg0: i32) -> (i32, i32, i32) {
    %c0_i32 = arith.constant 0 : i32
    %c0_i32_0 = arith.constant 0 : i32
    %c0_i32_1 = arith.constant 0 : i32
    return %arg0, %c0_i32, %c0_i32_0 : i32, i32, i32
  }
  func.func @transform_2(%arg0: i32) -> (i32, i32) {
    %c0_i32 = arith.constant 0 : i32
    %c0_i32_0 = arith.constant 0 : i32
    %c0_i32_1 = arith.constant 0 : i32
    return %c0_i32, %c0_i32_0 : i32, i32
  }
  func.func @transform_3(%arg0: i32) -> (i32, i32, i32) {
    %c0_i32 = arith.constant 0 : i32
    %c0_i32_0 = arith.constant 0 : i32
    %c0_i32_1 = arith.constant 0 : i32
    %c0_i32_2 = arith.constant 0 : i32
    return %c0_i32, %c0_i32_0, %c0_i32_1 : i32, i32, i32
  }
  func.func @transform_4(%arg0: i32) -> (i32, i32) {
    %c0_i32 = arith.constant 0 : i32
    %c0_i32_0 = arith.constant 0 : i32
    %c0_i32_1 = arith.constant 0 : i32
    return %c0_i32, %c0_i32_0 : i32, i32
  }
  func.func @transform_5(%arg0: i32) -> (i32, i32, i32) {
    %c0_i32 = arith.constant 0 : i32
    %c0_i32_0 = arith.constant 0 : i32
    %c0_i32_1 = arith.constant 0 : i32
    return %arg0, %c0_i32, %c0_i32_0 : i32, i32, i32
  }
}

</mosaic_0001>

<llo_original>
// kernel: tpu_custom_call.1
$region0: #{tpu_custom_call.1}
  #allocation0 [shape = 'u32[]', space=smem, size = 0x4, offset = 0x4, fixed_abs, tag = 'smem constant byte address 0x4 - core index']
  #allocation1 [shape = 'u32[144,128]{1,0:T(1,128)}', space=vmem, size = 0x12000, scoped, tag = 'internal scratch']
  %s0 = inlined_call_operand.vmem [shape: bf16[2,256,8], index: 0, kind: input, shape index: {}]
  %s1 = inlined_call_operand.vmem [shape: bf16[2,290,8], index: 1, kind: input, shape index: {}]
  %s2 = inlined_call_operand.vmem [shape: bf16[8,8], index: 2, kind: input, shape index: {}]
  %s3 = inlined_call_operand.vmem [shape: bf16[9,8,8], index: 3, kind: input, shape index: {}]
  %s4 = inlined_call_operand.vmem [shape: f32[1,16], index: 4, kind: input, shape index: {}]
  %s5 = inlined_call_operand.vmem [shape: bf16[2,256,16], index: 5, kind: output, shape index: {}]
  %s6 = sld [smem:[#allocation0]]
  $region53: #{tpu_custom_call.1} parent=0
    _
  %s8 = ssub.s32 1, %s6
  %s9 = scalar_select 0, %s8, %s6
  loop: start=0, step=1, limit=4
  $region2: #{tpu_custom_call.1} parent=0 // loop_pre_header
    _
  $region3: #{tpu_custom_call.1} parent=0 // loop_header
    %s11 = sphi 0, %s15
    %p12 = scmp.ge.s32.totalorder %s11, 4
    %s21 = sphi 0, %s23
    %s24 = sphi 0, %s21
    %s25 = sphi 0, %s24
    %s41 = sphi 0, %s25
    %s47 = sphi 0, %s49
    %s50 = sphi 0, %s47
    %s51 = sphi 0, %s50
    %s67 = sphi 0, %s51
    %s71 = sphi 0, %s71
    %s73 = sphi 0, %s71
    %s74 = sphi 0, %s73
    %s88 = sphi 0, %s74
    %s92 = sphi 0, %s92
    %s94 = sphi 0, %s92
    %s95 = sphi 0, %s94
    %s109 = sphi 0, %s95
    %s113 = sphi 0, %s113
    %s115 = sphi 0, %s113
    %s116 = sphi 0, %s115
    %s130 = sphi 0, %s116
    %s136 = sphi 0, %s138
    %s139 = sphi 0, %s136
    %s140 = sphi 0, %s139
    %s156 = sphi 0, %s140
  $region4: #{tpu_custom_call.1} parent=0 // loop_header_branch
    %14 = sbr.rel (%p12) target = $region8
  $region5: #{tpu_custom_call.1} parent=0 // loop_body
    %s16 = ssub.s32 %s11, 1
    %s17 = ssub.s32 %s11, 2
    %s18 = sadd.s32 %s11, 1
    %s19 = ssub.s32 %s11, %s18
    %p20 = scmp.eq.s32.totalorder %s19, 0
    %s22 = sadd.s32 %s21, 1
    %s23 = scalar_select %p20, %s21, %s22
    %p26 = pneg %p20
    %p27 = scmp.eq.s32.totalorder %s11, 1
    %p28 = por %p26, %p27
    %p29 = scmp.ne.s32.totalorder %s21, %s24
    %p30 = scmp.eq.s32.totalorder %s11, 0
    %p31 = por %p29, %p30
    %p32 = scmp.ne.s32.totalorder %s21, %s24
    %p33 = scmp.eq.s32.totalorder %s16, 1
    %p34 = por %p32, %p33
    %p35 = scmp.ne.s32.totalorder %s24, %s25
    %p36 = scmp.eq.s32.totalorder %s16, 0
    %p37 = por %p35, %p36
    %p38 = scmp.ne.s32.totalorder %s24, %s25
    %p39 = scmp.eq.s32.totalorder %s17, 1
    %p40 = por %p38, %p39
    %p42 = scmp.ne.s32.totalorder %s25, %s41
    %p43 = scmp.eq.s32.totalorder %s17, 0
    %p44 = por %p42, %p43
    %s45 = ssub.s32 %s11, %s18
    %p46 = scmp.eq.s32.totalorder %s45, 0
    %s48 = sadd.s32 %s47, 1
    %s49 = scalar_select %p46, %s47, %s48
    %p52 = pneg %p46
    %p53 = scmp.eq.s32.totalorder %s11, 1
    %p54 = por %p52, %p53
    %p55 = scmp.ne.s32.totalorder %s47, %s50
    %p56 = scmp.eq.s32.totalorder %s11, 0
    %p57 = por %p55, %p56
    %p58 = scmp.ne.s32.totalorder %s47, %s50
    %p59 = scmp.eq.s32.totalorder %s16, 1
    %p60 = por %p58, %p59
    %p61 = scmp.ne.s32.totalorder %s50, %s51
    %p62 = scmp.eq.s32.totalorder %s16, 0
    %p63 = por %p61, %p62
    %p64 = scmp.ne.s32.totalorder %s50, %s51
    %p65 = scmp.eq.s32.totalorder %s17, 1
    %p66 = por %p64, %p65
    %p68 = scmp.ne.s32.totalorder %s51, %s67
    %p69 = scmp.eq.s32.totalorder %s17, 0
    %p70 = por %p68, %p69
    %s72 = sadd.s32 %s71, 1
    %p75 = scmp.eq.s32.totalorder %s11, 1
    %p76 = scmp.ne.s32.totalorder %s71, %s73
    %p77 = scmp.eq.s32.totalorder %s11, 0
    %p78 = por %p76, %p77
    %p79 = scmp.ne.s32.totalorder %s71, %s73
    %p80 = scmp.eq.s32.totalorder %s16, 1
    %p81 = por %p79, %p80
    %p82 = scmp.ne.s32.totalorder %s73, %s74
    %p83 = scmp.eq.s32.totalorder %s16, 0
    %p84 = por %p82, %p83
    %p85 = scmp.ne.s32.totalorder %s73, %s74
    %p86 = scmp.eq.s32.totalorder %s17, 1
    %p87 = por %p85, %p86
    %p89 = scmp.ne.s32.totalorder %s74, %s88
    %p90 = scmp.eq.s32.totalorder %s17, 0
    %p91 = por %p89, %p90
    %s93 = sadd.s32 %s92, 1
    %p96 = scmp.eq.s32.totalorder %s11, 1
    %p97 = scmp.ne.s32.totalorder %s92, %s94
    %p98 = scmp.eq.s32.totalorder %s11, 0
    %p99 = por %p97, %p98
    %p100 = scmp.ne.s32.totalorder %s92, %s94
    %p101 = scmp.eq.s32.totalorder %s16, 1
    %p102 = por %p100, %p101
    %p103 = scmp.ne.s32.totalorder %s94, %s95
    %p104 = scmp.eq.s32.totalorder %s16, 0
    %p105 = por %p103, %p104
    %p106 = scmp.ne.s32.totalorder %s94, %s95
    %p107 = scmp.eq.s32.totalorder %s17, 1
    %p108 = por %p106, %p107
    %p110 = scmp.ne.s32.totalorder %s95, %s109
    %p111 = scmp.eq.s32.totalorder %s17, 0
    %p112 = por %p110, %p111
    %s114 = sadd.s32 %s113, 1
    %p117 = scmp.eq.s32.totalorder %s11, 1
    %p118 = scmp.ne.s32.totalorder %s113, %s115
    %p119 = scmp.eq.s32.totalorder %s11, 0
    %p120 = por %p118, %p119
    %p121 = scmp.ne.s32.totalorder %s113, %s115
    %p122 = scmp.eq.s32.totalorder %s16, 1
    %p123 = por %p121, %p122
    %p124 = scmp.ne.s32.totalorder %s115, %s116
    %p125 = scmp.eq.s32.totalorder %s16, 0
    %p126 = por %p124, %p125
    %p127 = scmp.ne.s32.totalorder %s115, %s116
    %p128 = scmp.eq.s32.totalorder %s17, 1
    %p129 = por %p127, %p128
    %p131 = scmp.ne.s32.totalorder %s116, %s130
    %p132 = scmp.eq.s32.totalorder %s17, 0
    %p133 = por %p131, %p132
    %s134 = ssub.s32 %s11, %s18
    %p135 = scmp.eq.s32.totalorder %s134, 0
    %s137 = sadd.s32 %s136, 1
    %s138 = scalar_select %p135, %s136, %s137
    %p141 = pneg %p135
    %p142 = scmp.eq.s32.totalorder %s11, 1
    %p143 = por %p141, %p142
    %p144 = scmp.ne.s32.totalorder %s136, %s139
    %p145 = scmp.eq.s32.totalorder %s11, 0
    %p146 = por %p144, %p145
    %p147 = scmp.ne.s32.totalorder %s136, %s139
    %p148 = scmp.eq.s32.totalorder %s16, 1
    %p149 = por %p147, %p148
    %p150 = scmp.ne.s32.totalorder %s139, %s140
    %p151 = scmp.eq.s32.totalorder %s16, 0
    %p152 = por %p150, %p151
    %p153 = scmp.ne.s32.totalorder %s139, %s140
    %p154 = scmp.eq.s32.totalorder %s17, 1
    %p155 = por %p153, %p154
    %p157 = scmp.ne.s32.totalorder %s140, %s156
    %p158 = scmp.eq.s32.totalorder %s17, 0
    %p159 = por %p157, %p158
    %p160 = scmp.le.s32.totalorder 1, %s11
    %p161 = scmp.lt.s32.totalorder %s11, 3
    %p162 = pnand %p160, %p161
    %p163 = pneg %p162
    // Predicated region
    $region9: #{tpu_custom_call.1} parent=5 // pred_check
      _
    $region10: #{tpu_custom_call.1} parent=5 // pred_check_branch
      %165 = sbr.rel (%p162) target = $region12
    $region11: #{tpu_custom_call.1} parent=5 // pred_region
      %s166 = ssub.s32 %s11, 1
      // Predicated region
      $region13: #{tpu_custom_call.1} parent=11 // pred_check
        %p167 = pneg %p84
      $region14: #{tpu_custom_call.1} parent=11 // pred_check_branch
        %169 = sbr.rel (%p167) target = $region16
      $region15: #{tpu_custom_call.1} parent=11 // pred_region
        _
      $region16: #{tpu_custom_call.1} parent=11 // pred_fallthru
        _
      // Predicated region
      $region17: #{tpu_custom_call.1} parent=11 // pred_check
        %p170 = pneg %p105
      $region18: #{tpu_custom_call.1} parent=11 // pred_check_branch
        %172 = sbr.rel (%p170) target = $region20
      $region19: #{tpu_custom_call.1} parent=11 // pred_region
        _
      $region20: #{tpu_custom_call.1} parent=11 // pred_fallthru
        _
      // Predicated region
      $region21: #{tpu_custom_call.1} parent=11 // pred_check
        %p173 = pneg %p126
      $region22: #{tpu_custom_call.1} parent=11 // pred_check_branch
        %175 = sbr.rel (%p173) target = $region24
      $region23: #{tpu_custom_call.1} parent=11 // pred_region
        _
      $region24: #{tpu_custom_call.1} parent=11 // pred_fallthru
        _
    $region12: #{tpu_custom_call.1} parent=5 // pred_fallthru
      _
    %p176 = scmp.lt.s32.totalorder %s11, 2
    // Predicated region
    $region25: #{tpu_custom_call.1} parent=5 // pred_check
      %p177 = pneg %p176
    $region26: #{tpu_custom_call.1} parent=5 // pred_check_branch
      %179 = sbr.rel (%p177) target = $region28
    $region27: #{tpu_custom_call.1} parent=5 // pred_region
      // Predicated region
      $region29: #{tpu_custom_call.1} parent=27 // pred_check
        %p180 = pneg %p31
      $region30: #{tpu_custom_call.1} parent=27 // pred_check_branch
        %182 = sbr.rel (%p180) target = $region32
      $region31: #{tpu_custom_call.1} parent=27 // pred_region
        %p183 = scmp.lt.s32.totalorder %s11, 1
        %s184 = scalar_select %p183, %s11, 1
        %s185 = smul.addr %s184, 32
        %s186 = smul.addr %s185, 4
        %s187 = scalar_lea.vmem %s0, %s186
      $region32: #{tpu_custom_call.1} parent=27 // pred_fallthru
        _
      // Predicated region
      $region33: #{tpu_custom_call.1} parent=27 // pred_check
        %p188 = pneg %p57
      $region34: #{tpu_custom_call.1} parent=27 // pred_check_branch
        %190 = sbr.rel (%p188) target = $region36
      $region35: #{tpu_custom_call.1} parent=27 // pred_region
        %p191 = scmp.lt.s32.totalorder %s11, 1
        %s192 = scalar_select %p191, %s11, 1
        %s193 = smul.addr %s192, 37
        %s194 = smul.addr %s193, 4
        %s195 = scalar_lea.vmem %s1, %s194
      $region36: #{tpu_custom_call.1} parent=27 // pred_fallthru
        _
    $region28: #{tpu_custom_call.1} parent=5 // pred_fallthru
      _
    %p196 = scmp.le.s32.totalorder 1, %s11
    %p197 = scmp.lt.s32.totalorder %s11, 3
    %p198 = pnand %p196, %p197
    %p199 = pneg %p198
    // Predicated region
    $region37: #{tpu_custom_call.1} parent=5 // pred_check
      _
    $region38: #{tpu_custom_call.1} parent=5 // pred_check_branch
      %201 = sbr.rel (%p198) target = $region40
    $region39: #{tpu_custom_call.1} parent=5 // pred_region
      %s202 = ssub.s32 %s11, 1
      %p203 = scmp.lt.s32.totalorder %s16, 1
      %s204 = scalar_select %p203, %s16, 1
      %s205 = smul.addr %s204, 32
      %s206 = smul.addr %s205, 4
      %s207 = scalar_lea.vmem %s0, %s206
      %p208 = pneg %p37
      %p209 = pneg %p34
      %p210 = scmp.lt.s32.totalorder %s16, 1
      %s211 = scalar_select %p210, %s16, 1
      %s212 = smul.addr %s211, 37
      %s213 = smul.addr %s212, 4
      %s214 = scalar_lea.vmem %s1, %s213
      %p215 = pneg %p63
      %p216 = pneg %p60
      %p217 = pneg %p84
      %p218 = pneg %p81
      %p219 = pneg %p105
      %p220 = pneg %p102
      %p221 = pneg %p126
      %p222 = pneg %p123
      %p223 = pneg %p152
      %p224 = pneg %p149
      %p225 = scmp.lt.s32.totalorder %s16, 1
      %s226 = scalar_select %p225, %s16, 1
      %s227 = smul.addr %s226, 32
      %s228 = smul.addr %s227, 4
      %s229 = scalar_lea.vmem %s5, %s228
      %p230 = scmp.lt.s32.totalorder %s16, 1
      %s231 = scalar_select %p230, %s16, 1
      %s232 = smul.addr %s231, 32
      %s233 = smul.addr %s232, 4
      %s234 = scalar_lea.vmem %s0, %s233
      %p235 = scmp.lt.s32.totalorder %s16, 1
      %s236 = scalar_select %p235, %s16, 1
      %s237 = smul.addr %s236, 37
      %s238 = smul.addr %s237, 4
      %s239 = scalar_lea.vmem %s1, %s238
      %p240 = scmp.lt.s32.totalorder %s16, 1
      %s241 = scalar_select %p240, %s16, 1
      %s242 = smul.addr %s241, 32
      %s243 = smul.addr %s242, 4
      %s244 = scalar_lea.vmem %s5, %s243
      %v248 = vld [vmem:[%s234] sm:$0xf]
      %v249 = vld [vmem:[%s234 + $0x4] sm:$0xf]
      %v250 = vld [vmem:[%s234 + $0x8] sm:$0xf]
      %v251 = vld [vmem:[%s234 + $0xc] sm:$0xf]
      %v252 = vld [vmem:[%s234 + $0x10] sm:$0xf]
      %v253 = vld [vmem:[%s234 + $0x14] sm:$0xf]
      %v254 = vld [vmem:[%s234 + $0x18] sm:$0xf]
      %v255 = vld [vmem:[%s234 + $0x1c] sm:$0xf]
      %v256 = vld [vmem:[%s234 + $0x20] sm:$0xf]
      %v257 = vld [vmem:[%s234 + $0x24] sm:$0xf]
      %v258 = vld [vmem:[%s234 + $0x28] sm:$0xf]
      %v259 = vld [vmem:[%s234 + $0x2c] sm:$0xf]
      %v260 = vld [vmem:[%s234 + $0x30] sm:$0xf]
      %v261 = vld [vmem:[%s234 + $0x34] sm:$0xf]
      %v262 = vld [vmem:[%s234 + $0x38] sm:$0xf]
      %v263 = vld [vmem:[%s234 + $0x3c] sm:$0xf]
      %v264 = vld [vmem:[%s234 + $0x40] sm:$0xf]
      %v265 = vld [vmem:[%s234 + $0x44] sm:$0xf]
      %v266 = vld [vmem:[%s234 + $0x48] sm:$0xf]
      %v267 = vld [vmem:[%s234 + $0x4c] sm:$0xf]
      %v268 = vld [vmem:[%s234 + $0x50] sm:$0xf]
      %v269 = vld [vmem:[%s234 + $0x54] sm:$0xf]
      %v270 = vld [vmem:[%s234 + $0x58] sm:$0xf]
      %v271 = vld [vmem:[%s234 + $0x5c] sm:$0xf]
      %v272 = vld [vmem:[%s234 + $0x60] sm:$0xf]
      %v273 = vld [vmem:[%s234 + $0x64] sm:$0xf]
      %v274 = vld [vmem:[%s234 + $0x68] sm:$0xf]
      %v275 = vld [vmem:[%s234 + $0x6c] sm:$0xf]
      %v276 = vld [vmem:[%s234 + $0x70] sm:$0xf]
      %v277 = vld [vmem:[%s234 + $0x74] sm:$0xf]
      %v278 = vld [vmem:[%s234 + $0x78] sm:$0xf]
      %v279 = vld [vmem:[%s234 + $0x7c] sm:$0xf]
      %v280 = vld [vmem:[%s2] sm:$0xf]
      %v281 = vld [vmem:[%s4] sm:$0x1]
      %v283 = vlaneseq
      %v284 = vshrl.u32 %v283, 7
      %v285 = vsub.s32 0, %v284
      %v286 = vrot.slane %v281, %v285
      %v320 = vunpack.c.l.b16 %v248
      %v321 = vunpack.c.l.b16 %v249
      %v322 = vunpack.c.l.b16 %v250
      %v323 = vunpack.c.l.b16 %v251
      %v324 = vunpack.c.l.b16 %v252
      %v325 = vunpack.c.l.b16 %v253
      %v326 = vunpack.c.l.b16 %v254
      %v327 = vunpack.c.l.b16 %v255
      %v328 = vunpack.c.l.b16 %v256
      %v329 = vunpack.c.l.b16 %v257
      %v330 = vunpack.c.l.b16 %v258
      %v331 = vunpack.c.l.b16 %v259
      %v332 = vunpack.c.l.b16 %v260
      %v333 = vunpack.c.l.b16 %v261
      %v334 = vunpack.c.l.b16 %v262
      %v335 = vunpack.c.l.b16 %v263
      %v336 = vunpack.c.l.b16 %v264
      %v337 = vunpack.c.l.b16 %v265
      %v338 = vunpack.c.l.b16 %v266
      %v339 = vunpack.c.l.b16 %v267
      %v340 = vunpack.c.l.b16 %v268
      %v341 = vunpack.c.l.b16 %v269
      %v342 = vunpack.c.l.b16 %v270
      %v343 = vunpack.c.l.b16 %v271
      %v344 = vunpack.c.l.b16 %v272
      %v345 = vunpack.c.l.b16 %v273
      %v346 = vunpack.c.l.b16 %v274
      %v347 = vunpack.c.l.b16 %v275
      %v348 = vunpack.c.l.b16 %v276
      %v349 = vunpack.c.l.b16 %v277
      %v350 = vunpack.c.l.b16 %v278
      %v351 = vunpack.c.l.b16 %v279
      %v352 = vpack.c.b16 %v321, %v320
      %v353 = vpack.c.b16 %v323, %v322
      %v354 = vpack.c.b16 %v325, %v324
      %v355 = vpack.c.b16 %v327, %v326
      %v356 = vpack.c.b16 %v329, %v328
      %v357 = vpack.c.b16 %v331, %v330
      %v358 = vpack.c.b16 %v333, %v332
      %v359 = vpack.c.b16 %v335, %v334
      %v360 = vpack.c.b16 %v337, %v336
      %v361 = vpack.c.b16 %v339, %v338
      %v362 = vpack.c.b16 %v341, %v340
      %v363 = vpack.c.b16 %v343, %v342
      %v364 = vpack.c.b16 %v345, %v344
      %v365 = vpack.c.b16 %v347, %v346
      %v366 = vpack.c.b16 %v349, %v348
      %v367 = vpack.c.b16 %v351, %v350
      %vm368 = vcmask 64512
      %v370 = vsel %vm368, %v352, 0
      %v373 = vsel %vm368, %v353, 0
      %v376 = vsel %vm368, %v354, 0
      %v379 = vsel %vm368, %v355, 0
      %v382 = vsel %vm368, %v356, 0
      %v385 = vsel %vm368, %v357, 0
      %v388 = vsel %vm368, %v358, 0
      %v391 = vsel %vm368, %v359, 0
      %v394 = vsel %vm368, %v360, 0
      %v397 = vsel %vm368, %v361, 0
      %v400 = vsel %vm368, %v362, 0
      %v403 = vsel %vm368, %v363, 0
      %v406 = vsel %vm368, %v364, 0
      %v409 = vsel %vm368, %v365, 0
      %v412 = vsel %vm368, %v366, 0
      %v415 = vsel %vm368, %v367, 0
      %vm417 = vcmask 1043456
      %v419 = vsel %vm417, %v280, 0
      %421 = vmatprep.subr.bf16.mxu0 0
      %422 = vmatpush1.bf16.msra.mxu0 %v419
      %423 = vmatprep.subr.bf16.mxu0 0
      %424 = vmatpush1.bf16.msra.mxu0 0
      %425 = vmatprep.subr.bf16.mxu0 0
      %426 = vmatpush1.bf16.msra.mxu0 0
      %427 = vmatprep.subr.bf16.mxu0 0
      %428 = vmatpush1.bf16.msra.mxu0 0
      %429 = vmatprep.subr.bf16.mxu0 0
      %430 = vmatpush1.bf16.msra.mxu0 0
      %431 = vmatprep.subr.bf16.mxu0 0
      %432 = vmatpush1.bf16.msra.mxu0 0
      %433 = vmatprep.subr.bf16.mxu0 0
      %434 = vmatpush1.bf16.msra.mxu0 0
      %435 = vmatprep.subr.bf16.mxu0 0
      %436 = vmatpush1.bf16.msra.mxu0 0
      %437 = vmatprep.subr.bf16.mxu0 0
      %438 = vmatpush1.bf16.msra.mxu0 0
      %439 = vmatprep.subr.bf16.mxu0 0
      %440 = vmatpush1.bf16.msra.mxu0 0
      %441 = vmatprep.subr.bf16.mxu0 0
      %442 = vmatpush1.bf16.msra.mxu0 0
      %443 = vmatprep.subr.bf16.mxu0 0
      %444 = vmatpush1.bf16.msra.mxu0 0
      %445 = vmatprep.subr.bf16.mxu0 0
      %446 = vmatpush1.bf16.msra.mxu0 0
      %447 = vmatprep.subr.bf16.mxu0 0
      %448 = vmatpush1.bf16.msra.mxu0 0
      %449 = vmatprep.subr.bf16.mxu0 0
      %450 = vmatpush1.bf16.msra.mxu0 0
      %451 = vmatprep.subr.bf16.mxu0 0
      %452 = vmatpush1.bf16.msra.mxu0 0
      %453 = vmatprep.mubr.bf16.mxu0 0
      %454 = vmatmul.mubr.bf16.gmra.mrb[0].mxu0 %v370
      %v455 = vpop.f32.mrb[0].mxu0
      %v456 = vadd.f32 %v286, %v455
      %v457 = vpop.f32.mrb[0].mxu0
      %v458 = vpop.f32.mrb[0].mxu0
      %v459 = vadd.f32 %v286, %v458
      %v460 = vpop.f32.mrb[0].mxu0
      %461 = vmatprep.mubr.bf16.mxu0 0
      %462 = vmatmul.mubr.bf16.gmra.mrb[0].mxu0 %v373
      %v463 = vpop.f32.mrb[0].mxu0
      %v464 = vadd.f32 %v286, %v463
      %v465 = vpop.f32.mrb[0].mxu0
      %v466 = vpop.f32.mrb[0].mxu0
      %v467 = vadd.f32 %v286, %v466
      %v468 = vpop.f32.mrb[0].mxu0
      %469 = vmatprep.mubr.bf16.mxu0 0
      %470 = vmatmul.mubr.bf16.gmra.mrb[0].mxu0 %v376
      %v471 = vpop.f32.mrb[0].mxu0
      %v472 = vadd.f32 %v286, %v471
      %v473 = vpop.f32.mrb[0].mxu0
      %v474 = vpop.f32.mrb[0].mxu0
      %v475 = vadd.f32 %v286, %v474
      %v476 = vpop.f32.mrb[0].mxu0
      %477 = vmatprep.mubr.bf16.mxu0 0
      %478 = vmatmul.mubr.bf16.gmra.mrb[0].mxu0 %v379
      %v479 = vpop.f32.mrb[0].mxu0
      %v480 = vadd.f32 %v286, %v479
      %v481 = vpop.f32.mrb[0].mxu0
      %v482 = vpop.f32.mrb[0].mxu0
      %v483 = vadd.f32 %v286, %v482
      %v484 = vpop.f32.mrb[0].mxu0
      %485 = vmatprep.mubr.bf16.mxu0 0
      %486 = vmatmul.mubr.bf16.gmra.mrb[0].mxu0 %v382
      %v487 = vpop.f32.mrb[0].mxu0
      %v488 = vadd.f32 %v286, %v487
      %v489 = vpop.f32.mrb[0].mxu0
      %v490 = vpop.f32.mrb[0].mxu0
      %v491 = vadd.f32 %v286, %v490
      %v492 = vpop.f32.mrb[0].mxu0
      %493 = vmatprep.mubr.bf16.mxu0 0
      %494 = vmatmul.mubr.bf16.gmra.mrb[0].mxu0 %v385
      %v495 = vpop.f32.mrb[0].mxu0
      %v496 = vadd.f32 %v286, %v495
      %v497 = vpop.f32.mrb[0].mxu0
      %v498 = vpop.f32.mrb[0].mxu0
      %v499 = vadd.f32 %v286, %v498
      %v500 = vpop.f32.mrb[0].mxu0
      %501 = vmatprep.mubr.bf16.mxu0 0
      %502 = vmatmul.mubr.bf16.gmra.mrb[0].mxu0 %v388
      %v503 = vpop.f32.mrb[0].mxu0
      %v504 = vadd.f32 %v286, %v503
      %v505 = vpop.f32.mrb[0].mxu0
      %v506 = vpop.f32.mrb[0].mxu0
      %v507 = vadd.f32 %v286, %v506
      %v508 = vpop.f32.mrb[0].mxu0
      %509 = vmatprep.mubr.bf16.mxu0 0
      %510 = vmatmul.mubr.bf16.gmra.mrb[0].mxu0 %v391
      %v511 = vpop.f32.mrb[0].mxu0
      %v512 = vadd.f32 %v286, %v511
      %v513 = vpop.f32.mrb[0].mxu0
      %v514 = vpop.f32.mrb[0].mxu0
      %v515 = vadd.f32 %v286, %v514
      %v516 = vpop.f32.mrb[0].mxu0
      %517 = vmatprep.mubr.bf16.mxu0 0
      %518 = vmatmul.mubr.bf16.gmra.mrb[0].mxu0 %v394
      %v519 = vpop.f32.mrb[0].mxu0
      %v520 = vadd.f32 %v286, %v519
      %v521 = vpop.f32.mrb[0].mxu0
      %v522 = vpop.f32.mrb[0].mxu0
      %v523 = vadd.f32 %v286, %v522
      %v524 = vpop.f32.mrb[0].mxu0
      %525 = vmatprep.mubr.bf16.mxu0 0
      %526 = vmatmul.mubr.bf16.gmra.mrb[0].mxu0 %v397
      %v527 = vpop.f32.mrb[0].mxu0
      %v528 = vadd.f32 %v286, %v527
      %v529 = vpop.f32.mrb[0].mxu0
      %v530 = vpop.f32.mrb[0].mxu0
      %v531 = vadd.f32 %v286, %v530
      %v532 = vpop.f32.mrb[0].mxu0
      %533 = vmatprep.mubr.bf16.mxu0 0
      %534 = vmatmul.mubr.bf16.gmra.mrb[0].mxu0 %v400
      %v535 = vpop.f32.mrb[0].mxu0
      %v536 = vadd.f32 %v286, %v535
      %v537 = vpop.f32.mrb[0].mxu0
      %v538 = vpop.f32.mrb[0].mxu0
      %v539 = vadd.f32 %v286, %v538
      %v540 = vpop.f32.mrb[0].mxu0
      %541 = vmatprep.mubr.bf16.mxu0 0
      %542 = vmatmul.mubr.bf16.gmra.mrb[0].mxu0 %v403
      %v543 = vpop.f32.mrb[0].mxu0
      %v544 = vadd.f32 %v286, %v543
      %v545 = vpop.f32.mrb[0].mxu0
      %v546 = vpop.f32.mrb[0].mxu0
      %v547 = vadd.f32 %v286, %v546
      %v548 = vpop.f32.mrb[0].mxu0
      %549 = vmatprep.mubr.bf16.mxu0 0
      %550 = vmatmul.mubr.bf16.gmra.mrb[0].mxu0 %v406
      %v551 = vpop.f32.mrb[0].mxu0
      %v552 = vadd.f32 %v286, %v551
      %v553 = vpop.f32.mrb[0].mxu0
      %v554 = vpop.f32.mrb[0].mxu0
      %v555 = vadd.f32 %v286, %v554
      %v556 = vpop.f32.mrb[0].mxu0
      %557 = vmatprep.mubr.bf16.mxu0 0
      %558 = vmatmul.mubr.bf16.gmra.mrb[0].mxu0 %v409
      %v559 = vpop.f32.mrb[0].mxu0
      %v560 = vadd.f32 %v286, %v559
      %v561 = vpop.f32.mrb[0].mxu0
      %v562 = vpop.f32.mrb[0].mxu0
      %v563 = vadd.f32 %v286, %v562
      %v564 = vpop.f32.mrb[0].mxu0
      %565 = vmatprep.mubr.bf16.mxu0 0
      %566 = vmatmul.mubr.bf16.gmra.mrb[0].mxu0 %v412
      %v567 = vpop.f32.mrb[0].mxu0
      %v568 = vadd.f32 %v286, %v567
      %v569 = vpop.f32.mrb[0].mxu0
      %v570 = vpop.f32.mrb[0].mxu0
      %v571 = vadd.f32 %v286, %v570
      %v572 = vpop.f32.mrb[0].mxu0
      %573 = vmatprep.mubr.bf16.mxu0 0
      %574 = vmatmul.mubr.bf16.gmra.mrb[0].mxu0 %v415
      %v575 = vpop.f32.mrb[0].mxu0
      %v576 = vadd.f32 %v286, %v575
      %v577 = vpop.f32.mrb[0].mxu0
      %v578 = vpop.f32.mrb[0].mxu0
      %v579 = vadd.f32 %v286, %v578
      %v580 = vpop.f32.mrb[0].mxu0
      %581 = vdwg.mxu0
      %v582 = vmax.f32 %v456, 0.0
      %v583 = vmax.f32 %v459, 0.0
      %v584 = vmax.f32 %v464, 0.0
      %v585 = vmax.f32 %v467, 0.0
      %v586 = vmax.f32 %v472, 0.0
      %v587 = vmax.f32 %v475, 0.0
      %v588 = vmax.f32 %v480, 0.0
      %v589 = vmax.f32 %v483, 0.0
      %v590 = vmax.f32 %v488, 0.0
      %v591 = vmax.f32 %v491, 0.0
      %v592 = vmax.f32 %v496, 0.0
      %v593 = vmax.f32 %v499, 0.0
      %v594 = vmax.f32 %v504, 0.0
      %v595 = vmax.f32 %v507, 0.0
      %v596 = vmax.f32 %v512, 0.0
      %v597 = vmax.f32 %v515, 0.0
      %v598 = vmax.f32 %v520, 0.0
      %v599 = vmax.f32 %v523, 0.0
      %v600 = vmax.f32 %v528, 0.0
      %v601 = vmax.f32 %v531, 0.0
      %v602 = vmax.f32 %v536, 0.0
      %v603 = vmax.f32 %v539, 0.0
      %v604 = vmax.f32 %v544, 0.0
      %v605 = vmax.f32 %v547, 0.0
      %v606 = vmax.f32 %v552, 0.0
      %v607 = vmax.f32 %v555, 0.0
      %v608 = vmax.f32 %v560, 0.0
      %v609 = vmax.f32 %v563, 0.0
      %v610 = vmax.f32 %v568, 0.0
      %v611 = vmax.f32 %v571, 0.0
      %v612 = vmax.f32 %v576, 0.0
      %v613 = vmax.f32 %v579, 0.0
      %v614 = vpack.c.bf16 %v583, %v582
      %v615 = vpack.c.bf16 %v585, %v584
      %v616 = vpack.c.bf16 %v587, %v586
      %v617 = vpack.c.bf16 %v589, %v588
      %v618 = vpack.c.bf16 %v591, %v590
      %v619 = vpack.c.bf16 %v593, %v592
      %v620 = vpack.c.bf16 %v595, %v594
      %v621 = vpack.c.bf16 %v597, %v596
      %v622 = vpack.c.bf16 %v599, %v598
      %v623 = vpack.c.bf16 %v601, %v600
      %v624 = vpack.c.bf16 %v603, %v602
      %v625 = vpack.c.bf16 %v605, %v604
      %v626 = vpack.c.bf16 %v607, %v606
      %v627 = vpack.c.bf16 %v609, %v608
      %v628 = vpack.c.bf16 %v611, %v610
      %v629 = vpack.c.bf16 %v613, %v612
      %v646 = vunpack.c.l.b16 %v614
      %v647 = vunpack.c.h.b16 %v614
      %v648 = vunpack.c.l.b16 %v615
      %v649 = vunpack.c.h.b16 %v615
      %v650 = vunpack.c.l.b16 %v616
      %v651 = vunpack.c.h.b16 %v616
      %v652 = vunpack.c.l.b16 %v617
      %v653 = vunpack.c.h.b16 %v617
      %v654 = vunpack.c.l.b16 %v618
      %v655 = vunpack.c.h.b16 %v618
      %v656 = vunpack.c.l.b16 %v619
      %v657 = vunpack.c.h.b16 %v619
      %v658 = vunpack.c.l.b16 %v620
      %v659 = vunpack.c.h.b16 %v620
      %v660 = vunpack.c.l.b16 %v621
      %v661 = vunpack.c.h.b16 %v621
      %v662 = vunpack.c.l.b16 %v622
      %v663 = vunpack.c.h.b16 %v622
      %v664 = vunpack.c.l.b16 %v623
      %v665 = vunpack.c.h.b16 %v623
      %v666 = vunpack.c.l.b16 %v624
      %v667 = vunpack.c.h.b16 %v624
      %v668 = vunpack.c.l.b16 %v625
      %v669 = vunpack.c.h.b16 %v625
      %v670 = vunpack.c.l.b16 %v626
      %v671 = vunpack.c.h.b16 %v626
      %v672 = vunpack.c.l.b16 %v627
      %v673 = vunpack.c.h.b16 %v627
      %v674 = vunpack.c.l.b16 %v628
      %v675 = vunpack.c.h.b16 %v628
      %v676 = vunpack.c.l.b16 %v629
      %v677 = vunpack.c.h.b16 %v629
      %v678 = vpack.c.b16 %v646, %v646
      %v679 = vpack.c.b16 %v647, %v647
      %v680 = vpack.c.b16 %v648, %v648
      %v681 = vpack.c.b16 %v649, %v649
      %v682 = vpack.c.b16 %v650, %v650
      %v683 = vpack.c.b16 %v651, %v651
      %v684 = vpack.c.b16 %v652, %v652
      %v685 = vpack.c.b16 %v653, %v653
      %v686 = vpack.c.b16 %v654, %v654
      %v687 = vpack.c.b16 %v655, %v655
      %v688 = vpack.c.b16 %v656, %v656
      %v689 = vpack.c.b16 %v657, %v657
      %v690 = vpack.c.b16 %v658, %v658
      %v691 = vpack.c.b16 %v659, %v659
      %v692 = vpack.c.b16 %v660, %v660
      %v693 = vpack.c.b16 %v661, %v661
      %v694 = vpack.c.b16 %v662, %v662
      %v695 = vpack.c.b16 %v663, %v663
      %v696 = vpack.c.b16 %v664, %v664
      %v697 = vpack.c.b16 %v665, %v665
      %v698 = vpack.c.b16 %v666, %v666
      %v699 = vpack.c.b16 %v667, %v667
      %v700 = vpack.c.b16 %v668, %v668
      %v701 = vpack.c.b16 %v669, %v669
      %v702 = vpack.c.b16 %v670, %v670
      %v703 = vpack.c.b16 %v671, %v671
      %v704 = vpack.c.b16 %v672, %v672
      %v705 = vpack.c.b16 %v673, %v673
      %v706 = vpack.c.b16 %v674, %v674
      %v707 = vpack.c.b16 %v675, %v675
      %v708 = vpack.c.b16 %v676, %v676
      %v709 = vpack.c.b16 %v677, %v677
      %vm742 = vcmask 60416
      %743 = vst.msk [vmem:[%s244] sm:$0xf] %vm742, %v678
      %744 = vst.msk [vmem:[%s244 + $0x4] sm:$0xf] %vm742, %v679
      %745 = vst.msk [vmem:[%s244 + $0x8] sm:$0xf] %vm742, %v680
      %746 = vst.msk [vmem:[%s244 + $0xc] sm:$0xf] %vm742, %v681
      %747 = vst.msk [vmem:[%s244 + $0x10] sm:$0xf] %vm742, %v682
      %748 = vst.msk [vmem:[%s244 + $0x14] sm:$0xf] %vm742, %v683
      %749 = vst.msk [vmem:[%s244 + $0x18] sm:$0xf] %vm742, %v684
      %750 = vst.msk [vmem:[%s244 + $0x1c] sm:$0xf] %vm742, %v685
      %751 = vst.msk [vmem:[%s244 + $0x20] sm:$0xf] %vm742, %v686
      %752 = vst.msk [vmem:[%s244 + $0x24] sm:$0xf] %vm742, %v687
      %753 = vst.msk [vmem:[%s244 + $0x28] sm:$0xf] %vm742, %v688
      %754 = vst.msk [vmem:[%s244 + $0x2c] sm:$0xf] %vm742, %v689
      %755 = vst.msk [vmem:[%s244 + $0x30] sm:$0xf] %vm742, %v690
      %756 = vst.msk [vmem:[%s244 + $0x34] sm:$0xf] %vm742, %v691
      %757 = vst.msk [vmem:[%s244 + $0x38] sm:$0xf] %vm742, %v692
      %758 = vst.msk [vmem:[%s244 + $0x3c] sm:$0xf] %vm742, %v693
      %759 = vst.msk [vmem:[%s244 + $0x40] sm:$0xf] %vm742, %v694
      %760 = vst.msk [vmem:[%s244 + $0x44] sm:$0xf] %vm742, %v695
      %761 = vst.msk [vmem:[%s244 + $0x48] sm:$0xf] %vm742, %v696
      %762 = vst.msk [vmem:[%s244 + $0x4c] sm:$0xf] %vm742, %v697
      %763 = vst.msk [vmem:[%s244 + $0x50] sm:$0xf] %vm742, %v698
      %764 = vst.msk [vmem:[%s244 + $0x54] sm:$0xf] %vm742, %v699
      %765 = vst.msk [vmem:[%s244 + $0x58] sm:$0xf] %vm742, %v700
      %766 = vst.msk [vmem:[%s244 + $0x5c] sm:$0xf] %vm742, %v701
      %767 = vst.msk [vmem:[%s244 + $0x60] sm:$0xf] %vm742, %v702
      %768 = vst.msk [vmem:[%s244 + $0x64] sm:$0xf] %vm742, %v703
      %769 = vst.msk [vmem:[%s244 + $0x68] sm:$0xf] %vm742, %v704
      %770 = vst.msk [vmem:[%s244 + $0x6c] sm:$0xf] %vm742, %v705
      %771 = vst.msk [vmem:[%s244 + $0x70] sm:$0xf] %vm742, %v706
      %772 = vst.msk [vmem:[%s244 + $0x74] sm:$0xf] %vm742, %v707
      %773 = vst.msk [vmem:[%s244 + $0x78] sm:$0xf] %vm742, %v708
      %774 = vst.msk [vmem:[%s244 + $0x7c] sm:$0xf] %vm742, %v709
      %v775 = vlaneseq
      %v776 = vshrl.u32 %v775, 7
      %v777 = vadd.s32 %v776, 8
      %v778 = vadd.s32 %v776, 16
      %v779 = vadd.s32 %v776, 24
      %v780 = vadd.s32 %v776, 32
      %v781 = vadd.s32 %v776, 40
      %v782 = vadd.s32 %v776, 48
      %v783 = vadd.s32 %v776, 56
      %v784 = vadd.s32 %v776, 64
      %v785 = vadd.s32 %v776, 72
      %v786 = vadd.s32 %v776, 80
      %v787 = vadd.s32 %v776, 88
      %v788 = vadd.s32 %v776, 96
      %v789 = vadd.s32 %v776, 104
      %v790 = vadd.s32 %v776, 112
      %v791 = vadd.s32 %v776, 120
      %v792 = vadd.s32 %v776, 128
      %v793 = vadd.s32 %v776, 136
      %v794 = vadd.s32 %v776, 144
      %v795 = vadd.s32 %v776, 152
      %v796 = vadd.s32 %v776, 160
      %v797 = vadd.s32 %v776, 168
      %v798 = vadd.s32 %v776, 176
      %v799 = vadd.s32 %v776, 184
      %v800 = vadd.s32 %v776, 192
      %v801 = vadd.s32 %v776, 200
      %v802 = vadd.s32 %v776, 208
      %v803 = vadd.s32 %v776, 216
      %v804 = vadd.s32 %v776, 224
      %v805 = vadd.s32 %v776, 232
      %v806 = vadd.s32 %v776, 240
      %v807 = vadd.s32 %v776, 248
      %vm808 = vcmp.lt.s32.totalorder %v776, 0
      %v809 = vsub.s32 0, %v776
      %v810 = vsel %vm808, %v809, %v776
      %v811 = vshrl.u32 %v810, 4
      %v812 = vand.u32 %v810, 15
      %v813 = vsub.s32 0, %v812
      %v814 = vsel %vm808, %v813, %v812
      %vm815 = vcmp.lt.s32.totalorder %v777, 0
      %v816 = vsub.s32 0, %v777
      %v817 = vsel %vm815, %v816, %v777
      %v818 = vshrl.u32 %v817, 4
      %v819 = vand.u32 %v817, 15
      %v820 = vsub.s32 0, %v819
      %v821 = vsel %vm815, %v820, %v819
      %vm822 = vcmp.lt.s32.totalorder %v778, 0
      %v823 = vsub.s32 0, %v778
      %v824 = vsel %vm822, %v823, %v778
      %v825 = vshrl.u32 %v824, 4
      %v826 = vand.u32 %v824, 15
      %v827 = vsub.s32 0, %v826
      %v828 = vsel %vm822, %v827, %v826
      %vm829 = vcmp.lt.s32.totalorder %v779, 0
      %v830 = vsub.s32 0, %v779
      %v831 = vsel %vm829, %v830, %v779
      %v832 = vshrl.u32 %v831, 4
      %v833 = vand.u32 %v831, 15
      %v834 = vsub.s32 0, %v833
      %v835 = vsel %vm829, %v834, %v833
      %vm836 = vcmp.lt.s32.totalorder %v780, 0
      %v837 = vsub.s32 0, %v780
      %v838 = vsel %vm836, %v837, %v780
      %v839 = vshrl.u32 %v838, 4
      %v840 = vand.u32 %v838, 15
      %v841 = vsub.s32 0, %v840
      %v842 = vsel %vm836, %v841, %v840
      %vm843 = vcmp.lt.s32.totalorder %v781, 0
      %v844 = vsub.s32 0, %v781
      %v845 = vsel %vm843, %v844, %v781
      %v846 = vshrl.u32 %v845, 4
      %v847 = vand.u32 %v845, 15
      %v848 = vsub.s32 0, %v847
      %v849 = vsel %vm843, %v848, %v847
      %vm850 = vcmp.lt.s32.totalorder %v782, 0
      %v851 = vsub.s32 0, %v782
      %v852 = vsel %vm850, %v851, %v782
      %v853 = vshrl.u32 %v852, 4
      %v854 = vand.u32 %v852, 15
      %v855 = vsub.s32 0, %v854
      %v856 = vsel %vm850, %v855, %v854
      %vm857 = vcmp.lt.s32.totalorder %v783, 0
      %v858 = vsub.s32 0, %v783
      %v859 = vsel %vm857, %v858, %v783
      %v860 = vshrl.u32 %v859, 4
      %v861 = vand.u32 %v859, 15
      %v862 = vsub.s32 0, %v861
      %v863 = vsel %vm857, %v862, %v861
      %vm864 = vcmp.lt.s32.totalorder %v784, 0
      %v865 = vsub.s32 0, %v784
      %v866 = vsel %vm864, %v865, %v784
      %v867 = vshrl.u32 %v866, 4
      %v868 = vand.u32 %v866, 15
      %v869 = vsub.s32 0, %v868
      %v870 = vsel %vm864, %v869, %v868
      %vm871 = vcmp.lt.s32.totalorder %v785, 0
      %v872 = vsub.s32 0, %v785
      %v873 = vsel %vm871, %v872, %v785
      %v874 = vshrl.u32 %v873, 4
      %v875 = vand.u32 %v873, 15
      %v876 = vsub.s32 0, %v875
      %v877 = vsel %vm871, %v876, %v875
      %vm878 = vcmp.lt.s32.totalorder %v786, 0
      %v879 = vsub.s32 0, %v786
      %v880 = vsel %vm878, %v879, %v786
      %v881 = vshrl.u32 %v880, 4
      %v882 = vand.u32 %v880, 15
      %v883 = vsub.s32 0, %v882
      %v884 = vsel %vm878, %v883, %v882
      %vm885 = vcmp.lt.s32.totalorder %v787, 0
      %v886 = vsub.s32 0, %v787
      %v887 = vsel %vm885, %v886, %v787
      %v888 = vshrl.u32 %v887, 4
      %v889 = vand.u32 %v887, 15
      %v890 = vsub.s32 0, %v889
      %v891 = vsel %vm885, %v890, %v889
      %vm892 = vcmp.lt.s32.totalorder %v788, 0
      %v893 = vsub.s32 0, %v788
      %v894 = vsel %vm892, %v893, %v788
      %v895 = vshrl.u32 %v894, 4
      %v896 = vand.u32 %v894, 15
      %v897 = vsub.s32 0, %v896
      %v898 = vsel %vm892, %v897, %v896
      %vm899 = vcmp.lt.s32.totalorder %v789, 0
      %v900 = vsub.s32 0, %v789
      %v901 = vsel %vm899, %v900, %v789
      %v902 = vshrl.u32 %v901, 4
      %v903 = vand.u32 %v901, 15
      %v904 = vsub.s32 0, %v903
      %v905 = vsel %vm899, %v904, %v903
      %vm906 = vcmp.lt.s32.totalorder %v790, 0
      %v907 = vsub.s32 0, %v790
      %v908 = vsel %vm906, %v907, %v790
      %v909 = vshrl.u32 %v908, 4
      %v910 = vand.u32 %v908, 15
      %v911 = vsub.s32 0, %v910
      %v912 = vsel %vm906, %v911, %v910
      %vm913 = vcmp.lt.s32.totalorder %v791, 0
      %v914 = vsub.s32 0, %v791
      %v915 = vsel %vm913, %v914, %v791
      %v916 = vshrl.u32 %v915, 4
      %v917 = vand.u32 %v915, 15
      %v918 = vsub.s32 0, %v917
      %v919 = vsel %vm913, %v918, %v917
      %vm920 = vcmp.lt.s32.totalorder %v792, 0
      %v921 = vsub.s32 0, %v792
      %v922 = vsel %vm920, %v921, %v792
      %v923 = vshrl.u32 %v922, 4
      %v924 = vand.u32 %v922, 15
      %v925 = vsub.s32 0, %v924
      %v926 = vsel %vm920, %v925, %v924
      %vm927 = vcmp.lt.s32.totalorder %v793, 0
      %v928 = vsub.s32 0, %v793
      %v929 = vsel %vm927, %v928, %v793
      %v930 = vshrl.u32 %v929, 4
      %v931 = vand.u32 %v929, 15
      %v932 = vsub.s32 0, %v931
      %v933 = vsel %vm927, %v932, %v931
      %vm934 = vcmp.lt.s32.totalorder %v794, 0
      %v935 = vsub.s32 0, %v794
      %v936 = vsel %vm934, %v935, %v794
      %v937 = vshrl.u32 %v936, 4
      %v938 = vand.u32 %v936, 15
      %v939 = vsub.s32 0, %v938
      %v940 = vsel %vm934, %v939, %v938
      %vm941 = vcmp.lt.s32.totalorder %v795, 0
      %v942 = vsub.s32 0, %v795
      %v943 = vsel %vm941, %v942, %v795
      %v944 = vshrl.u32 %v943, 4
      %v945 = vand.u32 %v943, 15
      %v946 = vsub.s32 0, %v945
      %v947 = vsel %vm941, %v946, %v945
      %vm948 = vcmp.lt.s32.totalorder %v796, 0
      %v949 = vsub.s32 0, %v796
      %v950 = vsel %vm948, %v949, %v796
      %v951 = vshrl.u32 %v950, 4
      %v952 = vand.u32 %v950, 15
      %v953 = vsub.s32 0, %v952
      %v954 = vsel %vm948, %v953, %v952
      %vm955 = vcmp.lt.s32.totalorder %v797, 0
      %v956 = vsub.s32 0, %v797
      %v957 = vsel %vm955, %v956, %v797
      %v958 = vshrl.u32 %v957, 4
      %v959 = vand.u32 %v957, 15
      %v960 = vsub.s32 0, %v959
      %v961 = vsel %vm955, %v960, %v959
      %vm962 = vcmp.lt.s32.totalorder %v798, 0
      %v963 = vsub.s32 0, %v798
      %v964 = vsel %vm962, %v963, %v798
      %v965 = vshrl.u32 %v964, 4
      %v966 = vand.u32 %v964, 15
      %v967 = vsub.s32 0, %v966
      %v968 = vsel %vm962, %v967, %v966
      %vm969 = vcmp.lt.s32.totalorder %v799, 0
      %v970 = vsub.s32 0, %v799
      %v971 = vsel %vm969, %v970, %v799
      %v972 = vshrl.u32 %v971, 4
      %v973 = vand.u32 %v971, 15
      %v974 = vsub.s32 0, %v973
      %v975 = vsel %vm969, %v974, %v973
      %vm976 = vcmp.lt.s32.totalorder %v800, 0
      %v977 = vsub.s32 0, %v800
      %v978 = vsel %vm976, %v977, %v800
      %v979 = vshrl.u32 %v978, 4
      %v980 = vand.u32 %v978, 15
      %v981 = vsub.s32 0, %v980
      %v982 = vsel %vm976, %v981, %v980
      %vm983 = vcmp.lt.s32.totalorder %v801, 0
      %v984 = vsub.s32 0, %v801
      %v985 = vsel %vm983, %v984, %v801
      %v986 = vshrl.u32 %v985, 4
      %v987 = vand.u32 %v985, 15
      %v988 = vsub.s32 0, %v987
      %v989 = vsel %vm983, %v988, %v987
      %vm990 = vcmp.lt.s32.totalorder %v802, 0
      %v991 = vsub.s32 0, %v802
      %v992 = vsel %vm990, %v991, %v802
      %v993 = vshrl.u32 %v992, 4
      %v994 = vand.u32 %v992, 15
      %v995 = vsub.s32 0, %v994
      %v996 = vsel %vm990, %v995, %v994
      %vm997 = vcmp.lt.s32.totalorder %v803, 0
      %v998 = vsub.s32 0, %v803
      %v999 = vsel %vm997, %v998, %v803
      %v1000 = vshrl.u32 %v999, 4
      %v1001 = vand.u32 %v999, 15
      %v1002 = vsub.s32 0, %v1001
      %v1003 = vsel %vm997, %v1002, %v1001
      %vm1004 = vcmp.lt.s32.totalorder %v804, 0
      %v1005 = vsub.s32 0, %v804
      %v1006 = vsel %vm1004, %v1005, %v804
      %v1007 = vshrl.u32 %v1006, 4
      %v1008 = vand.u32 %v1006, 15
      %v1009 = vsub.s32 0, %v1008
      %v1010 = vsel %vm1004, %v1009, %v1008
      %vm1011 = vcmp.lt.s32.totalorder %v805, 0
      %v1012 = vsub.s32 0, %v805
      %v1013 = vsel %vm1011, %v1012, %v805
      %v1014 = vshrl.u32 %v1013, 4
      %v1015 = vand.u32 %v1013, 15
      %v1016 = vsub.s32 0, %v1015
      %v1017 = vsel %vm1011, %v1016, %v1015
      %vm1018 = vcmp.lt.s32.totalorder %v806, 0
      %v1019 = vsub.s32 0, %v806
      %v1020 = vsel %vm1018, %v1019, %v806
      %v1021 = vshrl.u32 %v1020, 4
      %v1022 = vand.u32 %v1020, 15
      %v1023 = vsub.s32 0, %v1022
      %v1024 = vsel %vm1018, %v1023, %v1022
      %vm1025 = vcmp.lt.s32.totalorder %v807, 0
      %v1026 = vsub.s32 0, %v807
      %v1027 = vsel %vm1025, %v1026, %v807
      %v1028 = vshrl.u32 %v1027, 4
      %v1029 = vand.u32 %v1027, 15
      %v1030 = vsub.s32 0, %v1029
      %v1031 = vsel %vm1025, %v1030, %v1029
      %vm1032 = vcmp.ne.s32.totalorder %v814, 0
      %vm1033 = vcmp.ne.s32.totalorder %v821, 0
      %vm1034 = vcmp.ne.s32.totalorder %v828, 0
      %vm1035 = vcmp.ne.s32.totalorder %v835, 0
      %vm1036 = vcmp.ne.s32.totalorder %v842, 0
      %vm1037 = vcmp.ne.s32.totalorder %v849, 0
      %vm1038 = vcmp.ne.s32.totalorder %v856, 0
      %vm1039 = vcmp.ne.s32.totalorder %v863, 0
      %vm1040 = vcmp.ne.s32.totalorder %v870, 0
      %vm1041 = vcmp.ne.s32.totalorder %v877, 0
      %vm1042 = vcmp.ne.s32.totalorder %v884, 0
      %vm1043 = vcmp.ne.s32.totalorder %v891, 0
      %vm1044 = vcmp.ne.s32.totalorder %v898, 0
      %vm1045 = vcmp.ne.s32.totalorder %v905, 0
      %vm1046 = vcmp.ne.s32.totalorder %v912, 0
      %vm1047 = vcmp.ne.s32.totalorder %v919, 0
      %vm1048 = vcmp.ne.s32.totalorder %v926, 0
      %vm1049 = vcmp.ne.s32.totalorder %v933, 0
      %vm1050 = vcmp.ne.s32.totalorder %v940, 0
      %vm1051 = vcmp.ne.s32.totalorder %v947, 0
      %vm1052 = vcmp.ne.s32.totalorder %v954, 0
      %vm1053 = vcmp.ne.s32.totalorder %v961, 0
      %vm1054 = vcmp.ne.s32.totalorder %v968, 0
      %vm1055 = vcmp.ne.s32.totalorder %v975, 0
      %vm1056 = vcmp.ne.s32.totalorder %v982, 0
      %vm1057 = vcmp.ne.s32.totalorder %v989, 0
      %vm1058 = vcmp.ne.s32.totalorder %v996, 0
      %vm1059 = vcmp.ne.s32.totalorder %v1003, 0
      %vm1060 = vcmp.ne.s32.totalorder %v1010, 0
      %vm1061 = vcmp.ne.s32.totalorder %v1017, 0
      %vm1062 = vcmp.ne.s32.totalorder %v1024, 0
      %vm1063 = vcmp.ne.s32.totalorder %v1031, 0
      %vm1064 = vcmp.lt.s32.totalorder %v814, 0
      %vm1065 = vcmp.lt.s32.totalorder %v821, 0
      %vm1066 = vcmp.lt.s32.totalorder %v828, 0
      %vm1067 = vcmp.lt.s32.totalorder %v835, 0
      %vm1068 = vcmp.lt.s32.totalorder %v842, 0
      %vm1069 = vcmp.lt.s32.totalorder %v849, 0
      %vm1070 = vcmp.lt.s32.totalorder %v856, 0
      %vm1071 = vcmp.lt.s32.totalorder %v863, 0
      %vm1072 = vcmp.lt.s32.totalorder %v870, 0
      %vm1073 = vcmp.lt.s32.totalorder %v877, 0
      %vm1074 = vcmp.lt.s32.totalorder %v884, 0
      %vm1075 = vcmp.lt.s32.totalorder %v891, 0
      %vm1076 = vcmp.lt.s32.totalorder %v898, 0
      %vm1077 = vcmp.lt.s32.totalorder %v905, 0
      %vm1078 = vcmp.lt.s32.totalorder %v912, 0
      %vm1079 = vcmp.lt.s32.totalorder %v919, 0
      %vm1080 = vcmp.lt.s32.totalorder %v926, 0
      %vm1081 = vcmp.lt.s32.totalorder %v933, 0
      %vm1082 = vcmp.lt.s32.totalorder %v940, 0
      %vm1083 = vcmp.lt.s32.totalorder %v947, 0
      %vm1084 = vcmp.lt.s32.totalorder %v954, 0
      %vm1085 = vcmp.lt.s32.totalorder %v961, 0
      %vm1086 = vcmp.lt.s32.totalorder %v968, 0
      %vm1087 = vcmp.lt.s32.totalorder %v975, 0
      %vm1088 = vcmp.lt.s32.totalorder %v982, 0
      %vm1089 = vcmp.lt.s32.totalorder %v989, 0
      %vm1090 = vcmp.lt.s32.totalorder %v996, 0
      %vm1091 = vcmp.lt.s32.totalorder %v1003, 0
      %vm1092 = vcmp.lt.s32.totalorder %v1010, 0
      %vm1093 = vcmp.lt.s32.totalorder %v1017, 0
      %vm1094 = vcmp.lt.s32.totalorder %v1024, 0
      %vm1095 = vcmp.lt.s32.totalorder %v1031, 0
      %vm1096 = vmand %vm1064, %vm1032
      %vm1097 = vmand %vm1065, %vm1033
      %vm1098 = vmand %vm1066, %vm1034
      %vm1099 = vmand %vm1067, %vm1035
      %vm1100 = vmand %vm1068, %vm1036
      %vm1101 = vmand %vm1069, %vm1037
      %vm1102 = vmand %vm1070, %vm1038
      %vm1103 = vmand %vm1071, %vm1039
      %vm1104 = vmand %vm1072, %vm1040
      %vm1105 = vmand %vm1073, %vm1041
      %vm1106 = vmand %vm1074, %vm1042
      %vm1107 = vmand %vm1075, %vm1043
      %vm1108 = vmand %vm1076, %vm1044
      %vm1109 = vmand %vm1077, %vm1045
      %vm1110 = vmand %vm1078, %vm1046
      %vm1111 = vmand %vm1079, %vm1047
      %vm1112 = vmand %vm1080, %vm1048
      %vm1113 = vmand %vm1081, %vm1049
      %vm1114 = vmand %vm1082, %vm1050
      %vm1115 = vmand %vm1083, %vm1051
      %vm1116 = vmand %vm1084, %vm1052
      %vm1117 = vmand %vm1085, %vm1053
      %vm1118 = vmand %vm1086, %vm1054
      %vm1119 = vmand %vm1087, %vm1055
      %vm1120 = vmand %vm1088, %vm1056
      %vm1121 = vmand %vm1089, %vm1057
      %vm1122 = vmand %vm1090, %vm1058
      %vm1123 = vmand %vm1091, %vm1059
      %vm1124 = vmand %vm1092, %vm1060
      %vm1125 = vmand %vm1093, %vm1061
      %vm1126 = vmand %vm1094, %vm1062
      %vm1127 = vmand %vm1095, %vm1063
      %v1128 = vadd.s32 %v814, 16
      %v1129 = vadd.s32 %v821, 16
      %v1130 = vadd.s32 %v828, 16
      %v1131 = vadd.s32 %v835, 16
      %v1132 = vadd.s32 %v842, 16
      %v1133 = vadd.s32 %v849, 16
      %v1134 = vadd.s32 %v856, 16
      %v1135 = vadd.s32 %v863, 16
      %v1136 = vadd.s32 %v870, 16
      %v1137 = vadd.s32 %v877, 16
      %v1138 = vadd.s32 %v884, 16
      %v1139 = vadd.s32 %v891, 16
      %v1140 = vadd.s32 %v898, 16
      %v1141 = vadd.s32 %v905, 16
      %v1142 = vadd.s32 %v912, 16
      %v1143 = vadd.s32 %v919, 16
      %v1144 = vadd.s32 %v926, 16
      %v1145 = vadd.s32 %v933, 16
      %v1146 = vadd.s32 %v940, 16
      %v1147 = vadd.s32 %v947, 16
      %v1148 = vadd.s32 %v954, 16
      %v1149 = vadd.s32 %v961, 16
      %v1150 = vadd.s32 %v968, 16
      %v1151 = vadd.s32 %v975, 16
      %v1152 = vadd.s32 %v982, 16
      %v1153 = vadd.s32 %v989, 16
      %v1154 = vadd.s32 %v996, 16
      %v1155 = vadd.s32 %v1003, 16
      %v1156 = vadd.s32 %v1010, 16
      %v1157 = vadd.s32 %v1017, 16
      %v1158 = vadd.s32 %v1024, 16
      %v1159 = vadd.s32 %v1031, 16
      %v1160 = vsel %vm1096, %v1128, %v814
      %v1161 = vsel %vm1097, %v1129, %v821
      %v1162 = vsel %vm1098, %v1130, %v828
      %v1163 = vsel %vm1099, %v1131, %v835
      %v1164 = vsel %vm1100, %v1132, %v842
      %v1165 = vsel %vm1101, %v1133, %v849
      %v1166 = vsel %vm1102, %v1134, %v856
      %v1167 = vsel %vm1103, %v1135, %v863
      %v1168 = vsel %vm1104, %v1136, %v870
      %v1169 = vsel %vm1105, %v1137, %v877
      %v1170 = vsel %vm1106, %v1138, %v884
      %v1171 = vsel %vm1107, %v1139, %v891
      %v1172 = vsel %vm1108, %v1140, %v898
      %v1173 = vsel %vm1109, %v1141, %v905
      %v1174 = vsel %vm1110, %v1142, %v912
      %v1175 = vsel %vm1111, %v1143, %v919
      %v1176 = vsel %vm1112, %v1144, %v926
      %v1177 = vsel %vm1113, %v1145, %v933
      %v1178 = vsel %vm1114, %v1146, %v940
      %v1179 = vsel %vm1115, %v1147, %v947
      %v1180 = vsel %vm1116, %v1148, %v954
      %v1181 = vsel %vm1117, %v1149, %v961
      %v1182 = vsel %vm1118, %v1150, %v968
      %v1183 = vsel %vm1119, %v1151, %v975
      %v1184 = vsel %vm1120, %v1152, %v982
      %v1185 = vsel %vm1121, %v1153, %v989
      %v1186 = vsel %vm1122, %v1154, %v996
      %v1187 = vsel %vm1123, %v1155, %v1003
      %v1188 = vsel %vm1124, %v1156, %v1010
      %v1189 = vsel %vm1125, %v1157, %v1017
      %v1190 = vsel %vm1126, %v1158, %v1024
      %v1191 = vsel %vm1127, %v1159, %v1031
      %vm1192 = vcmp.eq.s32.totalorder %v1160, 0
      %vm1193 = vcmp.eq.s32.totalorder %v1161, 0
      %vm1194 = vcmp.eq.s32.totalorder %v1162, 0
      %vm1195 = vcmp.eq.s32.totalorder %v1163, 0
      %vm1196 = vcmp.eq.s32.totalorder %v1164, 0
      %vm1197 = vcmp.eq.s32.totalorder %v1165, 0
      %vm1198 = vcmp.eq.s32.totalorder %v1166, 0
      %vm1199 = vcmp.eq.s32.totalorder %v1167, 0
      %vm1200 = vcmp.eq.s32.totalorder %v1168, 0
      %vm1201 = vcmp.eq.s32.totalorder %v1169, 0
      %vm1202 = vcmp.eq.s32.totalorder %v1170, 0
      %vm1203 = vcmp.eq.s32.totalorder %v1171, 0
      %vm1204 = vcmp.eq.s32.totalorder %v1172, 0
      %vm1205 = vcmp.eq.s32.totalorder %v1173, 0
      %vm1206 = vcmp.eq.s32.totalorder %v1174, 0
      %vm1207 = vcmp.eq.s32.totalorder %v1175, 0
      %vm1208 = vcmp.eq.s32.totalorder %v1176, 0
      %vm1209 = vcmp.eq.s32.totalorder %v1177, 0
      %vm1210 = vcmp.eq.s32.totalorder %v1178, 0
      %vm1211 = vcmp.eq.s32.totalorder %v1179, 0
      %vm1212 = vcmp.eq.s32.totalorder %v1180, 0
      %vm1213 = vcmp.eq.s32.totalorder %v1181, 0
      %vm1214 = vcmp.eq.s32.totalorder %v1182, 0
      %vm1215 = vcmp.eq.s32.totalorder %v1183, 0
      %vm1216 = vcmp.eq.s32.totalorder %v1184, 0
      %vm1217 = vcmp.eq.s32.totalorder %v1185, 0
      %vm1218 = vcmp.eq.s32.totalorder %v1186, 0
      %vm1219 = vcmp.eq.s32.totalorder %v1187, 0
      %vm1220 = vcmp.eq.s32.totalorder %v1188, 0
      %vm1221 = vcmp.eq.s32.totalorder %v1189, 0
      %vm1222 = vcmp.eq.s32.totalorder %v1190, 0
      %vm1223 = vcmp.eq.s32.totalorder %v1191, 0
      %vm1224 = vcmp.eq.s32.totalorder %v1160, 15
      %vm1225 = vcmp.eq.s32.totalorder %v1161, 15
      %vm1226 = vcmp.eq.s32.totalorder %v1162, 15
      %vm1227 = vcmp.eq.s32.totalorder %v1163, 15
      %vm1228 = vcmp.eq.s32.totalorder %v1164, 15
      %vm1229 = vcmp.eq.s32.totalorder %v1165, 15
      %vm1230 = vcmp.eq.s32.totalorder %v1166, 15
      %vm1231 = vcmp.eq.s32.totalorder %v1167, 15
      %vm1232 = vcmp.eq.s32.totalorder %v1168, 15
      %vm1233 = vcmp.eq.s32.totalorder %v1169, 15
      %vm1234 = vcmp.eq.s32.totalorder %v1170, 15
      %vm1235 = vcmp.eq.s32.totalorder %v1171, 15
      %vm1236 = vcmp.eq.s32.totalorder %v1172, 15
      %vm1237 = vcmp.eq.s32.totalorder %v1173, 15
      %vm1238 = vcmp.eq.s32.totalorder %v1174, 15
      %vm1239 = vcmp.eq.s32.totalorder %v1175, 15
      %vm1240 = vcmp.eq.s32.totalorder %v1176, 15
      %vm1241 = vcmp.eq.s32.totalorder %v1177, 15
      %vm1242 = vcmp.eq.s32.totalorder %v1178, 15
      %vm1243 = vcmp.eq.s32.totalorder %v1179, 15
      %vm1244 = vcmp.eq.s32.totalorder %v1180, 15
      %vm1245 = vcmp.eq.s32.totalorder %v1181, 15
      %vm1246 = vcmp.eq.s32.totalorder %v1182, 15
      %vm1247 = vcmp.eq.s32.totalorder %v1183, 15
      %vm1248 = vcmp.eq.s32.totalorder %v1184, 15
      %vm1249 = vcmp.eq.s32.totalorder %v1185, 15
      %vm1250 = vcmp.eq.s32.totalorder %v1186, 15
      %vm1251 = vcmp.eq.s32.totalorder %v1187, 15
      %vm1252 = vcmp.eq.s32.totalorder %v1188, 15
      %vm1253 = vcmp.eq.s32.totalorder %v1189, 15
      %vm1254 = vcmp.eq.s32.totalorder %v1190, 15
      %vm1255 = vcmp.eq.s32.totalorder %v1191, 15
      %v1256 = vld [vmem:[%s239] sm:$0xf]
      %v1257 = vld [vmem:[%s239 + $0x4] sm:$0xf]
      %v1258 = vld [vmem:[%s239 + $0x8] sm:$0xf]
      %v1259 = vld [vmem:[%s239 + $0xc] sm:$0xf]
      %v1260 = vld [vmem:[%s239 + $0x10] sm:$0xf]
      %v1261 = vld [vmem:[%s239 + $0x14] sm:$0xf]
      %v1262 = vld [vmem:[%s239 + $0x18] sm:$0xf]
      %v1263 = vld [vmem:[%s239 + $0x1c] sm:$0xf]
      %v1264 = vld [vmem:[%s239 + $0x20] sm:$0xf]
      %v1265 = vld [vmem:[%s239 + $0x24] sm:$0xf]
      %v1266 = vld [vmem:[%s239 + $0x28] sm:$0xf]
      %v1267 = vld [vmem:[%s239 + $0x2c] sm:$0xf]
      %v1268 = vld [vmem:[%s239 + $0x30] sm:$0xf]
      %v1269 = vld [vmem:[%s239 + $0x34] sm:$0xf]
      %v1270 = vld [vmem:[%s239 + $0x38] sm:$0xf]
      %v1271 = vld [vmem:[%s239 + $0x3c] sm:$0xf]
      %v1272 = vld [vmem:[%s239 + $0x40] sm:$0xf]
      %v1273 = vld [vmem:[%s239 + $0x44] sm:$0xf]
      %v1274 = vld [vmem:[%s239 + $0x48] sm:$0xf]
      %v1275 = vld [vmem:[%s239 + $0x4c] sm:$0xf]
      %v1276 = vld [vmem:[%s239 + $0x50] sm:$0xf]
      %v1277 = vld [vmem:[%s239 + $0x54] sm:$0xf]
      %v1278 = vld [vmem:[%s239 + $0x58] sm:$0xf]
      %v1279 = vld [vmem:[%s239 + $0x5c] sm:$0xf]
      %v1280 = vld [vmem:[%s239 + $0x60] sm:$0xf]
      %v1281 = vld [vmem:[%s239 + $0x64] sm:$0xf]
      %v1282 = vld [vmem:[%s239 + $0x68] sm:$0xf]
      %v1283 = vld [vmem:[%s239 + $0x6c] sm:$0xf]
      %v1284 = vld [vmem:[%s239 + $0x70] sm:$0xf]
      %v1285 = vld [vmem:[%s239 + $0x74] sm:$0xf]
      %v1286 = vld [vmem:[%s239 + $0x78] sm:$0xf]
      %v1287 = vld [vmem:[%s239 + $0x7c] sm:$0xf]
      %v1288 = vsel %vm1192, 1, 0
      %v1289 = vsel %vm1193, 1, 0
      %v1290 = vsel %vm1194, 1, 0
      %v1291 = vsel %vm1195, 1, 0
      %v1292 = vsel %vm1196, 1, 0
      %v1293 = vsel %vm1197, 1, 0
      %v1294 = vsel %vm1198, 1, 0
      %v1295 = vsel %vm1199, 1, 0
      %v1296 = vsel %vm1200, 1, 0
      %v1297 = vsel %vm1201, 1, 0
      %v1298 = vsel %vm1202, 1, 0
      %v1299 = vsel %vm1203, 1, 0
      %v1300 = vsel %vm1204, 1, 0
      %v1301 = vsel %vm1205, 1, 0
      %v1302 = vsel %vm1206, 1, 0
      %v1303 = vsel %vm1207, 1, 0
      %v1304 = vsel %vm1208, 1, 0
      %v1305 = vsel %vm1209, 1, 0
      %v1306 = vsel %vm1210, 1, 0
      %v1307 = vsel %vm1211, 1, 0
      %v1308 = vsel %vm1212, 1, 0
      %v1309 = vsel %vm1213, 1, 0
      %v1310 = vsel %vm1214, 1, 0
      %v1311 = vsel %vm1215, 1, 0
      %v1312 = vsel %vm1216, 1, 0
      %v1313 = vsel %vm1217, 1, 0
      %v1314 = vsel %vm1218, 1, 0
      %v1315 = vsel %vm1219, 1, 0
      %v1316 = vsel %vm1220, 1, 0
      %v1317 = vsel %vm1221, 1, 0
      %v1318 = vsel %vm1222, 1, 0
      %v1319 = vsel %vm1223, 1, 0
      %vm1320 = vcmp.eq.s32.totalorder %v1288, 1
      %vm1321 = vcmp.eq.s32.totalorder %v1289, 1
      %vm1322 = vcmp.eq.s32.totalorder %v1290, 1
      %vm1323 = vcmp.eq.s32.totalorder %v1291, 1
      %vm1324 = vcmp.eq.s32.totalorder %v1292, 1
      %vm1325 = vcmp.eq.s32.totalorder %v1293, 1
      %vm1326 = vcmp.eq.s32.totalorder %v1294, 1
      %vm1327 = vcmp.eq.s32.totalorder %v1295, 1
      %vm1328 = vcmp.eq.s32.totalorder %v1296, 1
      %vm1329 = vcmp.eq.s32.totalorder %v1297, 1
      %vm1330 = vcmp.eq.s32.totalorder %v1298, 1
      %vm1331 = vcmp.eq.s32.totalorder %v1299, 1
      %vm1332 = vcmp.eq.s32.totalorder %v1300, 1
      %vm1333 = vcmp.eq.s32.totalorder %v1301, 1
      %vm1334 = vcmp.eq.s32.totalorder %v1302, 1
      %vm1335 = vcmp.eq.s32.totalorder %v1303, 1
      %vm1336 = vcmp.eq.s32.totalorder %v1304, 1
      %vm1337 = vcmp.eq.s32.totalorder %v1305, 1
      %vm1338 = vcmp.eq.s32.totalorder %v1306, 1
      %vm1339 = vcmp.eq.s32.totalorder %v1307, 1
      %vm1340 = vcmp.eq.s32.totalorder %v1308, 1
      %vm1341 = vcmp.eq.s32.totalorder %v1309, 1
      %vm1342 = vcmp.eq.s32.totalorder %v1310, 1
      %vm1343 = vcmp.eq.s32.totalorder %v1311, 1
      %vm1344 = vcmp.eq.s32.totalorder %v1312, 1
      %vm1345 = vcmp.eq.s32.totalorder %v1313, 1
      %vm1346 = vcmp.eq.s32.totalorder %v1314, 1
      %vm1347 = vcmp.eq.s32.totalorder %v1315, 1
      %vm1348 = vcmp.eq.s32.totalorder %v1316, 1
      %vm1349 = vcmp.eq.s32.totalorder %v1317, 1
      %vm1350 = vcmp.eq.s32.totalorder %v1318, 1
      %vm1351 = vcmp.eq.s32.totalorder %v1319, 1
      %vm1352 = vmpackc.low %vm1320, %vm1320
      %vm1353 = vmpackc.low %vm1321, %vm1321
      %vm1354 = vmpackc.low %vm1322, %vm1322
      %vm1355 = vmpackc.low %vm1323, %vm1323
      %vm1356 = vmpackc.low %vm1324, %vm1324
      %vm1357 = vmpackc.low %vm1325, %vm1325
      %vm1358 = vmpackc.low %vm1326, %vm1326
      %vm1359 = vmpackc.low %vm1327, %vm1327
      %vm1360 = vmpackc.low %vm1328, %vm1328
      %vm1361 = vmpackc.low %vm1329, %vm1329
      %vm1362 = vmpackc.low %vm1330, %vm1330
      %vm1363 = vmpackc.low %vm1331, %vm1331
      %vm1364 = vmpackc.low %vm1332, %vm1332
      %vm1365 = vmpackc.low %vm1333, %vm1333
      %vm1366 = vmpackc.low %vm1334, %vm1334
      %vm1367 = vmpackc.low %vm1335, %vm1335
      %vm1368 = vmpackc.low %vm1336, %vm1336
      %vm1369 = vmpackc.low %vm1337, %vm1337
      %vm1370 = vmpackc.low %vm1338, %vm1338
      %vm1371 = vmpackc.low %vm1339, %vm1339
      %vm1372 = vmpackc.low %vm1340, %vm1340
      %vm1373 = vmpackc.low %vm1341, %vm1341
      %vm1374 = vmpackc.low %vm1342, %vm1342
      %vm1375 = vmpackc.low %vm1343, %vm1343
      %vm1376 = vmpackc.low %vm1344, %vm1344
      %vm1377 = vmpackc.low %vm1345, %vm1345
      %vm1378 = vmpackc.low %vm1346, %vm1346
      %vm1379 = vmpackc.low %vm1347, %vm1347
      %vm1380 = vmpackc.low %vm1348, %vm1348
      %vm1381 = vmpackc.low %vm1349, %vm1349
      %vm1382 = vmpackc.low %vm1350, %vm1350
      %vm1383 = vmpackc.low %vm1351, %vm1351
      %v1384 = vsel %vm1352, 0, %v1256
      %v1385 = vsel %vm1353, 0, %v1257
      %v1386 = vsel %vm1354, 0, %v1258
      %v1387 = vsel %vm1355, 0, %v1259
      %v1388 = vsel %vm1356, 0, %v1260
      %v1389 = vsel %vm1357, 0, %v1261
      %v1390 = vsel %vm1358, 0, %v1262
      %v1391 = vsel %vm1359, 0, %v1263
      %v1392 = vsel %vm1360, 0, %v1264
      %v1393 = vsel %vm1361, 0, %v1265
      %v1394 = vsel %vm1362, 0, %v1266
      %v1395 = vsel %vm1363, 0, %v1267
      %v1396 = vsel %vm1364, 0, %v1268
      %v1397 = vsel %vm1365, 0, %v1269
      %v1398 = vsel %vm1366, 0, %v1270
      %v1399 = vsel %vm1367, 0, %v1271
      %v1400 = vsel %vm1368, 0, %v1272
      %v1401 = vsel %vm1369, 0, %v1273
      %v1402 = vsel %vm1370, 0, %v1274
      %v1403 = vsel %vm1371, 0, %v1275
      %v1404 = vsel %vm1372, 0, %v1276
      %v1405 = vsel %vm1373, 0, %v1277
      %v1406 = vsel %vm1374, 0, %v1278
      %v1407 = vsel %vm1375, 0, %v1279
      %v1408 = vsel %vm1376, 0, %v1280
      %v1409 = vsel %vm1377, 0, %v1281
      %v1410 = vsel %vm1378, 0, %v1282
      %v1411 = vsel %vm1379, 0, %v1283
      %v1412 = vsel %vm1380, 0, %v1284
      %v1413 = vsel %vm1381, 0, %v1285
      %v1414 = vsel %vm1382, 0, %v1286
      %v1415 = vsel %vm1383, 0, %v1287
      %v1416 = vld [vmem:[%s3] sm:$0xf]
      %v1417 = vld [vmem:[%s239 + $0x80] sm:$0x1]
      %s1418 = scalar_lea.vmem %s3, 4
      %v1419 = vld [vmem:[%s1418] sm:$0xf]
      %v1453 = vunpack.c.l.b16 %v1256
      %v1454 = vunpack.c.l.b16 %v1257
      %v1455 = vunpack.c.l.b16 %v1258
      %v1456 = vunpack.c.l.b16 %v1259
      %v1457 = vunpack.c.l.b16 %v1260
      %v1458 = vunpack.c.l.b16 %v1261
      %v1459 = vunpack.c.l.b16 %v1262
      %v1460 = vunpack.c.l.b16 %v1263
      %v1461 = vunpack.c.l.b16 %v1264
      %v1462 = vunpack.c.l.b16 %v1265
      %v1463 = vunpack.c.l.b16 %v1266
      %v1464 = vunpack.c.l.b16 %v1267
      %v1465 = vunpack.c.l.b16 %v1268
      %v1466 = vunpack.c.l.b16 %v1269
      %v1467 = vunpack.c.l.b16 %v1270
      %v1468 = vunpack.c.l.b16 %v1271
      %v1469 = vunpack.c.l.b16 %v1272
      %v1470 = vunpack.c.l.b16 %v1273
      %v1471 = vunpack.c.l.b16 %v1274
      %v1472 = vunpack.c.l.b16 %v1275
      %v1473 = vunpack.c.l.b16 %v1276
      %v1474 = vunpack.c.l.b16 %v1277
      %v1475 = vunpack.c.l.b16 %v1278
      %v1476 = vunpack.c.l.b16 %v1279
      %v1477 = vunpack.c.l.b16 %v1280
      %v1478 = vunpack.c.l.b16 %v1281
      %v1479 = vunpack.c.l.b16 %v1282
      %v1480 = vunpack.c.l.b16 %v1283
      %v1481 = vunpack.c.l.b16 %v1284
      %v1482 = vunpack.c.l.b16 %v1285
      %v1483 = vunpack.c.l.b16 %v1286
      %v1484 = vunpack.c.l.b16 %v1287
      %v1485 = vunpack.c.l.b16 %v1417
      %v1486 = vpack.c.b16 %v1454, %v1453
      %v1487 = vpack.c.b16 %v1456, %v1455
      %v1488 = vpack.c.b16 %v1458, %v1457
      %v1489 = vpack.c.b16 %v1460, %v1459
      %v1490 = vpack.c.b16 %v1462, %v1461
      %v1491 = vpack.c.b16 %v1464, %v1463
      %v1492 = vpack.c.b16 %v1466, %v1465
      %v1493 = vpack.c.b16 %v1468, %v1467
      %v1494 = vpack.c.b16 %v1470, %v1469
      %v1495 = vpack.c.b16 %v1472, %v1471
      %v1496 = vpack.c.b16 %v1474, %v1473
      %v1497 = vpack.c.b16 %v1476, %v1475
      %v1498 = vpack.c.b16 %v1478, %v1477
      %v1499 = vpack.c.b16 %v1480, %v1479
      %v1500 = vpack.c.b16 %v1482, %v1481
      %v1501 = vpack.c.b16 %v1484, %v1483
      %v1502 = vpack.c.b16 %v1485, %v1485
      %vm1503 = vsmask.f32 7424
      %v1505 = vshrl.u32 %v1486, 16
      %v1507 = vshll.u32 %v1486, 16
      %v1509 = vrot.slane %v1507, 1
      %v1510 = vor.u32 %v1505, %v1509
      %v1512 = vshll.u32 %v1487, 16
      %v1514 = vrot.slane %v1512, 1
      %v1515 = vsel %vm1503, %v1510, %v1514
      %v1516 = vshrl.u32 %v1487, 16
      %v1518 = vor.u32 %v1516, %v1514
      %v1520 = vshll.u32 %v1488, 16
      %v1522 = vrot.slane %v1520, 1
      %v1523 = vsel %vm1503, %v1518, %v1522
      %v1524 = vshrl.u32 %v1488, 16
      %v1526 = vor.u32 %v1524, %v1522
      %v1528 = vshll.u32 %v1489, 16
      %v1530 = vrot.slane %v1528, 1
      %v1531 = vsel %vm1503, %v1526, %v1530
      %v1532 = vshrl.u32 %v1489, 16
      %v1534 = vor.u32 %v1532, %v1530
      %v1536 = vshll.u32 %v1490, 16
      %v1538 = vrot.slane %v1536, 1
      %v1539 = vsel %vm1503, %v1534, %v1538
      %v1540 = vshrl.u32 %v1490, 16
      %v1542 = vor.u32 %v1540, %v1538
      %v1544 = vshll.u32 %v1491, 16
      %v1546 = vrot.slane %v1544, 1
      %v1547 = vsel %vm1503, %v1542, %v1546
      %v1548 = vshrl.u32 %v1491, 16
      %v1550 = vor.u32 %v1548, %v1546
      %v1552 = vshll.u32 %v1492, 16
      %v1554 = vrot.slane %v1552, 1
      %v1555 = vsel %vm1503, %v1550, %v1554
      %v1556 = vshrl.u32 %v1492, 16
      %v1558 = vor.u32 %v1556, %v1554
      %v1560 = vshll.u32 %v1493, 16
      %v1562 = vrot.slane %v1560, 1
      %v1563 = vsel %vm1503, %v1558, %v1562
      %v1564 = vshrl.u32 %v1493, 16
      %v1566 = vor.u32 %v1564, %v1562
      %v1568 = vshll.u32 %v1494, 16
      %v1570 = vrot.slane %v1568, 1
      %v1571 = vsel %vm1503, %v1566, %v1570
      %v1572 = vshrl.u32 %v1494, 16
      %v1574 = vor.u32 %v1572, %v1570
      %v1576 = vshll.u32 %v1495, 16
      %v1578 = vrot.slane %v1576, 1
      %v1579 = vsel %vm1503, %v1574, %v1578
      %v1580 = vshrl.u32 %v1495, 16
      %v1582 = vor.u32 %v1580, %v1578
      %v1584 = vshll.u32 %v1496, 16
      %v1586 = vrot.slane %v1584, 1
      %v1587 = vsel %vm1503, %v1582, %v1586
      %v1588 = vshrl.u32 %v1496, 16
      %v1590 = vor.u32 %v1588, %v1586
      %v1592 = vshll.u32 %v1497, 16
      %v1594 = vrot.slane %v1592, 1
      %v1595 = vsel %vm1503, %v1590, %v1594
      %v1596 = vshrl.u32 %v1497, 16
      %v1598 = vor.u32 %v1596, %v1594
      %v1600 = vshll.u32 %v1498, 16
      %v1602 = vrot.slane %v1600, 1
      %v1603 = vsel %vm1503, %v1598, %v1602
      %v1604 = vshrl.u32 %v1498, 16
      %v1606 = vor.u32 %v1604, %v1602
      %v1608 = vshll.u32 %v1499, 16
      %v1610 = vrot.slane %v1608, 1
      %v1611 = vsel %vm1503, %v1606, %v1610
      %v1612 = vshrl.u32 %v1499, 16
      %v1614 = vor.u32 %v1612, %v1610
      %v1616 = vshll.u32 %v1500, 16
      %v1618 = vrot.slane %v1616, 1
      %v1619 = vsel %vm1503, %v1614, %v1618
      %v1620 = vshrl.u32 %v1500, 16
      %v1622 = vor.u32 %v1620, %v1618
      %v1624 = vshll.u32 %v1501, 16
      %v1626 = vrot.slane %v1624, 1
      %v1627 = vsel %vm1503, %v1622, %v1626
      %v1628 = vshrl.u32 %v1501, 16
      %v1630 = vor.u32 %v1628, %v1626
      %v1632 = vshll.u32 %v1502, 16
      %v1634 = vrot.slane %v1632, 1
      %v1635 = vsel %vm1503, %v1630, %v1634
      %v1637 = vsel %vm368, %v1515, 0
      %v1640 = vsel %vm368, %v1523, 0
      %v1643 = vsel %vm368, %v1531, 0
      %v1646 = vsel %vm368, %v1539, 0
      %v1649 = vsel %vm368, %v1547, 0
      %v1652 = vsel %vm368, %v1555, 0
      %v1655 = vsel %vm368, %v1563, 0
      %v1658 = vsel %vm368, %v1571, 0
      %v1661 = vsel %vm368, %v1579, 0
      %v1664 = vsel %vm368, %v1587, 0
      %v1667 = vsel %vm368, %v1595, 0
      %v1670 = vsel %vm368, %v1603, 0
      %v1673 = vsel %vm368, %v1611, 0
      %v1676 = vsel %vm368, %v1619, 0
      %v1679 = vsel %vm368, %v1627, 0
      %v1682 = vsel %vm368, %v1635, 0
      %v1685 = vsel %vm417, %v1419, 0
      %1687 = vmatprep.subr.bf16.mxu0 0
      %1688 = vmatpush1.bf16.msra.mxu0 %v1685
      %1689 = vmatprep.subr.bf16.mxu0 0
      %1690 = vmatpush1.bf16.msra.mxu0 0
      %1691 = vmatprep.subr.bf16.mxu0 0
      %1692 = vmatpush1.bf16.msra.mxu0 0
      %1693 = vmatprep.subr.bf16.mxu0 0
      %1694 = vmatpush1.bf16.msra.mxu0 0
      %1695 = vmatprep.subr.bf16.mxu0 0
      %1696 = vmatpush1.bf16.msra.mxu0 0
      %1697 = vmatprep.subr.bf16.mxu0 0
      %1698 = vmatpush1.bf16.msra.mxu0 0
      %1699 = vmatprep.subr.bf16.mxu0 0
      %1700 = vmatpush1.bf16.msra.mxu0 0
      %1701 = vmatprep.subr.bf16.mxu0 0
      %1702 = vmatpush1.bf16.msra.mxu0 0
      %1703 = vmatprep.subr.bf16.mxu0 0
      %1704 = vmatpush1.bf16.msra.mxu0 0
      %1705 = vmatprep.subr.bf16.mxu0 0
      %1706 = vmatpush1.bf16.msra.mxu0 0
      %1707 = vmatprep.subr.bf16.mxu0 0
      %1708 = vmatpush1.bf16.msra.mxu0 0
      %1709 = vmatprep.subr.bf16.mxu0 0
      %1710 = vmatpush1.bf16.msra.mxu0 0
      %1711 = vmatprep.subr.bf16.mxu0 0
      %1712 = vmatpush1.bf16.msra.mxu0 0
      %1713 = vmatprep.subr.bf16.mxu0 0
      %1714 = vmatpush1.bf16.msra.mxu0 0
      %1715 = vmatprep.subr.bf16.mxu0 0
      %1716 = vmatpush1.bf16.msra.mxu0 0
      %1717 = vmatprep.subr.bf16.mxu0 0
      %1718 = vmatpush1.bf16.msra.mxu0 0
      %1719 = vmatprep.mubr.bf16.mxu0 0
      %1720 = vmatmul.mubr.bf16.gmra.mrb[0].mxu0 %v1637
      %v1721 = vpop.f32.mrb[0].mxu0
      %v1722 = vadd.f32 0.0, %v1721
      %v1723 = vpop.f32.mrb[0].mxu0
      %v1724 = vpop.f32.mrb[0].mxu0
      %v1725 = vadd.f32 0.0, %v1724
      %v1726 = vpop.f32.mrb[0].mxu0
      %1727 = vmatprep.mubr.bf16.mxu0 0
      %1728 = vmatmul.mubr.bf16.gmra.mrb[0].mxu0 %v1640
      %v1729 = vpop.f32.mrb[0].mxu0
      %v1730 = vadd.f32 0.0, %v1729
      %v1731 = vpop.f32.mrb[0].mxu0
      %v1732 = vpop.f32.mrb[0].mxu0
      %v1733 = vadd.f32 0.0, %v1732
      %v1734 = vpop.f32.mrb[0].mxu0
      %1735 = vmatprep.mubr.bf16.mxu0 0
      %1736 = vmatmul.mubr.bf16.gmra.mrb[0].mxu0 %v1643
      %v1737 = vpop.f32.mrb[0].mxu0
      %v1738 = vadd.f32 0.0, %v1737
      %v1739 = vpop.f32.mrb[0].mxu0
      %v1740 = vpop.f32.mrb[0].mxu0
      %v1741 = vadd.f32 0.0, %v1740
      %v1742 = vpop.f32.mrb[0].mxu0
      %1743 = vmatprep.mubr.bf16.mxu0 0
      %1744 = vmatmul.mubr.bf16.gmra.mrb[0].mxu0 %v1646
      %v1745 = vpop.f32.mrb[0].mxu0
      %v1746 = vadd.f32 0.0, %v1745
      %v1747 = vpop.f32.mrb[0].mxu0
      %v1748 = vpop.f32.mrb[0].mxu0
      %v1749 = vadd.f32 0.0, %v1748
      %v1750 = vpop.f32.mrb[0].mxu0
      %1751 = vmatprep.mubr.bf16.mxu0 0
      %1752 = vmatmul.mubr.bf16.gmra.mrb[0].mxu0 %v1649
      %v1753 = vpop.f32.mrb[0].mxu0
      %v1754 = vadd.f32 0.0, %v1753
      %v1755 = vpop.f32.mrb[0].mxu0
      %v1756 = vpop.f32.mrb[0].mxu0
      %v1757 = vadd.f32 0.0, %v1756
      %v1758 = vpop.f32.mrb[0].mxu0
      %1759 = vmatprep.mubr.bf16.mxu0 0
      %1760 = vmatmul.mubr.bf16.gmra.mrb[0].mxu0 %v1652
      %v1761 = vpop.f32.mrb[0].mxu0
      %v1762 = vadd.f32 0.0, %v1761
      %v1763 = vpop.f32.mrb[0].mxu0
      %v1764 = vpop.f32.mrb[0].mxu0
      %v1765 = vadd.f32 0.0, %v1764
      %v1766 = vpop.f32.mrb[0].mxu0
      %1767 = vmatprep.mubr.bf16.mxu0 0
      %1768 = vmatmul.mubr.bf16.gmra.mrb[0].mxu0 %v1655
      %v1769 = vpop.f32.mrb[0].mxu0
      %v1770 = vadd.f32 0.0, %v1769
      %v1771 = vpop.f32.mrb[0].mxu0
      %v1772 = vpop.f32.mrb[0].mxu0
      %v1773 = vadd.f32 0.0, %v1772
      %v1774 = vpop.f32.mrb[0].mxu0
      %1775 = vmatprep.mubr.bf16.mxu0 0
      %1776 = vmatmul.mubr.bf16.gmra.mrb[0].mxu0 %v1658
      %v1777 = vpop.f32.mrb[0].mxu0
      %v1778 = vadd.f32 0.0, %v1777
      %v1779 = vpop.f32.mrb[0].mxu0
      %v1780 = vpop.f32.mrb[0].mxu0
      %v1781 = vadd.f32 0.0, %v1780
      %v1782 = vpop.f32.mrb[0].mxu0
      %1783 = vmatprep.mubr.bf16.mxu0 0
      %1784 = vmatmul.mubr.bf16.gmra.mrb[0].mxu0 %v1661
      %v1785 = vpop.f32.mrb[0].mxu0
      %v1786 = vadd.f32 0.0, %v1785
      %v1787 = vpop.f32.mrb[0].mxu0
      %v1788 = vpop.f32.mrb[0].mxu0
      %v1789 = vadd.f32 0.0, %v1788
      %v1790 = vpop.f32.mrb[0].mxu0
      %1791 = vmatprep.mubr.bf16.mxu0 0
      %1792 = vmatmul.mubr.bf16.gmra.mrb[0].mxu0 %v1664
      %v1793 = vpop.f32.mrb[0].mxu0
      %v1794 = vadd.f32 0.0, %v1793
      %v1795 = vpop.f32.mrb[0].mxu0
      %v1796 = vpop.f32.mrb[0].mxu0
      %v1797 = vadd.f32 0.0, %v1796
      %v1798 = vpop.f32.mrb[0].mxu0
      %1799 = vmatprep.mubr.bf16.mxu0 0
      %1800 = vmatmul.mubr.bf16.gmra.mrb[0].mxu0 %v1667
      %v1801 = vpop.f32.mrb[0].mxu0
      %v1802 = vadd.f32 0.0, %v1801
      %v1803 = vpop.f32.mrb[0].mxu0
      %v1804 = vpop.f32.mrb[0].mxu0
      %v1805 = vadd.f32 0.0, %v1804
      %v1806 = vpop.f32.mrb[0].mxu0
      %1807 = vmatprep.mubr.bf16.mxu0 0
      %1808 = vmatmul.mubr.bf16.gmra.mrb[0].mxu0 %v1670
      %v1809 = vpop.f32.mrb[0].mxu0
      %v1810 = vadd.f32 0.0, %v1809
      %v1811 = vpop.f32.mrb[0].mxu0
      %v1812 = vpop.f32.mrb[0].mxu0
      %v1813 = vadd.f32 0.0, %v1812
      %v1814 = vpop.f32.mrb[0].mxu0
      %1815 = vmatprep.mubr.bf16.mxu0 0
      %1816 = vmatmul.mubr.bf16.gmra.mrb[0].mxu0 %v1673
      %v1817 = vpop.f32.mrb[0].mxu0
      %v1818 = vadd.f32 0.0, %v1817
      %v1819 = vpop.f32.mrb[0].mxu0
      %v1820 = vpop.f32.mrb[0].mxu0
      %v1821 = vadd.f32 0.0, %v1820
      %v1822 = vpop.f32.mrb[0].mxu0
      %1823 = vmatprep.mubr.bf16.mxu0 0
      %1824 = vmatmul.mubr.bf16.gmra.mrb[0].mxu0 %v1676
      %v1825 = vpop.f32.mrb[0].mxu0
      %v1826 = vadd.f32 0.0, %v1825
      %v1827 = vpop.f32.mrb[0].mxu0
      %v1828 = vpop.f32.mrb[0].mxu0
      %v1829 = vadd.f32 0.0, %v1828
      %v1830 = vpop.f32.mrb[0].mxu0
      %1831 = vmatprep.mubr.bf16.mxu0 0
      %1832 = vmatmul.mubr.bf16.gmra.mrb[0].mxu0 %v1679
      %v1833 = vpop.f32.mrb[0].mxu0
      %v1834 = vadd.f32 0.0, %v1833
      %v1835 = vpop.f32.mrb[0].mxu0
      %v1836 = vpop.f32.mrb[0].mxu0
      %v1837 = vadd.f32 0.0, %v1836
      %v1838 = vpop.f32.mrb[0].mxu0
      %1839 = vmatprep.mubr.bf16.mxu0 0
      %1840 = vmatmul.mubr.bf16.gmra.mrb[0].mxu0 %v1682
      %v1841 = vpop.f32.mrb[0].mxu0
      %v1842 = vadd.f32 0.0, %v1841
      %v1843 = vpop.f32.mrb[0].mxu0
      %v1844 = vpop.f32.mrb[0].mxu0
      %v1845 = vadd.f32 0.0, %v1844
      %v1846 = vpop.f32.mrb[0].mxu0
      %1847 = vdwg.mxu0
      %v1880 = vunpack.c.l.b16 %v1384
      %v1881 = vunpack.c.l.b16 %v1385
      %v1882 = vunpack.c.l.b16 %v1386
      %v1883 = vunpack.c.l.b16 %v1387
      %v1884 = vunpack.c.l.b16 %v1388
      %v1885 = vunpack.c.l.b16 %v1389
      %v1886 = vunpack.c.l.b16 %v1390
      %v1887 = vunpack.c.l.b16 %v1391
      %v1888 = vunpack.c.l.b16 %v1392
      %v1889 = vunpack.c.l.b16 %v1393
      %v1890 = vunpack.c.l.b16 %v1394
      %v1891 = vunpack.c.l.b16 %v1395
      %v1892 = vunpack.c.l.b16 %v1396
      %v1893 = vunpack.c.l.b16 %v1397
      %v1894 = vunpack.c.l.b16 %v1398
      %v1895 = vunpack.c.l.b16 %v1399
      %v1896 = vunpack.c.l.b16 %v1400
      %v1897 = vunpack.c.l.b16 %v1401
      %v1898 = vunpack.c.l.b16 %v1402
      %v1899 = vunpack.c.l.b16 %v1403
      %v1900 = vunpack.c.l.b16 %v1404
      %v1901 = vunpack.c.l.b16 %v1405
      %v1902 = vunpack.c.l.b16 %v1406
      %v1903 = vunpack.c.l.b16 %v1407
      %v1904 = vunpack.c.l.b16 %v1408
      %v1905 = vunpack.c.l.b16 %v1409
      %v1906 = vunpack.c.l.b16 %v1410
      %v1907 = vunpack.c.l.b16 %v1411
      %v1908 = vunpack.c.l.b16 %v1412
      %v1909 = vunpack.c.l.b16 %v1413
      %v1910 = vunpack.c.l.b16 %v1414
      %v1911 = vunpack.c.l.b16 %v1415
      %v1912 = vpack.c.b16 %v1881, %v1880
      %v1913 = vpack.c.b16 %v1883, %v1882
      %v1914 = vpack.c.b16 %v1885, %v1884
      %v1915 = vpack.c.b16 %v1887, %v1886
      %v1916 = vpack.c.b16 %v1889, %v1888
      %v1917 = vpack.c.b16 %v1891, %v1890
      %v1918 = vpack.c.b16 %v1893, %v1892
      %v1919 = vpack.c.b16 %v1895, %v1894
      %v1920 = vpack.c.b16 %v1897, %v1896
      %v1921 = vpack.c.b16 %v1899, %v1898
      %v1922 = vpack.c.b16 %v1901, %v1900
      %v1923 = vpack.c.b16 %v1903, %v1902
      %v1924 = vpack.c.b16 %v1905, %v1904
      %v1925 = vpack.c.b16 %v1907, %v1906
      %v1926 = vpack.c.b16 %v1909, %v1908
      %v1927 = vpack.c.b16 %v1911, %v1910
      %v1929 = vsel %vm368, %v1912, 0
      %v1932 = vsel %vm368, %v1913, 0
      %v1935 = vsel %vm368, %v1914, 0
      %v1938 = vsel %vm368, %v1915, 0
      %v1941 = vsel %vm368, %v1916, 0
      %v1944 = vsel %vm368, %v1917, 0
      %v1947 = vsel %vm368, %v1918, 0
      %v1950 = vsel %vm368, %v1919, 0
      %v1953 = vsel %vm368, %v1920, 0
      %v1956 = vsel %vm368, %v1921, 0
      %v1959 = vsel %vm368, %v1922, 0
      %v1962 = vsel %vm368, %v1923, 0
      %v1965 = vsel %vm368, %v1924, 0
      %v1968 = vsel %vm368, %v1925, 0
      %v1971 = vsel %vm368, %v1926, 0
      %v1974 = vsel %vm368, %v1927, 0
      %v1977 = vsel %vm417, %v1416, 0
      %1979 = vmatprep.subr.bf16.mxu0 0
      %1980 = vmatpush1.bf16.msra.mxu0 %v1977
      %1981 = vmatprep.subr.bf16.mxu0 0
      %1982 = vmatpush1.bf16.msra.mxu0 0
      %1983 = vmatprep.subr.bf16.mxu0 0
      %1984 = vmatpush1.bf16.msra.mxu0 0
      %1985 = vmatprep.subr.bf16.mxu0 0
      %1986 = vmatpush1.bf16.msra.mxu0 0
      %1987 = vmatprep.subr.bf16.mxu0 0
      %1988 = vmatpush1.bf16.msra.mxu0 0
      %1989 = vmatprep.subr.bf16.mxu0 0
      %1990 = vmatpush1.bf16.msra.mxu0 0
      %1991 = vmatprep.subr.bf16.mxu0 0
      %1992 = vmatpush1.bf16.msra.mxu0 0
      %1993 = vmatprep.subr.bf16.mxu0 0
      %1994 = vmatpush1.bf16.msra.mxu0 0
      %1995 = vmatprep.subr.bf16.mxu0 0
      %1996 = vmatpush1.bf16.msra.mxu0 0
      %1997 = vmatprep.subr.bf16.mxu0 0
      %1998 = vmatpush1.bf16.msra.mxu0 0
      %1999 = vmatprep.subr.bf16.mxu0 0
      %2000 = vmatpush1.bf16.msra.mxu0 0
      %2001 = vmatprep.subr.bf16.mxu0 0
      %2002 = vmatpush1.bf16.msra.mxu0 0
      %2003 = vmatprep.subr.bf16.mxu0 0
      %2004 = vmatpush1.bf16.msra.mxu0 0
      %2005 = vmatprep.subr.bf16.mxu0 0
      %2006 = vmatpush1.bf16.msra.mxu0 0
      %2007 = vmatprep.subr.bf16.mxu0 0
      %2008 = vmatpush1.bf16.msra.mxu0 0
      %2009 = vmatprep.subr.bf16.mxu0 0
      %2010 = vmatpush1.bf16.msra.mxu0 0
      %2011 = vmatprep.mubr.bf16.mxu0 0
      %2012 = vmatmul.mubr.bf16.gmra.mrb[0].mxu0 %v1929
      %v2013 = vpop.f32.mrb[0].mxu0
      %v2014 = vadd.f32 %v1722, %v2013
      %v2015 = vpop.f32.mrb[0].mxu0
      %v2016 = vpop.f32.mrb[0].mxu0
      %v2017 = vadd.f32 %v1725, %v2016
      %v2018 = vpop.f32.mrb[0].mxu0
      %2019 = vmatprep.mubr.bf16.mxu0 0
      %2020 = vmatmul.mubr.bf16.gmra.mrb[0].mxu0 %v1932
      %v2021 = vpop.f32.mrb[0].mxu0
      %v2022 = vadd.f32 %v1730, %v2021
      %v2023 = vpop.f32.mrb[0].mxu0
      %v2024 = vpop.f32.mrb[0].mxu0
      %v2025 = vadd.f32 %v1733, %v2024
      %v2026 = vpop.f32.mrb[0].mxu0
      %2027 = vmatprep.mubr.bf16.mxu0 0
      %2028 = vmatmul.mubr.bf16.gmra.mrb[0].mxu0 %v1935
      %v2029 = vpop.f32.mrb[0].mxu0
      %v2030 = vadd.f32 %v1738, %v2029
      %v2031 = vpop.f32.mrb[0].mxu0
      %v2032 = vpop.f32.mrb[0].mxu0
      %v2033 = vadd.f32 %v1741, %v2032
      %v2034 = vpop.f32.mrb[0].mxu0
      %2035 = vmatprep.mubr.bf16.mxu0 0
      %2036 = vmatmul.mubr.bf16.gmra.mrb[0].mxu0 %v1938
      %v2037 = vpop.f32.mrb[0].mxu0
      %v2038 = vadd.f32 %v1746, %v2037
      %v2039 = vpop.f32.mrb[0].mxu0
      %v2040 = vpop.f32.mrb[0].mxu0
      %v2041 = vadd.f32 %v1749, %v2040
      %v2042 = vpop.f32.mrb[0].mxu0
      %2043 = vmatprep.mubr.bf16.mxu0 0
      %2044 = vmatmul.mubr.bf16.gmra.mrb[0].mxu0 %v1941
      %v2045 = vpop.f32.mrb[0].mxu0
      %v2046 = vadd.f32 %v1754, %v2045
      %v2047 = vpop.f32.mrb[0].mxu0
      %v2048 = vpop.f32.mrb[0].mxu0
      %v2049 = vadd.f32 %v1757, %v2048
      %v2050 = vpop.f32.mrb[0].mxu0
      %2051 = vmatprep.mubr.bf16.mxu0 0
      %2052 = vmatmul.mubr.bf16.gmra.mrb[0].mxu0 %v1944
      %v2053 = vpop.f32.mrb[0].mxu0
      %v2054 = vadd.f32 %v1762, %v2053
      %v2055 = vpop.f32.mrb[0].mxu0
      %v2056 = vpop.f32.mrb[0].mxu0
      %v2057 = vadd.f32 %v1765, %v2056
      %v2058 = vpop.f32.mrb[0].mxu0
      %2059 = vmatprep.mubr.bf16.mxu0 0
      %2060 = vmatmul.mubr.bf16.gmra.mrb[0].mxu0 %v1947
      %v2061 = vpop.f32.mrb[0].mxu0
      %v2062 = vadd.f32 %v1770, %v2061
      %v2063 = vpop.f32.mrb[0].mxu0
      %v2064 = vpop.f32.mrb[0].mxu0
      %v2065 = vadd.f32 %v1773, %v2064
      %v2066 = vpop.f32.mrb[0].mxu0
      %2067 = vmatprep.mubr.bf16.mxu0 0
      %2068 = vmatmul.mubr.bf16.gmra.mrb[0].mxu0 %v1950
      %v2069 = vpop.f32.mrb[0].mxu0
      %v2070 = vadd.f32 %v1778, %v2069
      %v2071 = vpop.f32.mrb[0].mxu0
      %v2072 = vpop.f32.mrb[0].mxu0
      %v2073 = vadd.f32 %v1781, %v2072
      %v2074 = vpop.f32.mrb[0].mxu0
      %2075 = vmatprep.mubr.bf16.mxu0 0
      %2076 = vmatmul.mubr.bf16.gmra.mrb[0].mxu0 %v1953
      %v2077 = vpop.f32.mrb[0].mxu0
      %v2078 = vadd.f32 %v1786, %v2077
      %v2079 = vpop.f32.mrb[0].mxu0
      %v2080 = vpop.f32.mrb[0].mxu0
      %v2081 = vadd.f32 %v1789, %v2080
      %v2082 = vpop.f32.mrb[0].mxu0
      %2083 = vmatprep.mubr.bf16.mxu0 0
      %2084 = vmatmul.mubr.bf16.gmra.mrb[0].mxu0 %v1956
      %v2085 = vpop.f32.mrb[0].mxu0
      %v2086 = vadd.f32 %v1794, %v2085
      %v2087 = vpop.f32.mrb[0].mxu0
      %v2088 = vpop.f32.mrb[0].mxu0
      %v2089 = vadd.f32 %v1797, %v2088
      %v2090 = vpop.f32.mrb[0].mxu0
      %2091 = vmatprep.mubr.bf16.mxu0 0
      %2092 = vmatmul.mubr.bf16.gmra.mrb[0].mxu0 %v1959
      %v2093 = vpop.f32.mrb[0].mxu0
      %v2094 = vadd.f32 %v1802, %v2093
      %v2095 = vpop.f32.mrb[0].mxu0
      %v2096 = vpop.f32.mrb[0].mxu0
      %v2097 = vadd.f32 %v1805, %v2096
      %v2098 = vpop.f32.mrb[0].mxu0
      %2099 = vmatprep.mubr.bf16.mxu0 0
      %2100 = vmatmul.mubr.bf16.gmra.mrb[0].mxu0 %v1962
      %v2101 = vpop.f32.mrb[0].mxu0
      %v2102 = vadd.f32 %v1810, %v2101
      %v2103 = vpop.f32.mrb[0].mxu0
      %v2104 = vpop.f32.mrb[0].mxu0
      %v2105 = vadd.f32 %v1813, %v2104
      %v2106 = vpop.f32.mrb[0].mxu0
      %2107 = vmatprep.mubr.bf16.mxu0 0
      %2108 = vmatmul.mubr.bf16.gmra.mrb[0].mxu0 %v1965
      %v2109 = vpop.f32.mrb[0].mxu0
      %v2110 = vadd.f32 %v1818, %v2109
      %v2111 = vpop.f32.mrb[0].mxu0
      %v2112 = vpop.f32.mrb[0].mxu0
      %v2113 = vadd.f32 %v1821, %v2112
      %v2114 = vpop.f32.mrb[0].mxu0
      %2115 = vmatprep.mubr.bf16.mxu0 0
      %2116 = vmatmul.mubr.bf16.gmra.mrb[0].mxu0 %v1968
      %v2117 = vpop.f32.mrb[0].mxu0
      %v2118 = vadd.f32 %v1826, %v2117
      %v2119 = vpop.f32.mrb[0].mxu0
      %v2120 = vpop.f32.mrb[0].mxu0
      %v2121 = vadd.f32 %v1829, %v2120
      %v2122 = vpop.f32.mrb[0].mxu0
      %2123 = vmatprep.mubr.bf16.mxu0 0
      %2124 = vmatmul.mubr.bf16.gmra.mrb[0].mxu0 %v1971
      %v2125 = vpop.f32.mrb[0].mxu0
      %v2126 = vadd.f32 %v1834, %v2125
      %v2127 = vpop.f32.mrb[0].mxu0
      %v2128 = vpop.f32.mrb[0].mxu0
      %v2129 = vadd.f32 %v1837, %v2128
      %v2130 = vpop.f32.mrb[0].mxu0
      %2131 = vmatprep.mubr.bf16.mxu0 0
      %2132 = vmatmul.mubr.bf16.gmra.mrb[0].mxu0 %v1974
      %v2133 = vpop.f32.mrb[0].mxu0
      %v2134 = vadd.f32 %v1842, %v2133
      %v2135 = vpop.f32.mrb[0].mxu0
      %v2136 = vpop.f32.mrb[0].mxu0
      %v2137 = vadd.f32 %v1845, %v2136
      %v2138 = vpop.f32.mrb[0].mxu0
      %2139 = vdwg.mxu0
      %v2140 = vld [vmem:[%s239] sm:$0xe]
      %v2141 = vsel %vm1224, 1, 0
      %v2142 = vsel %vm1225, 1, 0
      %v2143 = vsel %vm1226, 1, 0
      %v2144 = vsel %vm1227, 1, 0
      %v2145 = vsel %vm1228, 1, 0
      %v2146 = vsel %vm1229, 1, 0
      %v2147 = vsel %vm1230, 1, 0
      %v2148 = vsel %vm1231, 1, 0
      %v2149 = vsel %vm1232, 1, 0
      %v2150 = vsel %vm1233, 1, 0
      %v2151 = vsel %vm1234, 1, 0
      %v2152 = vsel %vm1235, 1, 0
      %v2153 = vsel %vm1236, 1, 0
      %v2154 = vsel %vm1237, 1, 0
      %v2155 = vsel %vm1238, 1, 0
      %v2156 = vsel %vm1239, 1, 0
      %v2157 = vsel %vm1240, 1, 0
      %v2158 = vsel %vm1241, 1, 0
      %v2159 = vsel %vm1242, 1, 0
      %v2160 = vsel %vm1243, 1, 0
      %v2161 = vsel %vm1244, 1, 0
      %v2162 = vsel %vm1245, 1, 0
      %v2163 = vsel %vm1246, 1, 0
      %v2164 = vsel %vm1247, 1, 0
      %v2165 = vsel %vm1248, 1, 0
      %v2166 = vsel %vm1249, 1, 0
      %v2167 = vsel %vm1250, 1, 0
      %v2168 = vsel %vm1251, 1, 0
      %v2169 = vsel %vm1252, 1, 0
      %v2170 = vsel %vm1253, 1, 0
      %v2171 = vsel %vm1254, 1, 0
      %v2172 = vsel %vm1255, 1, 0
      %vm2173 = vcmp.eq.s32.totalorder %v2141, 1
      %vm2174 = vcmp.eq.s32.totalorder %v2142, 1
      %vm2175 = vcmp.eq.s32.totalorder %v2143, 1
      %vm2176 = vcmp.eq.s32.totalorder %v2144, 1
      %vm2177 = vcmp.eq.s32.totalorder %v2145, 1
      %vm2178 = vcmp.eq.s32.totalorder %v2146, 1
      %vm2179 = vcmp.eq.s32.totalorder %v2147, 1
      %vm2180 = vcmp.eq.s32.totalorder %v2148, 1
      %vm2181 = vcmp.eq.s32.totalorder %v2149, 1
      %vm2182 = vcmp.eq.s32.totalorder %v2150, 1
      %vm2183 = vcmp.eq.s32.totalorder %v2151, 1
      %vm2184 = vcmp.eq.s32.totalorder %v2152, 1
      %vm2185 = vcmp.eq.s32.totalorder %v2153, 1
      %vm2186 = vcmp.eq.s32.totalorder %v2154, 1
      %vm2187 = vcmp.eq.s32.totalorder %v2155, 1
      %vm2188 = vcmp.eq.s32.totalorder %v2156, 1
      %vm2189 = vcmp.eq.s32.totalorder %v2157, 1
      %vm2190 = vcmp.eq.s32.totalorder %v2158, 1
      %vm2191 = vcmp.eq.s32.totalorder %v2159, 1
      %vm2192 = vcmp.eq.s32.totalorder %v2160, 1
      %vm2193 = vcmp.eq.s32.totalorder %v2161, 1
      %vm2194 = vcmp.eq.s32.totalorder %v2162, 1
      %vm2195 = vcmp.eq.s32.totalorder %v2163, 1
      %vm2196 = vcmp.eq.s32.totalorder %v2164, 1
      %vm2197 = vcmp.eq.s32.totalorder %v2165, 1
      %vm2198 = vcmp.eq.s32.totalorder %v2166, 1
      %vm2199 = vcmp.eq.s32.totalorder %v2167, 1
      %vm2200 = vcmp.eq.s32.totalorder %v2168, 1
      %vm2201 = vcmp.eq.s32.totalorder %v2169, 1
      %vm2202 = vcmp.eq.s32.totalorder %v2170, 1
      %vm2203 = vcmp.eq.s32.totalorder %v2171, 1
      %vm2204 = vcmp.eq.s32.totalorder %v2172, 1
      %vm2205 = vmpackc.low %vm2173, %vm2173
      %vm2206 = vmpackc.low %vm2174, %vm2174
      %vm2207 = vmpackc.low %vm2175, %vm2175
      %vm2208 = vmpackc.low %vm2176, %vm2176
      %vm2209 = vmpackc.low %vm2177, %vm2177
      %vm2210 = vmpackc.low %vm2178, %vm2178
      %vm2211 = vmpackc.low %vm2179, %vm2179
      %vm2212 = vmpackc.low %vm2180, %vm2180
      %vm2213 = vmpackc.low %vm2181, %vm2181
      %vm2214 = vmpackc.low %vm2182, %vm2182
      %vm2215 = vmpackc.low %vm2183, %vm2183
      %vm2216 = vmpackc.low %vm2184, %vm2184
      %vm2217 = vmpackc.low %vm2185, %vm2185
      %vm2218 = vmpackc.low %vm2186, %vm2186
      %vm2219 = vmpackc.low %vm2187, %vm2187
      %vm2220 = vmpackc.low %vm2188, %vm2188
      %vm2221 = vmpackc.low %vm2189, %vm2189
      %vm2222 = vmpackc.low %vm2190, %vm2190
      %vm2223 = vmpackc.low %vm2191, %vm2191
      %vm2224 = vmpackc.low %vm2192, %vm2192
      %vm2225 = vmpackc.low %vm2193, %vm2193
      %vm2226 = vmpackc.low %vm2194, %vm2194
      %vm2227 = vmpackc.low %vm2195, %vm2195
      %vm2228 = vmpackc.low %vm2196, %vm2196
      %vm2229 = vmpackc.low %vm2197, %vm2197
      %vm2230 = vmpackc.low %vm2198, %vm2198
      %vm2231 = vmpackc.low %vm2199, %vm2199
      %vm2232 = vmpackc.low %vm2200, %vm2200
      %vm2233 = vmpackc.low %vm2201, %vm2201
      %vm2234 = vmpackc.low %vm2202, %vm2202
      %vm2235 = vmpackc.low %vm2203, %vm2203
      %vm2236 = vmpackc.low %vm2204, %vm2204
      %v2237 = vsel %vm2205, 65537, 0
      %v2238 = vsel %vm2206, 65537, 0
      %v2239 = vsel %vm2207, 65537, 0
      %v2240 = vsel %vm2208, 65537, 0
      %v2241 = vsel %vm2209, 65537, 0
      %v2242 = vsel %vm2210, 65537, 0
      %v2243 = vsel %vm2211, 65537, 0
      %v2244 = vsel %vm2212, 65537, 0
      %v2245 = vsel %vm2213, 65537, 0
      %v2246 = vsel %vm2214, 65537, 0
      %v2247 = vsel %vm2215, 65537, 0
      %v2248 = vsel %vm2216, 65537, 0
      %v2249 = vsel %vm2217, 65537, 0
      %v2250 = vsel %vm2218, 65537, 0
      %v2251 = vsel %vm2219, 65537, 0
      %v2252 = vsel %vm2220, 65537, 0
      %v2253 = vsel %vm2221, 65537, 0
      %v2254 = vsel %vm2222, 65537, 0
      %v2255 = vsel %vm2223, 65537, 0
      %v2256 = vsel %vm2224, 65537, 0
      %v2257 = vsel %vm2225, 65537, 0
      %v2258 = vsel %vm2226, 65537, 0
      %v2259 = vsel %vm2227, 65537, 0
      %v2260 = vsel %vm2228, 65537, 0
      %v2261 = vsel %vm2229, 65537, 0
      %v2262 = vsel %vm2230, 65537, 0
      %v2263 = vsel %vm2231, 65537, 0
      %v2264 = vsel %vm2232, 65537, 0
      %v2265 = vsel %vm2233, 65537, 0
      %v2266 = vsel %vm2234, 65537, 0
      %v2267 = vsel %vm2235, 65537, 0
      %v2268 = vsel %vm2236, 65537, 0
      %vm2269 = vcmask 1040384
      %vm2270 = vcmask 1044484
      %vm2271 = vmor %vm2269, %vm2270
      %v2272 = vrot.slane %v2237, 7
      %v2273 = vrot.slane %v2272, 4
      %v2274 = vrot.slane %v2238, 7
      %v2275 = vsel %vm2271, %v2273, %v2274
      %v2276 = vrot.slane %v2274, 4
      %v2277 = vrot.slane %v2239, 7
      %v2278 = vsel %vm2271, %v2276, %v2277
      %v2279 = vrot.slane %v2277, 4
      %v2280 = vrot.slane %v2240, 7
      %v2281 = vsel %vm2271, %v2279, %v2280
      %v2282 = vrot.slane %v2280, 4
      %v2283 = vrot.slane %v2241, 7
      %v2284 = vsel %vm2271, %v2282, %v2283
      %v2285 = vrot.slane %v2283, 4
      %v2286 = vrot.slane %v2242, 7
      %v2287 = vsel %vm2271, %v2285, %v2286
      %v2288 = vrot.slane %v2286, 4
      %v2289 = vrot.slane %v2243, 7
      %v2290 = vsel %vm2271, %v2288, %v2289
      %v2291 = vrot.slane %v2289, 4
      %v2292 = vrot.slane %v2244, 7
      %v2293 = vsel %vm2271, %v2291, %v2292
      %v2294 = vrot.slane %v2292, 4
      %v2295 = vrot.slane %v2245, 7
      %v2296 = vsel %vm2271, %v2294, %v2295
      %v2297 = vrot.slane %v2295, 4
      %v2298 = vrot.slane %v2246, 7
      %v2299 = vsel %vm2271, %v2297, %v2298
      %v2300 = vrot.slane %v2298, 4
      %v2301 = vrot.slane %v2247, 7
      %v2302 = vsel %vm2271, %v2300, %v2301
      %v2303 = vrot.slane %v2301, 4
      %v2304 = vrot.slane %v2248, 7
      %v2305 = vsel %vm2271, %v2303, %v2304
      %v2306 = vrot.slane %v2304, 4
      %v2307 = vrot.slane %v2249, 7
      %v2308 = vsel %vm2271, %v2306, %v2307
      %v2309 = vrot.slane %v2307, 4
      %v2310 = vrot.slane %v2250, 7
      %v2311 = vsel %vm2271, %v2309, %v2310
      %v2312 = vrot.slane %v2310, 4
      %v2313 = vrot.slane %v2251, 7
      %v2314 = vsel %vm2271, %v2312, %v2313
      %v2315 = vrot.slane %v2313, 4
      %v2316 = vrot.slane %v2252, 7
      %v2317 = vsel %vm2271, %v2315, %v2316
      %v2318 = vrot.slane %v2316, 4
      %v2319 = vrot.slane %v2253, 7
      %v2320 = vsel %vm2271, %v2318, %v2319
      %v2321 = vrot.slane %v2319, 4
      %v2322 = vrot.slane %v2254, 7
      %v2323 = vsel %vm2271, %v2321, %v2322
      %v2324 = vrot.slane %v2322, 4
      %v2325 = vrot.slane %v2255, 7
      %v2326 = vsel %vm2271, %v2324, %v2325
      %v2327 = vrot.slane %v2325, 4
      %v2328 = vrot.slane %v2256, 7
      %v2329 = vsel %vm2271, %v2327, %v2328
      %v2330 = vrot.slane %v2328, 4
      %v2331 = vrot.slane %v2257, 7
      %v2332 = vsel %vm2271, %v2330, %v2331
      %v2333 = vrot.slane %v2331, 4
      %v2334 = vrot.slane %v2258, 7
      %v2335 = vsel %vm2271, %v2333, %v2334
      %v2336 = vrot.slane %v2334, 4
      %v2337 = vrot.slane %v2259, 7
      %v2338 = vsel %vm2271, %v2336, %v2337
      %v2339 = vrot.slane %v2337, 4
      %v2340 = vrot.slane %v2260, 7
      %v2341 = vsel %vm2271, %v2339, %v2340
      %v2342 = vrot.slane %v2340, 4
      %v2343 = vrot.slane %v2261, 7
      %v2344 = vsel %vm2271, %v2342, %v2343
      %v2345 = vrot.slane %v2343, 4
      %v2346 = vrot.slane %v2262, 7
      %v2347 = vsel %vm2271, %v2345, %v2346
      %v2348 = vrot.slane %v2346, 4
      %v2349 = vrot.slane %v2263, 7
      %v2350 = vsel %vm2271, %v2348, %v2349
      %v2351 = vrot.slane %v2349, 4
      %v2352 = vrot.slane %v2264, 7
      %v2353 = vsel %vm2271, %v2351, %v2352
      %v2354 = vrot.slane %v2352, 4
      %v2355 = vrot.slane %v2265, 7
      %v2356 = vsel %vm2271, %v2354, %v2355
      %v2357 = vrot.slane %v2355, 4
      %v2358 = vrot.slane %v2266, 7
      %v2359 = vsel %vm2271, %v2357, %v2358
      %v2360 = vrot.slane %v2358, 4
      %v2361 = vrot.slane %v2267, 7
      %v2362 = vsel %vm2271, %v2360, %v2361
      %v2363 = vrot.slane %v2361, 4
      %v2364 = vrot.slane %v2268, 7
      %v2365 = vsel %vm2271, %v2363, %v2364
      %v2366 = vrot.slane %v2364, 4
      %vm2367 = vcmp.ne.s16.totalorder %v2272, 0
      %vm2368 = vcmp.ne.s16.totalorder %v2275, 0
      %vm2369 = vcmp.ne.s16.totalorder %v2278, 0
      %vm2370 = vcmp.ne.s16.totalorder %v2281, 0
      %vm2371 = vcmp.ne.s16.totalorder %v2284, 0
      %vm2372 = vcmp.ne.s16.totalorder %v2287, 0
      %vm2373 = vcmp.ne.s16.totalorder %v2290, 0
      %vm2374 = vcmp.ne.s16.totalorder %v2293, 0
      %vm2375 = vcmp.ne.s16.totalorder %v2296, 0
      %vm2376 = vcmp.ne.s16.totalorder %v2299, 0
      %vm2377 = vcmp.ne.s16.totalorder %v2302, 0
      %vm2378 = vcmp.ne.s16.totalorder %v2305, 0
      %vm2379 = vcmp.ne.s16.totalorder %v2308, 0
      %vm2380 = vcmp.ne.s16.totalorder %v2311, 0
      %vm2381 = vcmp.ne.s16.totalorder %v2314, 0
      %vm2382 = vcmp.ne.s16.totalorder %v2317, 0
      %vm2383 = vcmp.ne.s16.totalorder %v2320, 0
      %vm2384 = vcmp.ne.s16.totalorder %v2323, 0
      %vm2385 = vcmp.ne.s16.totalorder %v2326, 0
      %vm2386 = vcmp.ne.s16.totalorder %v2329, 0
      %vm2387 = vcmp.ne.s16.totalorder %v2332, 0
      %vm2388 = vcmp.ne.s16.totalorder %v2335, 0
      %vm2389 = vcmp.ne.s16.totalorder %v2338, 0
      %vm2390 = vcmp.ne.s16.totalorder %v2341, 0
      %vm2391 = vcmp.ne.s16.totalorder %v2344, 0
      %vm2392 = vcmp.ne.s16.totalorder %v2347, 0
      %vm2393 = vcmp.ne.s16.totalorder %v2350, 0
      %vm2394 = vcmp.ne.s16.totalorder %v2353, 0
      %vm2395 = vcmp.ne.s16.totalorder %v2356, 0
      %vm2396 = vcmp.ne.s16.totalorder %v2359, 0
      %vm2397 = vcmp.ne.s16.totalorder %v2362, 0
      %vm2398 = vcmp.ne.s16.totalorder %v2365, 0
      %vm2399 = vcmp.ne.s16.totalorder %v2366, 0
      %v2400 = vsel %vm2367, 0, %v2140
      %v2401 = vsel %vm2368, 0, %v1257
      %v2402 = vsel %vm2369, 0, %v1258
      %v2403 = vsel %vm2370, 0, %v1259
      %v2404 = vsel %vm2371, 0, %v1260
      %v2405 = vsel %vm2372, 0, %v1261
      %v2406 = vsel %vm2373, 0, %v1262
      %v2407 = vsel %vm2374, 0, %v1263
      %v2408 = vsel %vm2375, 0, %v1264
      %v2409 = vsel %vm2376, 0, %v1265
      %v2410 = vsel %vm2377, 0, %v1266
      %v2411 = vsel %vm2378, 0, %v1267
      %v2412 = vsel %vm2379, 0, %v1268
      %v2413 = vsel %vm2380, 0, %v1269
      %v2414 = vsel %vm2381, 0, %v1270
      %v2415 = vsel %vm2382, 0, %v1271
      %v2416 = vsel %vm2383, 0, %v1272
      %v2417 = vsel %vm2384, 0, %v1273
      %v2418 = vsel %vm2385, 0, %v1274
      %v2419 = vsel %vm2386, 0, %v1275
      %v2420 = vsel %vm2387, 0, %v1276
      %v2421 = vsel %vm2388, 0, %v1277
      %v2422 = vsel %vm2389, 0, %v1278
      %v2423 = vsel %vm2390, 0, %v1279
      %v2424 = vsel %vm2391, 0, %v1280
      %v2425 = vsel %vm2392, 0, %v1281
      %v2426 = vsel %vm2393, 0, %v1282
      %v2427 = vsel %vm2394, 0, %v1283
      %v2428 = vsel %vm2395, 0, %v1284
      %v2429 = vsel %vm2396, 0, %v1285
      %v2430 = vsel %vm2397, 0, %v1286
      %v2431 = vsel %vm2398, 0, %v1287
      %v2432 = vsel %vm2399, 0, %v1417
      %s2433 = scalar_lea.vmem %s3, 8
      %v2434 = vld [vmem:[%s2433] sm:$0xf]
      %v2468 = vunpack.c.l.b16 %v2400
      %v2469 = vunpack.c.l.b16 %v2401
      %v2470 = vunpack.c.l.b16 %v2402
      %v2471 = vunpack.c.l.b16 %v2403
      %v2472 = vunpack.c.l.b16 %v2404
      %v2473 = vunpack.c.l.b16 %v2405
      %v2474 = vunpack.c.l.b16 %v2406
      %v2475 = vunpack.c.l.b16 %v2407
      %v2476 = vunpack.c.l.b16 %v2408
      %v2477 = vunpack.c.l.b16 %v2409
      %v2478 = vunpack.c.l.b16 %v2410
      %v2479 = vunpack.c.l.b16 %v2411
      %v2480 = vunpack.c.l.b16 %v2412
      %v2481 = vunpack.c.l.b16 %v2413
      %v2482 = vunpack.c.l.b16 %v2414
      %v2483 = vunpack.c.l.b16 %v2415
      %v2484 = vunpack.c.l.b16 %v2416
      %v2485 = vunpack.c.l.b16 %v2417
      %v2486 = vunpack.c.l.b16 %v2418
      %v2487 = vunpack.c.l.b16 %v2419
      %v2488 = vunpack.c.l.b16 %v2420
      %v2489 = vunpack.c.l.b16 %v2421
      %v2490 = vunpack.c.l.b16 %v2422
      %v2491 = vunpack.c.l.b16 %v2423
      %v2492 = vunpack.c.l.b16 %v2424
      %v2493 = vunpack.c.l.b16 %v2425
      %v2494 = vunpack.c.l.b16 %v2426
      %v2495 = vunpack.c.l.b16 %v2427
      %v2496 = vunpack.c.l.b16 %v2428
      %v2497 = vunpack.c.l.b16 %v2429
      %v2498 = vunpack.c.l.b16 %v2430
      %v2499 = vunpack.c.l.b16 %v2431
      %v2500 = vunpack.c.l.b16 %v2432
      %v2501 = vpack.c.b16 %v2469, %v2468
      %v2502 = vpack.c.b16 %v2471, %v2470
      %v2503 = vpack.c.b16 %v2473, %v2472
      %v2504 = vpack.c.b16 %v2475, %v2474
      %v2505 = vpack.c.b16 %v2477, %v2476
      %v2506 = vpack.c.b16 %v2479, %v2478
      %v2507 = vpack.c.b16 %v2481, %v2480
      %v2508 = vpack.c.b16 %v2483, %v2482
      %v2509 = vpack.c.b16 %v2485, %v2484
      %v2510 = vpack.c.b16 %v2487, %v2486
      %v2511 = vpack.c.b16 %v2489, %v2488
      %v2512 = vpack.c.b16 %v2491, %v2490
      %v2513 = vpack.c.b16 %v2493, %v2492
      %v2514 = vpack.c.b16 %v2495, %v2494
      %v2515 = vpack.c.b16 %v2497, %v2496
      %v2516 = vpack.c.b16 %v2499, %v2498
      %v2517 = vpack.c.b16 %v2500, %v2500
      %vm2518 = vcmask 1046528
      %v2519 = vrot.slane %v2501, 1
      %v2520 = vrot.slane %v2502, 1
      %v2521 = vsel %vm2518, %v2519, %v2520
      %v2522 = vrot.slane %v2503, 1
      %v2523 = vsel %vm2518, %v2520, %v2522
      %v2524 = vrot.slane %v2504, 1
      %v2525 = vsel %vm2518, %v2522, %v2524
      %v2526 = vrot.slane %v2505, 1
      %v2527 = vsel %vm2518, %v2524, %v2526
      %v2528 = vrot.slane %v2506, 1
      %v2529 = vsel %vm2518, %v2526, %v2528
      %v2530 = vrot.slane %v2507, 1
      %v2531 = vsel %vm2518, %v2528, %v2530
      %v2532 = vrot.slane %v2508, 1
      %v2533 = vsel %vm2518, %v2530, %v2532
      %v2534 = vrot.slane %v2509, 1
      %v2535 = vsel %vm2518, %v2532, %v2534
      %v2536 = vrot.slane %v2510, 1
      %v2537 = vsel %vm2518, %v2534, %v2536
      %v2538 = vrot.slane %v2511, 1
      %v2539 = vsel %vm2518, %v2536, %v2538
      %v2540 = vrot.slane %v2512, 1
      %v2541 = vsel %vm2518, %v2538, %v2540
      %v2542 = vrot.slane %v2513, 1
      %v2543 = vsel %vm2518, %v2540, %v2542
      %v2544 = vrot.slane %v2514, 1
      %v2545 = vsel %vm2518, %v2542, %v2544
      %v2546 = vrot.slane %v2515, 1
      %v2547 = vsel %vm2518, %v2544, %v2546
      %v2548 = vrot.slane %v2516, 1
      %v2549 = vsel %vm2518, %v2546, %v2548
      %v2550 = vrot.slane %v2517, 1
      %v2551 = vsel %vm2518, %v2548, %v2550
      %v2553 = vsel %vm368, %v2521, 0
      %v2556 = vsel %vm368, %v2523, 0
      %v2559 = vsel %vm368, %v2525, 0
      %v2562 = vsel %vm368, %v2527, 0
      %v2565 = vsel %vm368, %v2529, 0
      %v2568 = vsel %vm368, %v2531, 0
      %v2571 = vsel %vm368, %v2533, 0
      %v2574 = vsel %vm368, %v2535, 0
      %v2577 = vsel %vm368, %v2537, 0
      %v2580 = vsel %vm368, %v2539, 0
      %v2583 = vsel %vm368, %v2541, 0
      %v2586 = vsel %vm368, %v2543, 0
      %v2589 = vsel %vm368, %v2545, 0
      %v2592 = vsel %vm368, %v2547, 0
      %v2595 = vsel %vm368, %v2549, 0
      %v2598 = vsel %vm368, %v2551, 0
      %v2601 = vsel %vm417, %v2434, 0
      %2603 = vmatprep.subr.bf16.mxu0 0
      %2604 = vmatpush1.bf16.msra.mxu0 %v2601
      %2605 = vmatprep.subr.bf16.mxu0 0
      %2606 = vmatpush1.bf16.msra.mxu0 0
      %2607 = vmatprep.subr.bf16.mxu0 0
      %2608 = vmatpush1.bf16.msra.mxu0 0
      %2609 = vmatprep.subr.bf16.mxu0 0
      %2610 = vmatpush1.bf16.msra.mxu0 0
      %2611 = vmatprep.subr.bf16.mxu0 0
      %2612 = vmatpush1.bf16.msra.mxu0 0
      %2613 = vmatprep.subr.bf16.mxu0 0
      %2614 = vmatpush1.bf16.msra.mxu0 0
      %2615 = vmatprep.subr.bf16.mxu0 0
      %2616 = vmatpush1.bf16.msra.mxu0 0
      %2617 = vmatprep.subr.bf16.mxu0 0
      %2618 = vmatpush1.bf16.msra.mxu0 0
      %2619 = vmatprep.subr.bf16.mxu0 0
      %2620 = vmatpush1.bf16.msra.mxu0 0
      %2621 = vmatprep.subr.bf16.mxu0 0
      %2622 = vmatpush1.bf16.msra.mxu0 0
      %2623 = vmatprep.subr.bf16.mxu0 0
      %2624 = vmatpush1.bf16.msra.mxu0 0
      %2625 = vmatprep.subr.bf16.mxu0 0
      %2626 = vmatpush1.bf16.msra.mxu0 0
      %2627 = vmatprep.subr.bf16.mxu0 0
      %2628 = vmatpush1.bf16.msra.mxu0 0
      %2629 = vmatprep.subr.bf16.mxu0 0
      %2630 = vmatpush1.bf16.msra.mxu0 0
      %2631 = vmatprep.subr.bf16.mxu0 0
      %2632 = vmatpush1.bf16.msra.mxu0 0
      %2633 = vmatprep.subr.bf16.mxu0 0
      %2634 = vmatpush1.bf16.msra.mxu0 0
      %2635 = vmatprep.mubr.bf16.mxu0 0
      %2636 = vmatmul.mubr.bf16.gmra.mrb[0].mxu0 %v2553
      %v2637 = vpop.f32.mrb[0].mxu0
      %v2638 = vadd.f32 0.0, %v2637
      %v2639 = vpop.f32.mrb[0].mxu0
      %v2640 = vpop.f32.mrb[0].mxu0
      %v2641 = vadd.f32 0.0, %v2640
      %v2642 = vpop.f32.mrb[0].mxu0
      %2643 = vmatprep.mubr.bf16.mxu0 0
      %2644 = vmatmul.mubr.bf16.gmra.mrb[0].mxu0 %v2556
      %v2645 = vpop.f32.mrb[0].mxu0
      %v2646 = vadd.f32 0.0, %v2645
      %v2647 = vpop.f32.mrb[0].mxu0
      %v2648 = vpop.f32.mrb[0].mxu0
      %v2649 = vadd.f32 0.0, %v2648
      %v2650 = vpop.f32.mrb[0].mxu0
      %2651 = vmatprep.mubr.bf16.mxu0 0
      %2652 = vmatmul.mubr.bf16.gmra.mrb[0].mxu0 %v2559
      %v2653 = vpop.f32.mrb[0].mxu0
      %v2654 = vadd.f32 0.0, %v2653
      %v2655 = vpop.f32.mrb[0].mxu0
      %v2656 = vpop.f32.mrb[0].mxu0
      %v2657 = vadd.f32 0.0, %v2656
      %v2658 = vpop.f32.mrb[0].mxu0
      %2659 = vmatprep.mubr.bf16.mxu0 0
      %2660 = vmatmul.mubr.bf16.gmra.mrb[0].mxu0 %v2562
      %v2661 = vpop.f32.mrb[0].mxu0
      %v2662 = vadd.f32 0.0, %v2661
      %v2663 = vpop.f32.mrb[0].mxu0
      %v2664 = vpop.f32.mrb[0].mxu0
      %v2665 = vadd.f32 0.0, %v2664
      %v2666 = vpop.f32.mrb[0].mxu0
      %2667 = vmatprep.mubr.bf16.mxu0 0
      %2668 = vmatmul.mubr.bf16.gmra.mrb[0].mxu0 %v2565
      %v2669 = vpop.f32.mrb[0].mxu0
      %v2670 = vadd.f32 0.0, %v2669
      %v2671 = vpop.f32.mrb[0].mxu0
      %v2672 = vpop.f32.mrb[0].mxu0
      %v2673 = vadd.f32 0.0, %v2672
      %v2674 = vpop.f32.mrb[0].mxu0
      %2675 = vmatprep.mubr.bf16.mxu0 0
      %2676 = vmatmul.mubr.bf16.gmra.mrb[0].mxu0 %v2568
      %v2677 = vpop.f32.mrb[0].mxu0
      %v2678 = vadd.f32 0.0, %v2677
      %v2679 = vpop.f32.mrb[0].mxu0
      %v2680 = vpop.f32.mrb[0].mxu0
      %v2681 = vadd.f32 0.0, %v2680
      %v2682 = vpop.f32.mrb[0].mxu0
      %2683 = vmatprep.mubr.bf16.mxu0 0
      %2684 = vmatmul.mubr.bf16.gmra.mrb[0].mxu0 %v2571
      %v2685 = vpop.f32.mrb[0].mxu0
      %v2686 = vadd.f32 0.0, %v2685
      %v2687 = vpop.f32.mrb[0].mxu0
      %v2688 = vpop.f32.mrb[0].mxu0
      %v2689 = vadd.f32 0.0, %v2688
      %v2690 = vpop.f32.mrb[0].mxu0
      %2691 = vmatprep.mubr.bf16.mxu0 0
      %2692 = vmatmul.mubr.bf16.gmra.mrb[0].mxu0 %v2574
      %v2693 = vpop.f32.mrb[0].mxu0
      %v2694 = vadd.f32 0.0, %v2693
      %v2695 = vpop.f32.mrb[0].mxu0
      %v2696 = vpop.f32.mrb[0].mxu0
      %v2697 = vadd.f32 0.0, %v2696
      %v2698 = vpop.f32.mrb[0].mxu0
      %2699 = vmatprep.mubr.bf16.mxu0 0
      %2700 = vmatmul.mubr.bf16.gmra.mrb[0].mxu0 %v2577
      %v2701 = vpop.f32.mrb[0].mxu0
      %v2702 = vadd.f32 0.0, %v2701
      %v2703 = vpop.f32.mrb[0].mxu0
      %v2704 = vpop.f32.mrb[0].mxu0
      %v2705 = vadd.f32 0.0, %v2704
      %v2706 = vpop.f32.mrb[0].mxu0
      %2707 = vmatprep.mubr.bf16.mxu0 0
      %2708 = vmatmul.mubr.bf16.gmra.mrb[0].mxu0 %v2580
      %v2709 = vpop.f32.mrb[0].mxu0
      %v2710 = vadd.f32 0.0, %v2709
      %v2711 = vpop.f32.mrb[0].mxu0
      %v2712 = vpop.f32.mrb[0].mxu0
      %v2713 = vadd.f32 0.0, %v2712
      %v2714 = vpop.f32.mrb[0].mxu0
      %2715 = vmatprep.mubr.bf16.mxu0 0
      %2716 = vmatmul.mubr.bf16.gmra.mrb[0].mxu0 %v2583
      %v2717 = vpop.f32.mrb[0].mxu0
      %v2718 = vadd.f32 0.0, %v2717
      %v2719 = vpop.f32.mrb[0].mxu0
      %v2720 = vpop.f32.mrb[0].mxu0
      %v2721 = vadd.f32 0.0, %v2720
      %v2722 = vpop.f32.mrb[0].mxu0
      %2723 = vmatprep.mubr.bf16.mxu0 0
      %2724 = vmatmul.mubr.bf16.gmra.mrb[0].mxu0 %v2586
      %v2725 = vpop.f32.mrb[0].mxu0
      %v2726 = vadd.f32 0.0, %v2725
      %v2727 = vpop.f32.mrb[0].mxu0
      %v2728 = vpop.f32.mrb[0].mxu0
      %v2729 = vadd.f32 0.0, %v2728
      %v2730 = vpop.f32.mrb[0].mxu0
      %2731 = vmatprep.mubr.bf16.mxu0 0
      %2732 = vmatmul.mubr.bf16.gmra.mrb[0].mxu0 %v2589
      %v2733 = vpop.f32.mrb[0].mxu0
      %v2734 = vadd.f32 0.0, %v2733
      %v2735 = vpop.f32.mrb[0].mxu0
      %v2736 = vpop.f32.mrb[0].mxu0
      %v2737 = vadd.f32 0.0, %v2736
      %v2738 = vpop.f32.mrb[0].mxu0
      %2739 = vmatprep.mubr.bf16.mxu0 0
      %2740 = vmatmul.mubr.bf16.gmra.mrb[0].mxu0 %v2592
      %v2741 = vpop.f32.mrb[0].mxu0
      %v2742 = vadd.f32 0.0, %v2741
      %v2743 = vpop.f32.mrb[0].mxu0
      %v2744 = vpop.f32.mrb[0].mxu0
      %v2745 = vadd.f32 0.0, %v2744
      %v2746 = vpop.f32.mrb[0].mxu0
      %2747 = vmatprep.mubr.bf16.mxu0 0
      %2748 = vmatmul.mubr.bf16.gmra.mrb[0].mxu0 %v2595
      %v2749 = vpop.f32.mrb[0].mxu0
      %v2750 = vadd.f32 0.0, %v2749
      %v2751 = vpop.f32.mrb[0].mxu0
      %v2752 = vpop.f32.mrb[0].mxu0
      %v2753 = vadd.f32 0.0, %v2752
      %v2754 = vpop.f32.mrb[0].mxu0
      %2755 = vmatprep.mubr.bf16.mxu0 0
      %2756 = vmatmul.mubr.bf16.gmra.mrb[0].mxu0 %v2598
      %v2757 = vpop.f32.mrb[0].mxu0
      %v2758 = vadd.f32 0.0, %v2757
      %v2759 = vpop.f32.mrb[0].mxu0
      %v2760 = vpop.f32.mrb[0].mxu0
      %v2761 = vadd.f32 0.0, %v2760
      %v2762 = vpop.f32.mrb[0].mxu0
      %2763 = vdwg.mxu0
      %v2764 = vadd.f32 %v2014, %v2638
      %v2765 = vadd.f32 %v2017, %v2641
      %v2766 = vadd.f32 %v2022, %v2646
      %v2767 = vadd.f32 %v2025, %v2649
      %v2768 = vadd.f32 %v2030, %v2654
      %v2769 = vadd.f32 %v2033, %v2657
      %v2770 = vadd.f32 %v2038, %v2662
      %v2771 = vadd.f32 %v2041, %v2665
      %v2772 = vadd.f32 %v2046, %v2670
      %v2773 = vadd.f32 %v2049, %v2673
      %v2774 = vadd.f32 %v2054, %v2678
      %v2775 = vadd.f32 %v2057, %v2681
      %v2776 = vadd.f32 %v2062, %v2686
      %v2777 = vadd.f32 %v2065, %v2689
      %v2778 = vadd.f32 %v2070, %v2694
      %v2779 = vadd.f32 %v2073, %v2697
      %v2780 = vadd.f32 %v2078, %v2702
      %v2781 = vadd.f32 %v2081, %v2705
      %v2782 = vadd.f32 %v2086, %v2710
      %v2783 = vadd.f32 %v2089, %v2713
      %v2784 = vadd.f32 %v2094, %v2718
      %v2785 = vadd.f32 %v2097, %v2721
      %v2786 = vadd.f32 %v2102, %v2726
      %v2787 = vadd.f32 %v2105, %v2729
      %v2788 = vadd.f32 %v2110, %v2734
      %v2789 = vadd.f32 %v2113, %v2737
      %v2790 = vadd.f32 %v2118, %v2742
      %v2791 = vadd.f32 %v2121, %v2745
      %v2792 = vadd.f32 %v2126, %v2750
      %v2793 = vadd.f32 %v2129, %v2753
      %v2794 = vadd.f32 %v2134, %v2758
      %v2795 = vadd.f32 %v2137, %v2761
      %v2796 = vld [vmem:[%s239 + $0x8] sm:$0xf]
      %v2797 = vld [vmem:[%s239 + $0xc] sm:$0xf]
      %v2798 = vld [vmem:[%s239 + $0x10] sm:$0xf]
      %v2799 = vld [vmem:[%s239 + $0x14] sm:$0xf]
      %v2800 = vld [vmem:[%s239 + $0x18] sm:$0xf]
      %v2801 = vld [vmem:[%s239 + $0x1c] sm:$0xf]
      %v2802 = vld [vmem:[%s239 + $0x20] sm:$0xf]
      %v2803 = vld [vmem:[%s239 + $0x24] sm:$0xf]
      %v2804 = vld [vmem:[%s239 + $0x28] sm:$0xf]
      %v2805 = vld [vmem:[%s239 + $0x2c] sm:$0xf]
      %v2806 = vld [vmem:[%s239 + $0x30] sm:$0xf]
      %v2807 = vld [vmem:[%s239 + $0x34] sm:$0xf]
      %v2808 = vld [vmem:[%s239 + $0x38] sm:$0xf]
      %v2809 = vld [vmem:[%s239 + $0x3c] sm:$0xf]
      %v2810 = vld [vmem:[%s239 + $0x40] sm:$0xf]
      %v2811 = vld [vmem:[%s239 + $0x44] sm:$0xf]
      %v2812 = vld [vmem:[%s239 + $0x48] sm:$0xf]
      %v2813 = vld [vmem:[%s239 + $0x4c] sm:$0xf]
      %v2814 = vld [vmem:[%s239 + $0x50] sm:$0xf]
      %v2815 = vld [vmem:[%s239 + $0x54] sm:$0xf]
      %v2816 = vld [vmem:[%s239 + $0x58] sm:$0xf]
      %v2817 = vld [vmem:[%s239 + $0x5c] sm:$0xf]
      %v2818 = vld [vmem:[%s239 + $0x60] sm:$0xf]
      %v2819 = vld [vmem:[%s239 + $0x64] sm:$0xf]
      %v2820 = vld [vmem:[%s239 + $0x68] sm:$0xf]
      %v2821 = vld [vmem:[%s239 + $0x6c] sm:$0xf]
      %v2822 = vld [vmem:[%s239 + $0x70] sm:$0xf]
      %v2823 = vld [vmem:[%s239 + $0x74] sm:$0xf]
      %v2824 = vld [vmem:[%s239 + $0x78] sm:$0xf]
      %v2825 = vld [vmem:[%s239 + $0x7c] sm:$0xf]
      %v2826 = vld [vmem:[%s239 + $0x80] sm:$0xf]
      %v2827 = vld [vmem:[%s239 + $0x84] sm:$0xf]
      %v2828 = vsel %vm1352, 0, %v2796
      %v2829 = vsel %vm1353, 0, %v2797
      %v2830 = vsel %vm1354, 0, %v2798
      %v2831 = vsel %vm1355, 0, %v2799
      %v2832 = vsel %vm1356, 0, %v2800
      %v2833 = vsel %vm1357, 0, %v2801
      %v2834 = vsel %vm1358, 0, %v2802
      %v2835 = vsel %vm1359, 0, %v2803
      %v2836 = vsel %vm1360, 0, %v2804
      %v2837 = vsel %vm1361, 0, %v2805
      %v2838 = vsel %vm1362, 0, %v2806
      %v2839 = vsel %vm1363, 0, %v2807
      %v2840 = vsel %vm1364, 0, %v2808
      %v2841 = vsel %vm1365, 0, %v2809
      %v2842 = vsel %vm1366, 0, %v2810
      %v2843 = vsel %vm1367, 0, %v2811
      %v2844 = vsel %vm1368, 0, %v2812
      %v2845 = vsel %vm1369, 0, %v2813
      %v2846 = vsel %vm1370, 0, %v2814
      %v2847 = vsel %vm1371, 0, %v2815
      %v2848 = vsel %vm1372, 0, %v2816
      %v2849 = vsel %vm1373, 0, %v2817
      %v2850 = vsel %vm1374, 0, %v2818
      %v2851 = vsel %vm1375, 0, %v2819
      %v2852 = vsel %vm1376, 0, %v2820
      %v2853 = vsel %vm1377, 0, %v2821
      %v2854 = vsel %vm1378, 0, %v2822
      %v2855 = vsel %vm1379, 0, %v2823
      %v2856 = vsel %vm1380, 0, %v2824
      %v2857 = vsel %vm1381, 0, %v2825
      %v2858 = vsel %vm1382, 0, %v2826
      %v2859 = vsel %vm1383, 0, %v2827
      %s2860 = scalar_lea.vmem %s3, 12
      %v2861 = vld [vmem:[%s2860] sm:$0xf]
      %v2894 = vunpack.c.l.b16 %v2828
      %v2895 = vunpack.c.l.b16 %v2829
      %v2896 = vunpack.c.l.b16 %v2830
      %v2897 = vunpack.c.l.b16 %v2831
      %v2898 = vunpack.c.l.b16 %v2832
      %v2899 = vunpack.c.l.b16 %v2833
      %v2900 = vunpack.c.l.b16 %v2834
      %v2901 = vunpack.c.l.b16 %v2835
      %v2902 = vunpack.c.l.b16 %v2836
      %v2903 = vunpack.c.l.b16 %v2837
      %v2904 = vunpack.c.l.b16 %v2838
      %v2905 = vunpack.c.l.b16 %v2839
      %v2906 = vunpack.c.l.b16 %v2840
      %v2907 = vunpack.c.l.b16 %v2841
      %v2908 = vunpack.c.l.b16 %v2842
      %v2909 = vunpack.c.l.b16 %v2843
      %v2910 = vunpack.c.l.b16 %v2844
      %v2911 = vunpack.c.l.b16 %v2845
      %v2912 = vunpack.c.l.b16 %v2846
      %v2913 = vunpack.c.l.b16 %v2847
      %v2914 = vunpack.c.l.b16 %v2848
      %v2915 = vunpack.c.l.b16 %v2849
      %v2916 = vunpack.c.l.b16 %v2850
      %v2917 = vunpack.c.l.b16 %v2851
      %v2918 = vunpack.c.l.b16 %v2852
      %v2919 = vunpack.c.l.b16 %v2853
      %v2920 = vunpack.c.l.b16 %v2854
      %v2921 = vunpack.c.l.b16 %v2855
      %v2922 = vunpack.c.l.b16 %v2856
      %v2923 = vunpack.c.l.b16 %v2857
      %v2924 = vunpack.c.l.b16 %v2858
      %v2925 = vunpack.c.l.b16 %v2859
      %v2926 = vpack.c.b16 %v2895, %v2894
      %v2927 = vpack.c.b16 %v2897, %v2896
      %v2928 = vpack.c.b16 %v2899, %v2898
      %v2929 = vpack.c.b16 %v2901, %v2900
      %v2930 = vpack.c.b16 %v2903, %v2902
      %v2931 = vpack.c.b16 %v2905, %v2904
      %v2932 = vpack.c.b16 %v2907, %v2906
      %v2933 = vpack.c.b16 %v2909, %v2908
      %v2934 = vpack.c.b16 %v2911, %v2910
      %v2935 = vpack.c.b16 %v2913, %v2912
      %v2936 = vpack.c.b16 %v2915, %v2914
      %v2937 = vpack.c.b16 %v2917, %v2916
      %v2938 = vpack.c.b16 %v2919, %v2918
      %v2939 = vpack.c.b16 %v2921, %v2920
      %v2940 = vpack.c.b16 %v2923, %v2922
      %v2941 = vpack.c.b16 %v2925, %v2924
      %v2943 = vsel %vm368, %v2926, 0
      %v2946 = vsel %vm368, %v2927, 0
      %v2949 = vsel %vm368, %v2928, 0
      %v2952 = vsel %vm368, %v2929, 0
      %v2955 = vsel %vm368, %v2930, 0
      %v2958 = vsel %vm368, %v2931, 0
      %v2961 = vsel %vm368, %v2932, 0
      %v2964 = vsel %vm368, %v2933, 0
      %v2967 = vsel %vm368, %v2934, 0
      %v2970 = vsel %vm368, %v2935, 0
      %v2973 = vsel %vm368, %v2936, 0
      %v2976 = vsel %vm368, %v2937, 0
      %v2979 = vsel %vm368, %v2938, 0
      %v2982 = vsel %vm368, %v2939, 0
      %v2985 = vsel %vm368, %v2940, 0
      %v2988 = vsel %vm368, %v2941, 0
      %v2991 = vsel %vm417, %v2861, 0
      %2993 = vmatprep.subr.bf16.mxu0 0
      %2994 = vmatpush1.bf16.msra.mxu0 %v2991
      %2995 = vmatprep.subr.bf16.mxu0 0
      %2996 = vmatpush1.bf16.msra.mxu0 0
      %2997 = vmatprep.subr.bf16.mxu0 0
      %2998 = vmatpush1.bf16.msra.mxu0 0
      %2999 = vmatprep.subr.bf16.mxu0 0
      %3000 = vmatpush1.bf16.msra.mxu0 0
      %3001 = vmatprep.subr.bf16.mxu0 0
      %3002 = vmatpush1.bf16.msra.mxu0 0
      %3003 = vmatprep.subr.bf16.mxu0 0
      %3004 = vmatpush1.bf16.msra.mxu0 0
      %3005 = vmatprep.subr.bf16.mxu0 0
      %3006 = vmatpush1.bf16.msra.mxu0 0
      %3007 = vmatprep.subr.bf16.mxu0 0
      %3008 = vmatpush1.bf16.msra.mxu0 0
      %3009 = vmatprep.subr.bf16.mxu0 0
      %3010 = vmatpush1.bf16.msra.mxu0 0
      %3011 = vmatprep.subr.bf16.mxu0 0
      %3012 = vmatpush1.bf16.msra.mxu0 0
      %3013 = vmatprep.subr.bf16.mxu0 0
      %3014 = vmatpush1.bf16.msra.mxu0 0
      %3015 = vmatprep.subr.bf16.mxu0 0
      %3016 = vmatpush1.bf16.msra.mxu0 0
      %3017 = vmatprep.subr.bf16.mxu0 0
      %3018 = vmatpush1.bf16.msra.mxu0 0
      %3019 = vmatprep.subr.bf16.mxu0 0
      %3020 = vmatpush1.bf16.msra.mxu0 0
      %3021 = vmatprep.subr.bf16.mxu0 0
      %3022 = vmatpush1.bf16.msra.mxu0 0
      %3023 = vmatprep.subr.bf16.mxu0 0
      %3024 = vmatpush1.bf16.msra.mxu0 0
      %3025 = vmatprep.mubr.bf16.mxu0 0
      %3026 = vmatmul.mubr.bf16.gmra.mrb[0].mxu0 %v2943
      %v3027 = vpop.f32.mrb[0].mxu0
      %v3028 = vadd.f32 0.0, %v3027
      %v3029 = vpop.f32.mrb[0].mxu0
      %v3030 = vpop.f32.mrb[0].mxu0
      %v3031 = vadd.f32 0.0, %v3030
      %v3032 = vpop.f32.mrb[0].mxu0
      %3033 = vmatprep.mubr.bf16.mxu0 0
      %3034 = vmatmul.mubr.bf16.gmra.mrb[0].mxu0 %v2946
      %v3035 = vpop.f32.mrb[0].mxu0
      %v3036 = vadd.f32 0.0, %v3035
      %v3037 = vpop.f32.mrb[0].mxu0
      %v3038 = vpop.f32.mrb[0].mxu0
      %v3039 = vadd.f32 0.0, %v3038
      %v3040 = vpop.f32.mrb[0].mxu0
      %3041 = vmatprep.mubr.bf16.mxu0 0
      %3042 = vmatmul.mubr.bf16.gmra.mrb[0].mxu0 %v2949
      %v3043 = vpop.f32.mrb[0].mxu0
      %v3044 = vadd.f32 0.0, %v3043
      %v3045 = vpop.f32.mrb[0].mxu0
      %v3046 = vpop.f32.mrb[0].mxu0
      %v3047 = vadd.f32 0.0, %v3046
      %v3048 = vpop.f32.mrb[0].mxu0
      %3049 = vmatprep.mubr.bf16.mxu0 0
      %3050 = vmatmul.mubr.bf16.gmra.mrb[0].mxu0 %v2952
      %v3051 = vpop.f32.mrb[0].mxu0
      %v3052 = vadd.f32 0.0, %v3051
      %v3053 = vpop.f32.mrb[0].mxu0
      %v3054 = vpop.f32.mrb[0].mxu0
      %v3055 = vadd.f32 0.0, %v3054
      %v3056 = vpop.f32.mrb[0].mxu0
      %3057 = vmatprep.mubr.bf16.mxu0 0
      %3058 = vmatmul.mubr.bf16.gmra.mrb[0].mxu0 %v2955
      %v3059 = vpop.f32.mrb[0].mxu0
      %v3060 = vadd.f32 0.0, %v3059
      %v3061 = vpop.f32.mrb[0].mxu0
      %v3062 = vpop.f32.mrb[0].mxu0
      %v3063 = vadd.f32 0.0, %v3062
      %v3064 = vpop.f32.mrb[0].mxu0
      %3065 = vmatprep.mubr.bf16.mxu0 0
      %3066 = vmatmul.mubr.bf16.gmra.mrb[0].mxu0 %v2958
      %v3067 = vpop.f32.mrb[0].mxu0
      %v3068 = vadd.f32 0.0, %v3067
      %v3069 = vpop.f32.mrb[0].mxu0
      %v3070 = vpop.f32.mrb[0].mxu0
      %v3071 = vadd.f32 0.0, %v3070
      %v3072 = vpop.f32.mrb[0].mxu0
      %3073 = vmatprep.mubr.bf16.mxu0 0
      %3074 = vmatmul.mubr.bf16.gmra.mrb[0].mxu0 %v2961
      %v3075 = vpop.f32.mrb[0].mxu0
      %v3076 = vadd.f32 0.0, %v3075
      %v3077 = vpop.f32.mrb[0].mxu0
      %v3078 = vpop.f32.mrb[0].mxu0
      %v3079 = vadd.f32 0.0, %v3078
      %v3080 = vpop.f32.mrb[0].mxu0
      %3081 = vmatprep.mubr.bf16.mxu0 0
      %3082 = vmatmul.mubr.bf16.gmra.mrb[0].mxu0 %v2964
      %v3083 = vpop.f32.mrb[0].mxu0
      %v3084 = vadd.f32 0.0, %v3083
      %v3085 = vpop.f32.mrb[0].mxu0
      %v3086 = vpop.f32.mrb[0].mxu0
      %v3087 = vadd.f32 0.0, %v3086
      %v3088 = vpop.f32.mrb[0].mxu0
      %3089 = vmatprep.mubr.bf16.mxu0 0
      %3090 = vmatmul.mubr.bf16.gmra.mrb[0].mxu0 %v2967
      %v3091 = vpop.f32.mrb[0].mxu0
      %v3092 = vadd.f32 0.0, %v3091
      %v3093 = vpop.f32.mrb[0].mxu0
      %v3094 = vpop.f32.mrb[0].mxu0
      %v3095 = vadd.f32 0.0, %v3094
      %v3096 = vpop.f32.mrb[0].mxu0
      %3097 = vmatprep.mubr.bf16.mxu0 0
      %3098 = vmatmul.mubr.bf16.gmra.mrb[0].mxu0 %v2970
      %v3099 = vpop.f32.mrb[0].mxu0
      %v3100 = vadd.f32 0.0, %v3099
      %v3101 = vpop.f32.mrb[0].mxu0
      %v3102 = vpop.f32.mrb[0].mxu0
      %v3103 = vadd.f32 0.0, %v3102
      %v3104 = vpop.f32.mrb[0].mxu0
      %3105 = vmatprep.mubr.bf16.mxu0 0
      %3106 = vmatmul.mubr.bf16.gmra.mrb[0].mxu0 %v2973
      %v3107 = vpop.f32.mrb[0].mxu0
      %v3108 = vadd.f32 0.0, %v3107
      %v3109 = vpop.f32.mrb[0].mxu0
      %v3110 = vpop.f32.mrb[0].mxu0
      %v3111 = vadd.f32 0.0, %v3110
      %v3112 = vpop.f32.mrb[0].mxu0
      %3113 = vmatprep.mubr.bf16.mxu0 0
      %3114 = vmatmul.mubr.bf16.gmra.mrb[0].mxu0 %v2976
      %v3115 = vpop.f32.mrb[0].mxu0
      %v3116 = vadd.f32 0.0, %v3115
      %v3117 = vpop.f32.mrb[0].mxu0
      %v3118 = vpop.f32.mrb[0].mxu0
      %v3119 = vadd.f32 0.0, %v3118
      %v3120 = vpop.f32.mrb[0].mxu0
      %3121 = vmatprep.mubr.bf16.mxu0 0
      %3122 = vmatmul.mubr.bf16.gmra.mrb[0].mxu0 %v2979
      %v3123 = vpop.f32.mrb[0].mxu0
      %v3124 = vadd.f32 0.0, %v3123
      %v3125 = vpop.f32.mrb[0].mxu0
      %v3126 = vpop.f32.mrb[0].mxu0
      %v3127 = vadd.f32 0.0, %v3126
      %v3128 = vpop.f32.mrb[0].mxu0
      %3129 = vmatprep.mubr.bf16.mxu0 0
      %3130 = vmatmul.mubr.bf16.gmra.mrb[0].mxu0 %v2982
      %v3131 = vpop.f32.mrb[0].mxu0
      %v3132 = vadd.f32 0.0, %v3131
      %v3133 = vpop.f32.mrb[0].mxu0
      %v3134 = vpop.f32.mrb[0].mxu0
      %v3135 = vadd.f32 0.0, %v3134
      %v3136 = vpop.f32.mrb[0].mxu0
      %3137 = vmatprep.mubr.bf16.mxu0 0
      %3138 = vmatmul.mubr.bf16.gmra.mrb[0].mxu0 %v2985
      %v3139 = vpop.f32.mrb[0].mxu0
      %v3140 = vadd.f32 0.0, %v3139
      %v3141 = vpop.f32.mrb[0].mxu0
      %v3142 = vpop.f32.mrb[0].mxu0
      %v3143 = vadd.f32 0.0, %v3142
      %v3144 = vpop.f32.mrb[0].mxu0
      %3145 = vmatprep.mubr.bf16.mxu0 0
      %3146 = vmatmul.mubr.bf16.gmra.mrb[0].mxu0 %v2988
      %v3147 = vpop.f32.mrb[0].mxu0
      %v3148 = vadd.f32 0.0, %v3147
      %v3149 = vpop.f32.mrb[0].mxu0
      %v3150 = vpop.f32.mrb[0].mxu0
      %v3151 = vadd.f32 0.0, %v3150
      %v3152 = vpop.f32.mrb[0].mxu0
      %3153 = vdwg.mxu0
      %v3154 = vadd.f32 %v2764, %v3028
      %v3155 = vadd.f32 %v2765, %v3031
      %v3156 = vadd.f32 %v2766, %v3036
      %v3157 = vadd.f32 %v2767, %v3039
      %v3158 = vadd.f32 %v2768, %v3044
      %v3159 = vadd.f32 %v2769, %v3047
      %v3160 = vadd.f32 %v2770, %v3052
      %v3161 = vadd.f32 %v2771, %v3055
      %v3162 = vadd.f32 %v2772, %v3060
      %v3163 = vadd.f32 %v2773, %v3063
      %v3164 = vadd.f32 %v2774, %v3068
      %v3165 = vadd.f32 %v2775, %v3071
      %v3166 = vadd.f32 %v2776, %v3076
      %v3167 = vadd.f32 %v2777, %v3079
      %v3168 = vadd.f32 %v2778, %v3084
      %v3169 = vadd.f32 %v2779, %v3087
      %v3170 = vadd.f32 %v2780, %v3092
      %v3171 = vadd.f32 %v2781, %v3095
      %v3172 = vadd.f32 %v2782, %v3100
      %v3173 = vadd.f32 %v2783, %v3103
      %v3174 = vadd.f32 %v2784, %v3108
      %v3175 = vadd.f32 %v2785, %v3111
      %v3176 = vadd.f32 %v2786, %v3116
      %v3177 = vadd.f32 %v2787, %v3119
      %v3178 = vadd.f32 %v2788, %v3124
      %v3179 = vadd.f32 %v2789, %v3127
      %v3180 = vadd.f32 %v2790, %v3132
      %v3181 = vadd.f32 %v2791, %v3135
      %v3182 = vadd.f32 %v2792, %v3140
      %v3183 = vadd.f32 %v2793, %v3143
      %v3184 = vadd.f32 %v2794, %v3148
      %v3185 = vadd.f32 %v2795, %v3151
      %v3186 = vld [vmem:[%s239 + $0x8] sm:$0xf]
      %v3187 = vld [vmem:[%s239 + $0xc] sm:$0xf]
      %v3188 = vld [vmem:[%s239 + $0x10] sm:$0xf]
      %v3189 = vld [vmem:[%s239 + $0x14] sm:$0xf]
      %v3190 = vld [vmem:[%s239 + $0x18] sm:$0xf]
      %v3191 = vld [vmem:[%s239 + $0x1c] sm:$0xf]
      %v3192 = vld [vmem:[%s239 + $0x20] sm:$0xf]
      %v3193 = vld [vmem:[%s239 + $0x24] sm:$0xf]
      %v3194 = vld [vmem:[%s239 + $0x28] sm:$0xf]
      %v3195 = vld [vmem:[%s239 + $0x2c] sm:$0xf]
      %v3196 = vld [vmem:[%s239 + $0x30] sm:$0xf]
      %v3197 = vld [vmem:[%s239 + $0x34] sm:$0xf]
      %v3198 = vld [vmem:[%s239 + $0x38] sm:$0xf]
      %v3199 = vld [vmem:[%s239 + $0x3c] sm:$0xf]
      %v3200 = vld [vmem:[%s239 + $0x40] sm:$0xf]
      %v3201 = vld [vmem:[%s239 + $0x44] sm:$0xf]
      %v3202 = vld [vmem:[%s239 + $0x48] sm:$0xf]
      %v3203 = vld [vmem:[%s239 + $0x4c] sm:$0xf]
      %v3204 = vld [vmem:[%s239 + $0x50] sm:$0xf]
      %v3205 = vld [vmem:[%s239 + $0x54] sm:$0xf]
      %v3206 = vld [vmem:[%s239 + $0x58] sm:$0xf]
      %v3207 = vld [vmem:[%s239 + $0x5c] sm:$0xf]
      %v3208 = vld [vmem:[%s239 + $0x60] sm:$0xf]
      %v3209 = vld [vmem:[%s239 + $0x64] sm:$0xf]
      %v3210 = vld [vmem:[%s239 + $0x68] sm:$0xf]
      %v3211 = vld [vmem:[%s239 + $0x6c] sm:$0xf]
      %v3212 = vld [vmem:[%s239 + $0x70] sm:$0xf]
      %v3213 = vld [vmem:[%s239 + $0x74] sm:$0xf]
      %v3214 = vld [vmem:[%s239 + $0x78] sm:$0xf]
      %v3215 = vld [vmem:[%s239 + $0x7c] sm:$0xf]
      %v3216 = vld [vmem:[%s239 + $0x80] sm:$0xf]
      %v3217 = vld [vmem:[%s239 + $0x84] sm:$0xf]
      %v3218 = vld [vmem:[%s239 + $0x88] sm:$0x1]
      %s3219 = scalar_lea.vmem %s3, 16
      %v3220 = vld [vmem:[%s3219] sm:$0xf]
      %v3254 = vunpack.c.l.b16 %v3186
      %v3255 = vunpack.c.l.b16 %v3187
      %v3256 = vunpack.c.l.b16 %v3188
      %v3257 = vunpack.c.l.b16 %v3189
      %v3258 = vunpack.c.l.b16 %v3190
      %v3259 = vunpack.c.l.b16 %v3191
      %v3260 = vunpack.c.l.b16 %v3192
      %v3261 = vunpack.c.l.b16 %v3193
      %v3262 = vunpack.c.l.b16 %v3194
      %v3263 = vunpack.c.l.b16 %v3195
      %v3264 = vunpack.c.l.b16 %v3196
      %v3265 = vunpack.c.l.b16 %v3197
      %v3266 = vunpack.c.l.b16 %v3198
      %v3267 = vunpack.c.l.b16 %v3199
      %v3268 = vunpack.c.l.b16 %v3200
      %v3269 = vunpack.c.l.b16 %v3201
      %v3270 = vunpack.c.l.b16 %v3202
      %v3271 = vunpack.c.l.b16 %v3203
      %v3272 = vunpack.c.l.b16 %v3204
      %v3273 = vunpack.c.l.b16 %v3205
      %v3274 = vunpack.c.l.b16 %v3206
      %v3275 = vunpack.c.l.b16 %v3207
      %v3276 = vunpack.c.l.b16 %v3208
      %v3277 = vunpack.c.l.b16 %v3209
      %v3278 = vunpack.c.l.b16 %v3210
      %v3279 = vunpack.c.l.b16 %v3211
      %v3280 = vunpack.c.l.b16 %v3212
      %v3281 = vunpack.c.l.b16 %v3213
      %v3282 = vunpack.c.l.b16 %v3214
      %v3283 = vunpack.c.l.b16 %v3215
      %v3284 = vunpack.c.l.b16 %v3216
      %v3285 = vunpack.c.l.b16 %v3217
      %v3286 = vunpack.c.l.b16 %v3218
      %v3287 = vpack.c.b16 %v3255, %v3254
      %v3288 = vpack.c.b16 %v3257, %v3256
      %v3289 = vpack.c.b16 %v3259, %v3258
      %v3290 = vpack.c.b16 %v3261, %v3260
      %v3291 = vpack.c.b16 %v3263, %v3262
      %v3292 = vpack.c.b16 %v3265, %v3264
      %v3293 = vpack.c.b16 %v3267, %v3266
      %v3294 = vpack.c.b16 %v3269, %v3268
      %v3295 = vpack.c.b16 %v3271, %v3270
      %v3296 = vpack.c.b16 %v3273, %v3272
      %v3297 = vpack.c.b16 %v3275, %v3274
      %v3298 = vpack.c.b16 %v3277, %v3276
      %v3299 = vpack.c.b16 %v3279, %v3278
      %v3300 = vpack.c.b16 %v3281, %v3280
      %v3301 = vpack.c.b16 %v3283, %v3282
      %v3302 = vpack.c.b16 %v3285, %v3284
      %v3303 = vpack.c.b16 %v3286, %v3286
      %v3305 = vshrl.u32 %v3287, 16
      %v3307 = vshll.u32 %v3287, 16
      %v3309 = vrot.slane %v3307, 1
      %v3310 = vor.u32 %v3305, %v3309
      %v3312 = vshll.u32 %v3288, 16
      %v3314 = vrot.slane %v3312, 1
      %v3315 = vsel %vm1503, %v3310, %v3314
      %v3316 = vshrl.u32 %v3288, 16
      %v3318 = vor.u32 %v3316, %v3314
      %v3320 = vshll.u32 %v3289, 16
      %v3322 = vrot.slane %v3320, 1
      %v3323 = vsel %vm1503, %v3318, %v3322
      %v3324 = vshrl.u32 %v3289, 16
      %v3326 = vor.u32 %v3324, %v3322
      %v3328 = vshll.u32 %v3290, 16
      %v3330 = vrot.slane %v3328, 1
      %v3331 = vsel %vm1503, %v3326, %v3330
      %v3332 = vshrl.u32 %v3290, 16
      %v3334 = vor.u32 %v3332, %v3330
      %v3336 = vshll.u32 %v3291, 16
      %v3338 = vrot.slane %v3336, 1
      %v3339 = vsel %vm1503, %v3334, %v3338
      %v3340 = vshrl.u32 %v3291, 16
      %v3342 = vor.u32 %v3340, %v3338
      %v3344 = vshll.u32 %v3292, 16
      %v3346 = vrot.slane %v3344, 1
      %v3347 = vsel %vm1503, %v3342, %v3346
      %v3348 = vshrl.u32 %v3292, 16
      %v3350 = vor.u32 %v3348, %v3346
      %v3352 = vshll.u32 %v3293, 16
      %v3354 = vrot.slane %v3352, 1
      %v3355 = vsel %vm1503, %v3350, %v3354
      %v3356 = vshrl.u32 %v3293, 16
      %v3358 = vor.u32 %v3356, %v3354
      %v3360 = vshll.u32 %v3294, 16
      %v3362 = vrot.slane %v3360, 1
      %v3363 = vsel %vm1503, %v3358, %v3362
      %v3364 = vshrl.u32 %v3294, 16
      %v3366 = vor.u32 %v3364, %v3362
      %v3368 = vshll.u32 %v3295, 16
      %v3370 = vrot.slane %v3368, 1
      %v3371 = vsel %vm1503, %v3366, %v3370
      %v3372 = vshrl.u32 %v3295, 16
      %v3374 = vor.u32 %v3372, %v3370
      %v3376 = vshll.u32 %v3296, 16
      %v3378 = vrot.slane %v3376, 1
      %v3379 = vsel %vm1503, %v3374, %v3378
      %v3380 = vshrl.u32 %v3296, 16
      %v3382 = vor.u32 %v3380, %v3378
      %v3384 = vshll.u32 %v3297, 16
      %v3386 = vrot.slane %v3384, 1
      %v3387 = vsel %vm1503, %v3382, %v3386
      %v3388 = vshrl.u32 %v3297, 16
      %v3390 = vor.u32 %v3388, %v3386
      %v3392 = vshll.u32 %v3298, 16
      %v3394 = vrot.slane %v3392, 1
      %v3395 = vsel %vm1503, %v3390, %v3394
      %v3396 = vshrl.u32 %v3298, 16
      %v3398 = vor.u32 %v3396, %v3394
      %v3400 = vshll.u32 %v3299, 16
      %v3402 = vrot.slane %v3400, 1
      %v3403 = vsel %vm1503, %v3398, %v3402
      %v3404 = vshrl.u32 %v3299, 16
      %v3406 = vor.u32 %v3404, %v3402
      %v3408 = vshll.u32 %v3300, 16
      %v3410 = vrot.slane %v3408, 1
      %v3411 = vsel %vm1503, %v3406, %v3410
      %v3412 = vshrl.u32 %v3300, 16
      %v3414 = vor.u32 %v3412, %v3410
      %v3416 = vshll.u32 %v3301, 16
      %v3418 = vrot.slane %v3416, 1
      %v3419 = vsel %vm1503, %v3414, %v3418
      %v3420 = vshrl.u32 %v3301, 16
      %v3422 = vor.u32 %v3420, %v3418
      %v3424 = vshll.u32 %v3302, 16
      %v3426 = vrot.slane %v3424, 1
      %v3427 = vsel %vm1503, %v3422, %v3426
      %v3428 = vshrl.u32 %v3302, 16
      %v3430 = vor.u32 %v3428, %v3426
      %v3432 = vshll.u32 %v3303, 16
      %v3434 = vrot.slane %v3432, 1
      %v3435 = vsel %vm1503, %v3430, %v3434
      %v3437 = vsel %vm368, %v3315, 0
      %v3440 = vsel %vm368, %v3323, 0
      %v3443 = vsel %vm368, %v3331, 0
      %v3446 = vsel %vm368, %v3339, 0
      %v3449 = vsel %vm368, %v3347, 0
      %v3452 = vsel %vm368, %v3355, 0
      %v3455 = vsel %vm368, %v3363, 0
      %v3458 = vsel %vm368, %v3371, 0
      %v3461 = vsel %vm368, %v3379, 0
      %v3464 = vsel %vm368, %v3387, 0
      %v3467 = vsel %vm368, %v3395, 0
      %v3470 = vsel %vm368, %v3403, 0
      %v3473 = vsel %vm368, %v3411, 0
      %v3476 = vsel %vm368, %v3419, 0
      %v3479 = vsel %vm368, %v3427, 0
      %v3482 = vsel %vm368, %v3435, 0
      %v3485 = vsel %vm417, %v3220, 0
      %3487 = vmatprep.subr.bf16.mxu0 0
      %3488 = vmatpush1.bf16.msra.mxu0 %v3485
      %3489 = vmatprep.subr.bf16.mxu0 0
      %3490 = vmatpush1.bf16.msra.mxu0 0
      %3491 = vmatprep.subr.bf16.mxu0 0
      %3492 = vmatpush1.bf16.msra.mxu0 0
      %3493 = vmatprep.subr.bf16.mxu0 0
      %3494 = vmatpush1.bf16.msra.mxu0 0
      %3495 = vmatprep.subr.bf16.mxu0 0
      %3496 = vmatpush1.bf16.msra.mxu0 0
      %3497 = vmatprep.subr.bf16.mxu0 0
      %3498 = vmatpush1.bf16.msra.mxu0 0
      %3499 = vmatprep.subr.bf16.mxu0 0
      %3500 = vmatpush1.bf16.msra.mxu0 0
      %3501 = vmatprep.subr.bf16.mxu0 0
      %3502 = vmatpush1.bf16.msra.mxu0 0
      %3503 = vmatprep.subr.bf16.mxu0 0
      %3504 = vmatpush1.bf16.msra.mxu0 0
      %3505 = vmatprep.subr.bf16.mxu0 0
      %3506 = vmatpush1.bf16.msra.mxu0 0
      %3507 = vmatprep.subr.bf16.mxu0 0
      %3508 = vmatpush1.bf16.msra.mxu0 0
      %3509 = vmatprep.subr.bf16.mxu0 0
      %3510 = vmatpush1.bf16.msra.mxu0 0
      %3511 = vmatprep.subr.bf16.mxu0 0
      %3512 = vmatpush1.bf16.msra.mxu0 0
      %3513 = vmatprep.subr.bf16.mxu0 0
      %3514 = vmatpush1.bf16.msra.mxu0 0
      %3515 = vmatprep.subr.bf16.mxu0 0
      %3516 = vmatpush1.bf16.msra.mxu0 0
      %3517 = vmatprep.subr.bf16.mxu0 0
      %3518 = vmatpush1.bf16.msra.mxu0 0
      %3519 = vmatprep.mubr.bf16.mxu0 0
      %3520 = vmatmul.mubr.bf16.gmra.mrb[0].mxu0 %v3437
      %v3521 = vpop.f32.mrb[0].mxu0
      %v3522 = vadd.f32 0.0, %v3521
      %v3523 = vpop.f32.mrb[0].mxu0
      %v3524 = vpop.f32.mrb[0].mxu0
      %v3525 = vadd.f32 0.0, %v3524
      %v3526 = vpop.f32.mrb[0].mxu0
      %3527 = vmatprep.mubr.bf16.mxu0 0
      %3528 = vmatmul.mubr.bf16.gmra.mrb[0].mxu0 %v3440
      %v3529 = vpop.f32.mrb[0].mxu0
      %v3530 = vadd.f32 0.0, %v3529
      %v3531 = vpop.f32.mrb[0].mxu0
      %v3532 = vpop.f32.mrb[0].mxu0
      %v3533 = vadd.f32 0.0, %v3532
      %v3534 = vpop.f32.mrb[0].mxu0
      %3535 = vmatprep.mubr.bf16.mxu0 0
      %3536 = vmatmul.mubr.bf16.gmra.mrb[0].mxu0 %v3443
      %v3537 = vpop.f32.mrb[0].mxu0
      %v3538 = vadd.f32 0.0, %v3537
      %v3539 = vpop.f32.mrb[0].mxu0
      %v3540 = vpop.f32.mrb[0].mxu0
      %v3541 = vadd.f32 0.0, %v3540
      %v3542 = vpop.f32.mrb[0].mxu0
      %3543 = vmatprep.mubr.bf16.mxu0 0
      %3544 = vmatmul.mubr.bf16.gmra.mrb[0].mxu0 %v3446
      %v3545 = vpop.f32.mrb[0].mxu0
      %v3546 = vadd.f32 0.0, %v3545
      %v3547 = vpop.f32.mrb[0].mxu0
      %v3548 = vpop.f32.mrb[0].mxu0
      %v3549 = vadd.f32 0.0, %v3548
      %v3550 = vpop.f32.mrb[0].mxu0
      %3551 = vmatprep.mubr.bf16.mxu0 0
      %3552 = vmatmul.mubr.bf16.gmra.mrb[0].mxu0 %v3449
      %v3553 = vpop.f32.mrb[0].mxu0
      %v3554 = vadd.f32 0.0, %v3553
      %v3555 = vpop.f32.mrb[0].mxu0
      %v3556 = vpop.f32.mrb[0].mxu0
      %v3557 = vadd.f32 0.0, %v3556
      %v3558 = vpop.f32.mrb[0].mxu0
      %3559 = vmatprep.mubr.bf16.mxu0 0
      %3560 = vmatmul.mubr.bf16.gmra.mrb[0].mxu0 %v3452
      %v3561 = vpop.f32.mrb[0].mxu0
      %v3562 = vadd.f32 0.0, %v3561
      %v3563 = vpop.f32.mrb[0].mxu0
      %v3564 = vpop.f32.mrb[0].mxu0
      %v3565 = vadd.f32 0.0, %v3564
      %v3566 = vpop.f32.mrb[0].mxu0
      %3567 = vmatprep.mubr.bf16.mxu0 0
      %3568 = vmatmul.mubr.bf16.gmra.mrb[0].mxu0 %v3455
      %v3569 = vpop.f32.mrb[0].mxu0
      %v3570 = vadd.f32 0.0, %v3569
      %v3571 = vpop.f32.mrb[0].mxu0
      %v3572 = vpop.f32.mrb[0].mxu0
      %v3573 = vadd.f32 0.0, %v3572
      %v3574 = vpop.f32.mrb[0].mxu0
      %3575 = vmatprep.mubr.bf16.mxu0 0
      %3576 = vmatmul.mubr.bf16.gmra.mrb[0].mxu0 %v3458
      %v3577 = vpop.f32.mrb[0].mxu0
      %v3578 = vadd.f32 0.0, %v3577
      %v3579 = vpop.f32.mrb[0].mxu0
      %v3580 = vpop.f32.mrb[0].mxu0
      %v3581 = vadd.f32 0.0, %v3580
      %v3582 = vpop.f32.mrb[0].mxu0
      %3583 = vmatprep.mubr.bf16.mxu0 0
      %3584 = vmatmul.mubr.bf16.gmra.mrb[0].mxu0 %v3461
      %v3585 = vpop.f32.mrb[0].mxu0
      %v3586 = vadd.f32 0.0, %v3585
      %v3587 = vpop.f32.mrb[0].mxu0
      %v3588 = vpop.f32.mrb[0].mxu0
      %v3589 = vadd.f32 0.0, %v3588
      %v3590 = vpop.f32.mrb[0].mxu0
      %3591 = vmatprep.mubr.bf16.mxu0 0
      %3592 = vmatmul.mubr.bf16.gmra.mrb[0].mxu0 %v3464
      %v3593 = vpop.f32.mrb[0].mxu0
      %v3594 = vadd.f32 0.0, %v3593
      %v3595 = vpop.f32.mrb[0].mxu0
      %v3596 = vpop.f32.mrb[0].mxu0
      %v3597 = vadd.f32 0.0, %v3596
      %v3598 = vpop.f32.mrb[0].mxu0
      %3599 = vmatprep.mubr.bf16.mxu0 0
      %3600 = vmatmul.mubr.bf16.gmra.mrb[0].mxu0 %v3467
      %v3601 = vpop.f32.mrb[0].mxu0
      %v3602 = vadd.f32 0.0, %v3601
      %v3603 = vpop.f32.mrb[0].mxu0
      %v3604 = vpop.f32.mrb[0].mxu0
      %v3605 = vadd.f32 0.0, %v3604
      %v3606 = vpop.f32.mrb[0].mxu0
      %3607 = vmatprep.mubr.bf16.mxu0 0
      %3608 = vmatmul.mubr.bf16.gmra.mrb[0].mxu0 %v3470
      %v3609 = vpop.f32.mrb[0].mxu0
      %v3610 = vadd.f32 0.0, %v3609
      %v3611 = vpop.f32.mrb[0].mxu0
      %v3612 = vpop.f32.mrb[0].mxu0
      %v3613 = vadd.f32 0.0, %v3612
      %v3614 = vpop.f32.mrb[0].mxu0
      %3615 = vmatprep.mubr.bf16.mxu0 0
      %3616 = vmatmul.mubr.bf16.gmra.mrb[0].mxu0 %v3473
      %v3617 = vpop.f32.mrb[0].mxu0
      %v3618 = vadd.f32 0.0, %v3617
      %v3619 = vpop.f32.mrb[0].mxu0
      %v3620 = vpop.f32.mrb[0].mxu0
      %v3621 = vadd.f32 0.0, %v3620
      %v3622 = vpop.f32.mrb[0].mxu0
      %3623 = vmatprep.mubr.bf16.mxu0 0
      %3624 = vmatmul.mubr.bf16.gmra.mrb[0].mxu0 %v3476
      %v3625 = vpop.f32.mrb[0].mxu0
      %v3626 = vadd.f32 0.0, %v3625
      %v3627 = vpop.f32.mrb[0].mxu0
      %v3628 = vpop.f32.mrb[0].mxu0
      %v3629 = vadd.f32 0.0, %v3628
      %v3630 = vpop.f32.mrb[0].mxu0
      %3631 = vmatprep.mubr.bf16.mxu0 0
      %3632 = vmatmul.mubr.bf16.gmra.mrb[0].mxu0 %v3479
      %v3633 = vpop.f32.mrb[0].mxu0
      %v3634 = vadd.f32 0.0, %v3633
      %v3635 = vpop.f32.mrb[0].mxu0
      %v3636 = vpop.f32.mrb[0].mxu0
      %v3637 = vadd.f32 0.0, %v3636
      %v3638 = vpop.f32.mrb[0].mxu0
      %3639 = vmatprep.mubr.bf16.mxu0 0
      %3640 = vmatmul.mubr.bf16.gmra.mrb[0].mxu0 %v3482
      %v3641 = vpop.f32.mrb[0].mxu0
      %v3642 = vadd.f32 0.0, %v3641
      %v3643 = vpop.f32.mrb[0].mxu0
      %v3644 = vpop.f32.mrb[0].mxu0
      %v3645 = vadd.f32 0.0, %v3644
      %v3646 = vpop.f32.mrb[0].mxu0
      %3647 = vdwg.mxu0
      %v3648 = vadd.f32 %v3154, %v3522
      %v3649 = vadd.f32 %v3155, %v3525
      %v3650 = vadd.f32 %v3156, %v3530
      %v3651 = vadd.f32 %v3157, %v3533
      %v3652 = vadd.f32 %v3158, %v3538
      %v3653 = vadd.f32 %v3159, %v3541
      %v3654 = vadd.f32 %v3160, %v3546
      %v3655 = vadd.f32 %v3161, %v3549
      %v3656 = vadd.f32 %v3162, %v3554
      %v3657 = vadd.f32 %v3163, %v3557
      %v3658 = vadd.f32 %v3164, %v3562
      %v3659 = vadd.f32 %v3165, %v3565
      %v3660 = vadd.f32 %v3166, %v3570
      %v3661 = vadd.f32 %v3167, %v3573
      %v3662 = vadd.f32 %v3168, %v3578
      %v3663 = vadd.f32 %v3169, %v3581
      %v3664 = vadd.f32 %v3170, %v3586
      %v3665 = vadd.f32 %v3171, %v3589
      %v3666 = vadd.f32 %v3172, %v3594
      %v3667 = vadd.f32 %v3173, %v3597
      %v3668 = vadd.f32 %v3174, %v3602
      %v3669 = vadd.f32 %v3175, %v3605
      %v3670 = vadd.f32 %v3176, %v3610
      %v3671 = vadd.f32 %v3177, %v3613
      %v3672 = vadd.f32 %v3178, %v3618
      %v3673 = vadd.f32 %v3179, %v3621
      %v3674 = vadd.f32 %v3180, %v3626
      %v3675 = vadd.f32 %v3181, %v3629
      %v3676 = vadd.f32 %v3182, %v3634
      %v3677 = vadd.f32 %v3183, %v3637
      %v3678 = vadd.f32 %v3184, %v3642
      %v3679 = vadd.f32 %v3185, %v3645
      %v3680 = vld [vmem:[%s239 + $0x8] sm:$0xe]
      %v3681 = vsel %vm2367, 0, %v3680
      %v3682 = vsel %vm2368, 0, %v3187
      %v3683 = vsel %vm2369, 0, %v3188
      %v3684 = vsel %vm2370, 0, %v3189
      %v3685 = vsel %vm2371, 0, %v3190
      %v3686 = vsel %vm2372, 0, %v3191
      %v3687 = vsel %vm2373, 0, %v3192
      %v3688 = vsel %vm2374, 0, %v3193
      %v3689 = vsel %vm2375, 0, %v3194
      %v3690 = vsel %vm2376, 0, %v3195
      %v3691 = vsel %vm2377, 0, %v3196
      %v3692 = vsel %vm2378, 0, %v3197
      %v3693 = vsel %vm2379, 0, %v3198
      %v3694 = vsel %vm2380, 0, %v3199
      %v3695 = vsel %vm2381, 0, %v3200
      %v3696 = vsel %vm2382, 0, %v3201
      %v3697 = vsel %vm2383, 0, %v3202
      %v3698 = vsel %vm2384, 0, %v3203
      %v3699 = vsel %vm2385, 0, %v3204
      %v3700 = vsel %vm2386, 0, %v3205
      %v3701 = vsel %vm2387, 0, %v3206
      %v3702 = vsel %vm2388, 0, %v3207
      %v3703 = vsel %vm2389, 0, %v3208
      %v3704 = vsel %vm2390, 0, %v3209
      %v3705 = vsel %vm2391, 0, %v3210
      %v3706 = vsel %vm2392, 0, %v3211
      %v3707 = vsel %vm2393, 0, %v3212
      %v3708 = vsel %vm2394, 0, %v3213
      %v3709 = vsel %vm2395, 0, %v3214
      %v3710 = vsel %vm2396, 0, %v3215
      %v3711 = vsel %vm2397, 0, %v3216
      %v3712 = vsel %vm2398, 0, %v3217
      %v3713 = vsel %vm2399, 0, %v3218
      %s3714 = scalar_lea.vmem %s3, 20
      %v3715 = vld [vmem:[%s3714] sm:$0xf]
      %v3749 = vunpack.c.l.b16 %v3681
      %v3750 = vunpack.c.l.b16 %v3682
      %v3751 = vunpack.c.l.b16 %v3683
      %v3752 = vunpack.c.l.b16 %v3684
      %v3753 = vunpack.c.l.b16 %v3685
      %v3754 = vunpack.c.l.b16 %v3686
      %v3755 = vunpack.c.l.b16 %v3687
      %v3756 = vunpack.c.l.b16 %v3688
      %v3757 = vunpack.c.l.b16 %v3689
      %v3758 = vunpack.c.l.b16 %v3690
      %v3759 = vunpack.c.l.b16 %v3691
      %v3760 = vunpack.c.l.b16 %v3692
      %v3761 = vunpack.c.l.b16 %v3693
      %v3762 = vunpack.c.l.b16 %v3694
      %v3763 = vunpack.c.l.b16 %v3695
      %v3764 = vunpack.c.l.b16 %v3696
      %v3765 = vunpack.c.l.b16 %v3697
      %v3766 = vunpack.c.l.b16 %v3698
      %v3767 = vunpack.c.l.b16 %v3699
      %v3768 = vunpack.c.l.b16 %v3700
      %v3769 = vunpack.c.l.b16 %v3701
      %v3770 = vunpack.c.l.b16 %v3702
      %v3771 = vunpack.c.l.b16 %v3703
      %v3772 = vunpack.c.l.b16 %v3704
      %v3773 = vunpack.c.l.b16 %v3705
      %v3774 = vunpack.c.l.b16 %v3706
      %v3775 = vunpack.c.l.b16 %v3707
      %v3776 = vunpack.c.l.b16 %v3708
      %v3777 = vunpack.c.l.b16 %v3709
      %v3778 = vunpack.c.l.b16 %v3710
      %v3779 = vunpack.c.l.b16 %v3711
      %v3780 = vunpack.c.l.b16 %v3712
      %v3781 = vunpack.c.l.b16 %v3713
      %v3782 = vpack.c.b16 %v3750, %v3749
      %v3783 = vpack.c.b16 %v3752, %v3751
      %v3784 = vpack.c.b16 %v3754, %v3753
      %v3785 = vpack.c.b16 %v3756, %v3755
      %v3786 = vpack.c.b16 %v3758, %v3757
      %v3787 = vpack.c.b16 %v3760, %v3759
      %v3788 = vpack.c.b16 %v3762, %v3761
      %v3789 = vpack.c.b16 %v3764, %v3763
      %v3790 = vpack.c.b16 %v3766, %v3765
      %v3791 = vpack.c.b16 %v3768, %v3767
      %v3792 = vpack.c.b16 %v3770, %v3769
      %v3793 = vpack.c.b16 %v3772, %v3771
      %v3794 = vpack.c.b16 %v3774, %v3773
      %v3795 = vpack.c.b16 %v3776, %v3775
      %v3796 = vpack.c.b16 %v3778, %v3777
      %v3797 = vpack.c.b16 %v3780, %v3779
      %v3798 = vpack.c.b16 %v3781, %v3781
      %v3799 = vrot.slane %v3782, 1
      %v3800 = vrot.slane %v3783, 1
      %v3801 = vsel %vm2518, %v3799, %v3800
      %v3802 = vrot.slane %v3784, 1
      %v3803 = vsel %vm2518, %v3800, %v3802
      %v3804 = vrot.slane %v3785, 1
      %v3805 = vsel %vm2518, %v3802, %v3804
      %v3806 = vrot.slane %v3786, 1
      %v3807 = vsel %vm2518, %v3804, %v3806
      %v3808 = vrot.slane %v3787, 1
      %v3809 = vsel %vm2518, %v3806, %v3808
      %v3810 = vrot.slane %v3788, 1
      %v3811 = vsel %vm2518, %v3808, %v3810
      %v3812 = vrot.slane %v3789, 1
      %v3813 = vsel %vm2518, %v3810, %v3812
      %v3814 = vrot.slane %v3790, 1
      %v3815 = vsel %vm2518, %v3812, %v3814
      %v3816 = vrot.slane %v3791, 1
      %v3817 = vsel %vm2518, %v3814, %v3816
      %v3818 = vrot.slane %v3792, 1
      %v3819 = vsel %vm2518, %v3816, %v3818
      %v3820 = vrot.slane %v3793, 1
      %v3821 = vsel %vm2518, %v3818, %v3820
      %v3822 = vrot.slane %v3794, 1
      %v3823 = vsel %vm2518, %v3820, %v3822
      %v3824 = vrot.slane %v3795, 1
      %v3825 = vsel %vm2518, %v3822, %v3824
      %v3826 = vrot.slane %v3796, 1
      %v3827 = vsel %vm2518, %v3824, %v3826
      %v3828 = vrot.slane %v3797, 1
      %v3829 = vsel %vm2518, %v3826, %v3828
      %v3830 = vrot.slane %v3798, 1
      %v3831 = vsel %vm2518, %v3828, %v3830
      %v3833 = vsel %vm368, %v3801, 0
      %v3836 = vsel %vm368, %v3803, 0
      %v3839 = vsel %vm368, %v3805, 0
      %v3842 = vsel %vm368, %v3807, 0
      %v3845 = vsel %vm368, %v3809, 0
      %v3848 = vsel %vm368, %v3811, 0
      %v3851 = vsel %vm368, %v3813, 0
      %v3854 = vsel %vm368, %v3815, 0
      %v3857 = vsel %vm368, %v3817, 0
      %v3860 = vsel %vm368, %v3819, 0
      %v3863 = vsel %vm368, %v3821, 0
      %v3866 = vsel %vm368, %v3823, 0
      %v3869 = vsel %vm368, %v3825, 0
      %v3872 = vsel %vm368, %v3827, 0
      %v3875 = vsel %vm368, %v3829, 0
      %v3878 = vsel %vm368, %v3831, 0
      %v3881 = vsel %vm417, %v3715, 0
      %3883 = vmatprep.subr.bf16.mxu0 0
      %3884 = vmatpush1.bf16.msra.mxu0 %v3881
      %3885 = vmatprep.subr.bf16.mxu0 0
      %3886 = vmatpush1.bf16.msra.mxu0 0
      %3887 = vmatprep.subr.bf16.mxu0 0
      %3888 = vmatpush1.bf16.msra.mxu0 0
      %3889 = vmatprep.subr.bf16.mxu0 0
      %3890 = vmatpush1.bf16.msra.mxu0 0
      %3891 = vmatprep.subr.bf16.mxu0 0
      %3892 = vmatpush1.bf16.msra.mxu0 0
      %3893 = vmatprep.subr.bf16.mxu0 0
      %3894 = vmatpush1.bf16.msra.mxu0 0
      %3895 = vmatprep.subr.bf16.mxu0 0
      %3896 = vmatpush1.bf16.msra.mxu0 0
      %3897 = vmatprep.subr.bf16.mxu0 0
      %3898 = vmatpush1.bf16.msra.mxu0 0
      %3899 = vmatprep.subr.bf16.mxu0 0
      %3900 = vmatpush1.bf16.msra.mxu0 0
      %3901 = vmatprep.subr.bf16.mxu0 0
      %3902 = vmatpush1.bf16.msra.mxu0 0
      %3903 = vmatprep.subr.bf16.mxu0 0
      %3904 = vmatpush1.bf16.msra.mxu0 0
      %3905 = vmatprep.subr.bf16.mxu0 0
      %3906 = vmatpush1.bf16.msra.mxu0 0
      %3907 = vmatprep.subr.bf16.mxu0 0
      %3908 = vmatpush1.bf16.msra.mxu0 0
      %3909 = vmatprep.subr.bf16.mxu0 0
      %3910 = vmatpush1.bf16.msra.mxu0 0
      %3911 = vmatprep.subr.bf16.mxu0 0
      %3912 = vmatpush1.bf16.msra.mxu0 0
      %3913 = vmatprep.subr.bf16.mxu0 0
      %3914 = vmatpush1.bf16.msra.mxu0 0
      %3915 = vmatprep.mubr.bf16.mxu0 0
      %3916 = vmatmul.mubr.bf16.gmra.mrb[0].mxu0 %v3833
      %v3917 = vpop.f32.mrb[0].mxu0
      %v3918 = vadd.f32 0.0, %v3917
      %v3919 = vpop.f32.mrb[0].mxu0
      %v3920 = vpop.f32.mrb[0].mxu0
      %v3921 = vadd.f32 0.0, %v3920
      %v3922 = vpop.f32.mrb[0].mxu0
      %3923 = vmatprep.mubr.bf16.mxu0 0
      %3924 = vmatmul.mubr.bf16.gmra.mrb[0].mxu0 %v3836
      %v3925 = vpop.f32.mrb[0].mxu0
      %v3926 = vadd.f32 0.0, %v3925
      %v3927 = vpop.f32.mrb[0].mxu0
      %v3928 = vpop.f32.mrb[0].mxu0
      %v3929 = vadd.f32 0.0, %v3928
      %v3930 = vpop.f32.mrb[0].mxu0
      %3931 = vmatprep.mubr.bf16.mxu0 0
      %3932 = vmatmul.mubr.bf16.gmra.mrb[0].mxu0 %v3839
      %v3933 = vpop.f32.mrb[0].mxu0
      %v3934 = vadd.f32 0.0, %v3933
      %v3935 = vpop.f32.mrb[0].mxu0
      %v3936 = vpop.f32.mrb[0].mxu0
      %v3937 = vadd.f32 0.0, %v3936
      %v3938 = vpop.f32.mrb[0].mxu0
      %3939 = vmatprep.mubr.bf16.mxu0 0
      %3940 = vmatmul.mubr.bf16.gmra.mrb[0].mxu0 %v3842
      %v3941 = vpop.f32.mrb[0].mxu0
      %v3942 = vadd.f32 0.0, %v3941
      %v3943 = vpop.f32.mrb[0].mxu0
      %v3944 = vpop.f32.mrb[0].mxu0
      %v3945 = vadd.f32 0.0, %v3944
      %v3946 = vpop.f32.mrb[0].mxu0
      %3947 = vmatprep.mubr.bf16.mxu0 0
      %3948 = vmatmul.mubr.bf16.gmra.mrb[0].mxu0 %v3845
      %v3949 = vpop.f32.mrb[0].mxu0
      %v3950 = vadd.f32 0.0, %v3949
      %v3951 = vpop.f32.mrb[0].mxu0
      %v3952 = vpop.f32.mrb[0].mxu0
      %v3953 = vadd.f32 0.0, %v3952
      %v3954 = vpop.f32.mrb[0].mxu0
      %3955 = vmatprep.mubr.bf16.mxu0 0
      %3956 = vmatmul.mubr.bf16.gmra.mrb[0].mxu0 %v3848
      %v3957 = vpop.f32.mrb[0].mxu0
      %v3958 = vadd.f32 0.0, %v3957
      %v3959 = vpop.f32.mrb[0].mxu0
      %v3960 = vpop.f32.mrb[0].mxu0
      %v3961 = vadd.f32 0.0, %v3960
      %v3962 = vpop.f32.mrb[0].mxu0
      %3963 = vmatprep.mubr.bf16.mxu0 0
      %3964 = vmatmul.mubr.bf16.gmra.mrb[0].mxu0 %v3851
      %v3965 = vpop.f32.mrb[0].mxu0
      %v3966 = vadd.f32 0.0, %v3965
      %v3967 = vpop.f32.mrb[0].mxu0
      %v3968 = vpop.f32.mrb[0].mxu0
      %v3969 = vadd.f32 0.0, %v3968
      %v3970 = vpop.f32.mrb[0].mxu0
      %3971 = vmatprep.mubr.bf16.mxu0 0
      %3972 = vmatmul.mubr.bf16.gmra.mrb[0].mxu0 %v3854
      %v3973 = vpop.f32.mrb[0].mxu0
      %v3974 = vadd.f32 0.0, %v3973
      %v3975 = vpop.f32.mrb[0].mxu0
      %v3976 = vpop.f32.mrb[0].mxu0
      %v3977 = vadd.f32 0.0, %v3976
      %v3978 = vpop.f32.mrb[0].mxu0
      %3979 = vmatprep.mubr.bf16.mxu0 0
      %3980 = vmatmul.mubr.bf16.gmra.mrb[0].mxu0 %v3857
      %v3981 = vpop.f32.mrb[0].mxu0
      %v3982 = vadd.f32 0.0, %v3981
      %v3983 = vpop.f32.mrb[0].mxu0
      %v3984 = vpop.f32.mrb[0].mxu0
      %v3985 = vadd.f32 0.0, %v3984
      %v3986 = vpop.f32.mrb[0].mxu0
      %3987 = vmatprep.mubr.bf16.mxu0 0
      %3988 = vmatmul.mubr.bf16.gmra.mrb[0].mxu0 %v3860
      %v3989 = vpop.f32.mrb[0].mxu0
      %v3990 = vadd.f32 0.0, %v3989
      %v3991 = vpop.f32.mrb[0].mxu0
      %v3992 = vpop.f32.mrb[0].mxu0
      %v3993 = vadd.f32 0.0, %v3992
      %v3994 = vpop.f32.mrb[0].mxu0
      %3995 = vmatprep.mubr.bf16.mxu0 0
      %3996 = vmatmul.mubr.bf16.gmra.mrb[0].mxu0 %v3863
      %v3997 = vpop.f32.mrb[0].mxu0
      %v3998 = vadd.f32 0.0, %v3997
      %v3999 = vpop.f32.mrb[0].mxu0
      %v4000 = vpop.f32.mrb[0].mxu0
      %v4001 = vadd.f32 0.0, %v4000
      %v4002 = vpop.f32.mrb[0].mxu0
      %4003 = vmatprep.mubr.bf16.mxu0 0
      %4004 = vmatmul.mubr.bf16.gmra.mrb[0].mxu0 %v3866
      %v4005 = vpop.f32.mrb[0].mxu0
      %v4006 = vadd.f32 0.0, %v4005
      %v4007 = vpop.f32.mrb[0].mxu0
      %v4008 = vpop.f32.mrb[0].mxu0
      %v4009 = vadd.f32 0.0, %v4008
      %v4010 = vpop.f32.mrb[0].mxu0
      %4011 = vmatprep.mubr.bf16.mxu0 0
      %4012 = vmatmul.mubr.bf16.gmra.mrb[0].mxu0 %v3869
      %v4013 = vpop.f32.mrb[0].mxu0
      %v4014 = vadd.f32 0.0, %v4013
      %v4015 = vpop.f32.mrb[0].mxu0
      %v4016 = vpop.f32.mrb[0].mxu0
      %v4017 = vadd.f32 0.0, %v4016
      %v4018 = vpop.f32.mrb[0].mxu0
      %4019 = vmatprep.mubr.bf16.mxu0 0
      %4020 = vmatmul.mubr.bf16.gmra.mrb[0].mxu0 %v3872
      %v4021 = vpop.f32.mrb[0].mxu0
      %v4022 = vadd.f32 0.0, %v4021
      %v4023 = vpop.f32.mrb[0].mxu0
      %v4024 = vpop.f32.mrb[0].mxu0
      %v4025 = vadd.f32 0.0, %v4024
      %v4026 = vpop.f32.mrb[0].mxu0
      %4027 = vmatprep.mubr.bf16.mxu0 0
      %4028 = vmatmul.mubr.bf16.gmra.mrb[0].mxu0 %v3875
      %v4029 = vpop.f32.mrb[0].mxu0
      %v4030 = vadd.f32 0.0, %v4029
      %v4031 = vpop.f32.mrb[0].mxu0
      %v4032 = vpop.f32.mrb[0].mxu0
      %v4033 = vadd.f32 0.0, %v4032
      %v4034 = vpop.f32.mrb[0].mxu0
      %4035 = vmatprep.mubr.bf16.mxu0 0
      %4036 = vmatmul.mubr.bf16.gmra.mrb[0].mxu0 %v3878
      %v4037 = vpop.f32.mrb[0].mxu0
      %v4038 = vadd.f32 0.0, %v4037
      %v4039 = vpop.f32.mrb[0].mxu0
      %v4040 = vpop.f32.mrb[0].mxu0
      %v4041 = vadd.f32 0.0, %v4040
      %v4042 = vpop.f32.mrb[0].mxu0
      %4043 = vdwg.mxu0
      %v4044 = vadd.f32 %v3648, %v3918
      %v4045 = vadd.f32 %v3649, %v3921
      %v4046 = vadd.f32 %v3650, %v3926
      %v4047 = vadd.f32 %v3651, %v3929
      %v4048 = vadd.f32 %v3652, %v3934
      %v4049 = vadd.f32 %v3653, %v3937
      %v4050 = vadd.f32 %v3654, %v3942
      %v4051 = vadd.f32 %v3655, %v3945
      %v4052 = vadd.f32 %v3656, %v3950
      %v4053 = vadd.f32 %v3657, %v3953
      %v4054 = vadd.f32 %v3658, %v3958
      %v4055 = vadd.f32 %v3659, %v3961
      %v4056 = vadd.f32 %v3660, %v3966
      %v4057 = vadd.f32 %v3661, %v3969
      %v4058 = vadd.f32 %v3662, %v3974
      %v4059 = vadd.f32 %v3663, %v3977
      %v4060 = vadd.f32 %v3664, %v3982
      %v4061 = vadd.f32 %v3665, %v3985
      %v4062 = vadd.f32 %v3666, %v3990
      %v4063 = vadd.f32 %v3667, %v3993
      %v4064 = vadd.f32 %v3668, %v3998
      %v4065 = vadd.f32 %v3669, %v4001
      %v4066 = vadd.f32 %v3670, %v4006
      %v4067 = vadd.f32 %v3671, %v4009
      %v4068 = vadd.f32 %v3672, %v4014
      %v4069 = vadd.f32 %v3673, %v4017
      %v4070 = vadd.f32 %v3674, %v4022
      %v4071 = vadd.f32 %v3675, %v4025
      %v4072 = vadd.f32 %v3676, %v4030
      %v4073 = vadd.f32 %v3677, %v4033
      %v4074 = vadd.f32 %v3678, %v4038
      %v4075 = vadd.f32 %v3679, %v4041
      %v4076 = vld [vmem:[%s239 + $0x10] sm:$0xf]
      %v4077 = vld [vmem:[%s239 + $0x14] sm:$0xf]
      %v4078 = vld [vmem:[%s239 + $0x18] sm:$0xf]
      %v4079 = vld [vmem:[%s239 + $0x1c] sm:$0xf]
      %v4080 = vld [vmem:[%s239 + $0x20] sm:$0xf]
      %v4081 = vld [vmem:[%s239 + $0x24] sm:$0xf]
      %v4082 = vld [vmem:[%s239 + $0x28] sm:$0xf]
      %v4083 = vld [vmem:[%s239 + $0x2c] sm:$0xf]
      %v4084 = vld [vmem:[%s239 + $0x30] sm:$0xf]
      %v4085 = vld [vmem:[%s239 + $0x34] sm:$0xf]
      %v4086 = vld [vmem:[%s239 + $0x38] sm:$0xf]
      %v4087 = vld [vmem:[%s239 + $0x3c] sm:$0xf]
      %v4088 = vld [vmem:[%s239 + $0x40] sm:$0xf]
      %v4089 = vld [vmem:[%s239 + $0x44] sm:$0xf]
      %v4090 = vld [vmem:[%s239 + $0x48] sm:$0xf]
      %v4091 = vld [vmem:[%s239 + $0x4c] sm:$0xf]
      %v4092 = vld [vmem:[%s239 + $0x50] sm:$0xf]
      %v4093 = vld [vmem:[%s239 + $0x54] sm:$0xf]
      %v4094 = vld [vmem:[%s239 + $0x58] sm:$0xf]
      %v4095 = vld [vmem:[%s239 + $0x5c] sm:$0xf]
      %v4096 = vld [vmem:[%s239 + $0x60] sm:$0xf]
      %v4097 = vld [vmem:[%s239 + $0x64] sm:$0xf]
      %v4098 = vld [vmem:[%s239 + $0x68] sm:$0xf]
      %v4099 = vld [vmem:[%s239 + $0x6c] sm:$0xf]
      %v4100 = vld [vmem:[%s239 + $0x70] sm:$0xf]
      %v4101 = vld [vmem:[%s239 + $0x74] sm:$0xf]
      %v4102 = vld [vmem:[%s239 + $0x78] sm:$0xf]
      %v4103 = vld [vmem:[%s239 + $0x7c] sm:$0xf]
      %v4104 = vld [vmem:[%s239 + $0x80] sm:$0xf]
      %v4105 = vld [vmem:[%s239 + $0x84] sm:$0xf]
      %v4106 = vld [vmem:[%s239 + $0x88] sm:$0xf]
      %v4107 = vld [vmem:[%s239 + $0x8c] sm:$0xf]
      %v4108 = vsel %vm1352, 0, %v4076
      %v4109 = vsel %vm1353, 0, %v4077
      %v4110 = vsel %vm1354, 0, %v4078
      %v4111 = vsel %vm1355, 0, %v4079
      %v4112 = vsel %vm1356, 0, %v4080
      %v4113 = vsel %vm1357, 0, %v4081
      %v4114 = vsel %vm1358, 0, %v4082
      %v4115 = vsel %vm1359, 0, %v4083
      %v4116 = vsel %vm1360, 0, %v4084
      %v4117 = vsel %vm1361, 0, %v4085
      %v4118 = vsel %vm1362, 0, %v4086
      %v4119 = vsel %vm1363, 0, %v4087
      %v4120 = vsel %vm1364, 0, %v4088
      %v4121 = vsel %vm1365, 0, %v4089
      %v4122 = vsel %vm1366, 0, %v4090
      %v4123 = vsel %vm1367, 0, %v4091
      %v4124 = vsel %vm1368, 0, %v4092
      %v4125 = vsel %vm1369, 0, %v4093
      %v4126 = vsel %vm1370, 0, %v4094
      %v4127 = vsel %vm1371, 0, %v4095
      %v4128 = vsel %vm1372, 0, %v4096
      %v4129 = vsel %vm1373, 0, %v4097
      %v4130 = vsel %vm1374, 0, %v4098
      %v4131 = vsel %vm1375, 0, %v4099
      %v4132 = vsel %vm1376, 0, %v4100
      %v4133 = vsel %vm1377, 0, %v4101
      %v4134 = vsel %vm1378, 0, %v4102
      %v4135 = vsel %vm1379, 0, %v4103
      %v4136 = vsel %vm1380, 0, %v4104
      %v4137 = vsel %vm1381, 0, %v4105
      %v4138 = vsel %vm1382, 0, %v4106
      %v4139 = vsel %vm1383, 0, %v4107
      %s4140 = scalar_lea.vmem %s3, 24
      %v4141 = vld [vmem:[%s4140] sm:$0xf]
      %v4174 = vunpack.c.l.b16 %v4108
      %v4175 = vunpack.c.l.b16 %v4109
      %v4176 = vunpack.c.l.b16 %v4110
      %v4177 = vunpack.c.l.b16 %v4111
      %v4178 = vunpack.c.l.b16 %v4112
      %v4179 = vunpack.c.l.b16 %v4113
      %v4180 = vunpack.c.l.b16 %v4114
      %v4181 = vunpack.c.l.b16 %v4115
      %v4182 = vunpack.c.l.b16 %v4116
      %v4183 = vunpack.c.l.b16 %v4117
      %v4184 = vunpack.c.l.b16 %v4118
      %v4185 = vunpack.c.l.b16 %v4119
      %v4186 = vunpack.c.l.b16 %v4120
      %v4187 = vunpack.c.l.b16 %v4121
      %v4188 = vunpack.c.l.b16 %v4122
      %v4189 = vunpack.c.l.b16 %v4123
      %v4190 = vunpack.c.l.b16 %v4124
      %v4191 = vunpack.c.l.b16 %v4125
      %v4192 = vunpack.c.l.b16 %v4126
      %v4193 = vunpack.c.l.b16 %v4127
      %v4194 = vunpack.c.l.b16 %v4128
      %v4195 = vunpack.c.l.b16 %v4129
      %v4196 = vunpack.c.l.b16 %v4130
      %v4197 = vunpack.c.l.b16 %v4131
      %v4198 = vunpack.c.l.b16 %v4132
      %v4199 = vunpack.c.l.b16 %v4133
      %v4200 = vunpack.c.l.b16 %v4134
      %v4201 = vunpack.c.l.b16 %v4135
      %v4202 = vunpack.c.l.b16 %v4136
      %v4203 = vunpack.c.l.b16 %v4137
      %v4204 = vunpack.c.l.b16 %v4138
      %v4205 = vunpack.c.l.b16 %v4139
      %v4206 = vpack.c.b16 %v4175, %v4174
      %v4207 = vpack.c.b16 %v4177, %v4176
      %v4208 = vpack.c.b16 %v4179, %v4178
      %v4209 = vpack.c.b16 %v4181, %v4180
      %v4210 = vpack.c.b16 %v4183, %v4182
      %v4211 = vpack.c.b16 %v4185, %v4184
      %v4212 = vpack.c.b16 %v4187, %v4186
      %v4213 = vpack.c.b16 %v4189, %v4188
      %v4214 = vpack.c.b16 %v4191, %v4190
      %v4215 = vpack.c.b16 %v4193, %v4192
      %v4216 = vpack.c.b16 %v4195, %v4194
      %v4217 = vpack.c.b16 %v4197, %v4196
      %v4218 = vpack.c.b16 %v4199, %v4198
      %v4219 = vpack.c.b16 %v4201, %v4200
      %v4220 = vpack.c.b16 %v4203, %v4202
      %v4221 = vpack.c.b16 %v4205, %v4204
      %v4223 = vsel %vm368, %v4206, 0
      %v4226 = vsel %vm368, %v4207, 0
      %v4229 = vsel %vm368, %v4208, 0
      %v4232 = vsel %vm368, %v4209, 0
      %v4235 = vsel %vm368, %v4210, 0
      %v4238 = vsel %vm368, %v4211, 0
      %v4241 = vsel %vm368, %v4212, 0
      %v4244 = vsel %vm368, %v4213, 0
      %v4247 = vsel %vm368, %v4214, 0
      %v4250 = vsel %vm368, %v4215, 0
      %v4253 = vsel %vm368, %v4216, 0
      %v4256 = vsel %vm368, %v4217, 0
      %v4259 = vsel %vm368, %v4218, 0
      %v4262 = vsel %vm368, %v4219, 0
      %v4265 = vsel %vm368, %v4220, 0
      %v4268 = vsel %vm368, %v4221, 0
      %v4271 = vsel %vm417, %v4141, 0
      %4273 = vmatprep.subr.bf16.mxu0 0
      %4274 = vmatpush1.bf16.msra.mxu0 %v4271
      %4275 = vmatprep.subr.bf16.mxu0 0
      %4276 = vmatpush1.bf16.msra.mxu0 0
      %4277 = vmatprep.subr.bf16.mxu0 0
      %4278 = vmatpush1.bf16.msra.mxu0 0
      %4279 = vmatprep.subr.bf16.mxu0 0
      %4280 = vmatpush1.bf16.msra.mxu0 0
      %4281 = vmatprep.subr.bf16.mxu0 0
      %4282 = vmatpush1.bf16.msra.mxu0 0
      %4283 = vmatprep.subr.bf16.mxu0 0
      %4284 = vmatpush1.bf16.msra.mxu0 0
      %4285 = vmatprep.subr.bf16.mxu0 0
      %4286 = vmatpush1.bf16.msra.mxu0 0
      %4287 = vmatprep.subr.bf16.mxu0 0
      %4288 = vmatpush1.bf16.msra.mxu0 0
      %4289 = vmatprep.subr.bf16.mxu0 0
      %4290 = vmatpush1.bf16.msra.mxu0 0
      %4291 = vmatprep.subr.bf16.mxu0 0
      %4292 = vmatpush1.bf16.msra.mxu0 0
      %4293 = vmatprep.subr.bf16.mxu0 0
      %4294 = vmatpush1.bf16.msra.mxu0 0
      %4295 = vmatprep.subr.bf16.mxu0 0
      %4296 = vmatpush1.bf16.msra.mxu0 0
      %4297 = vmatprep.subr.bf16.mxu0 0
      %4298 = vmatpush1.bf16.msra.mxu0 0
      %4299 = vmatprep.subr.bf16.mxu0 0
      %4300 = vmatpush1.bf16.msra.mxu0 0
      %4301 = vmatprep.subr.bf16.mxu0 0
      %4302 = vmatpush1.bf16.msra.mxu0 0
      %4303 = vmatprep.subr.bf16.mxu0 0
      %4304 = vmatpush1.bf16.msra.mxu0 0
      %4305 = vmatprep.mubr.bf16.mxu0 0
      %4306 = vmatmul.mubr.bf16.gmra.mrb[0].mxu0 %v4223
      %v4307 = vpop.f32.mrb[0].mxu0
      %v4308 = vadd.f32 0.0, %v4307
      %v4309 = vpop.f32.mrb[0].mxu0
      %v4310 = vpop.f32.mrb[0].mxu0
      %v4311 = vadd.f32 0.0, %v4310
      %v4312 = vpop.f32.mrb[0].mxu0
      %4313 = vmatprep.mubr.bf16.mxu0 0
      %4314 = vmatmul.mubr.bf16.gmra.mrb[0].mxu0 %v4226
      %v4315 = vpop.f32.mrb[0].mxu0
      %v4316 = vadd.f32 0.0, %v4315
      %v4317 = vpop.f32.mrb[0].mxu0
      %v4318 = vpop.f32.mrb[0].mxu0
      %v4319 = vadd.f32 0.0, %v4318
      %v4320 = vpop.f32.mrb[0].mxu0
      %4321 = vmatprep.mubr.bf16.mxu0 0
      %4322 = vmatmul.mubr.bf16.gmra.mrb[0].mxu0 %v4229
      %v4323 = vpop.f32.mrb[0].mxu0
      %v4324 = vadd.f32 0.0, %v4323
      %v4325 = vpop.f32.mrb[0].mxu0
      %v4326 = vpop.f32.mrb[0].mxu0
      %v4327 = vadd.f32 0.0, %v4326
      %v4328 = vpop.f32.mrb[0].mxu0
      %4329 = vmatprep.mubr.bf16.mxu0 0
      %4330 = vmatmul.mubr.bf16.gmra.mrb[0].mxu0 %v4232
      %v4331 = vpop.f32.mrb[0].mxu0
      %v4332 = vadd.f32 0.0, %v4331
      %v4333 = vpop.f32.mrb[0].mxu0
      %v4334 = vpop.f32.mrb[0].mxu0
      %v4335 = vadd.f32 0.0, %v4334
      %v4336 = vpop.f32.mrb[0].mxu0
      %4337 = vmatprep.mubr.bf16.mxu0 0
      %4338 = vmatmul.mubr.bf16.gmra.mrb[0].mxu0 %v4235
      %v4339 = vpop.f32.mrb[0].mxu0
      %v4340 = vadd.f32 0.0, %v4339
      %v4341 = vpop.f32.mrb[0].mxu0
      %v4342 = vpop.f32.mrb[0].mxu0
      %v4343 = vadd.f32 0.0, %v4342
      %v4344 = vpop.f32.mrb[0].mxu0
      %4345 = vmatprep.mubr.bf16.mxu0 0
      %4346 = vmatmul.mubr.bf16.gmra.mrb[0].mxu0 %v4238
      %v4347 = vpop.f32.mrb[0].mxu0
      %v4348 = vadd.f32 0.0, %v4347
      %v4349 = vpop.f32.mrb[0].mxu0
      %v4350 = vpop.f32.mrb[0].mxu0
      %v4351 = vadd.f32 0.0, %v4350
      %v4352 = vpop.f32.mrb[0].mxu0
      %4353 = vmatprep.mubr.bf16.mxu0 0
      %4354 = vmatmul.mubr.bf16.gmra.mrb[0].mxu0 %v4241
      %v4355 = vpop.f32.mrb[0].mxu0
      %v4356 = vadd.f32 0.0, %v4355
      %v4357 = vpop.f32.mrb[0].mxu0
      %v4358 = vpop.f32.mrb[0].mxu0
      %v4359 = vadd.f32 0.0, %v4358
      %v4360 = vpop.f32.mrb[0].mxu0
      %4361 = vmatprep.mubr.bf16.mxu0 0
      %4362 = vmatmul.mubr.bf16.gmra.mrb[0].mxu0 %v4244
      %v4363 = vpop.f32.mrb[0].mxu0
      %v4364 = vadd.f32 0.0, %v4363
      %v4365 = vpop.f32.mrb[0].mxu0
      %v4366 = vpop.f32.mrb[0].mxu0
      %v4367 = vadd.f32 0.0, %v4366
      %v4368 = vpop.f32.mrb[0].mxu0
      %4369 = vmatprep.mubr.bf16.mxu0 0
      %4370 = vmatmul.mubr.bf16.gmra.mrb[0].mxu0 %v4247
      %v4371 = vpop.f32.mrb[0].mxu0
      %v4372 = vadd.f32 0.0, %v4371
      %v4373 = vpop.f32.mrb[0].mxu0
      %v4374 = vpop.f32.mrb[0].mxu0
      %v4375 = vadd.f32 0.0, %v4374
      %v4376 = vpop.f32.mrb[0].mxu0
      %4377 = vmatprep.mubr.bf16.mxu0 0
      %4378 = vmatmul.mubr.bf16.gmra.mrb[0].mxu0 %v4250
      %v4379 = vpop.f32.mrb[0].mxu0
      %v4380 = vadd.f32 0.0, %v4379
      %v4381 = vpop.f32.mrb[0].mxu0
      %v4382 = vpop.f32.mrb[0].mxu0
      %v4383 = vadd.f32 0.0, %v4382
      %v4384 = vpop.f32.mrb[0].mxu0
      %4385 = vmatprep.mubr.bf16.mxu0 0
      %4386 = vmatmul.mubr.bf16.gmra.mrb[0].mxu0 %v4253
      %v4387 = vpop.f32.mrb[0].mxu0
      %v4388 = vadd.f32 0.0, %v4387
      %v4389 = vpop.f32.mrb[0].mxu0
      %v4390 = vpop.f32.mrb[0].mxu0
      %v4391 = vadd.f32 0.0, %v4390
      %v4392 = vpop.f32.mrb[0].mxu0
      %4393 = vmatprep.mubr.bf16.mxu0 0
      %4394 = vmatmul.mubr.bf16.gmra.mrb[0].mxu0 %v4256
      %v4395 = vpop.f32.mrb[0].mxu0
      %v4396 = vadd.f32 0.0, %v4395
      %v4397 = vpop.f32.mrb[0].mxu0
      %v4398 = vpop.f32.mrb[0].mxu0
      %v4399 = vadd.f32 0.0, %v4398
      %v4400 = vpop.f32.mrb[0].mxu0
      %4401 = vmatprep.mubr.bf16.mxu0 0
      %4402 = vmatmul.mubr.bf16.gmra.mrb[0].mxu0 %v4259
      %v4403 = vpop.f32.mrb[0].mxu0
      %v4404 = vadd.f32 0.0, %v4403
      %v4405 = vpop.f32.mrb[0].mxu0
      %v4406 = vpop.f32.mrb[0].mxu0
      %v4407 = vadd.f32 0.0, %v4406
      %v4408 = vpop.f32.mrb[0].mxu0
      %4409 = vmatprep.mubr.bf16.mxu0 0
      %4410 = vmatmul.mubr.bf16.gmra.mrb[0].mxu0 %v4262
      %v4411 = vpop.f32.mrb[0].mxu0
      %v4412 = vadd.f32 0.0, %v4411
      %v4413 = vpop.f32.mrb[0].mxu0
      %v4414 = vpop.f32.mrb[0].mxu0
      %v4415 = vadd.f32 0.0, %v4414
      %v4416 = vpop.f32.mrb[0].mxu0
      %4417 = vmatprep.mubr.bf16.mxu0 0
      %4418 = vmatmul.mubr.bf16.gmra.mrb[0].mxu0 %v4265
      %v4419 = vpop.f32.mrb[0].mxu0
      %v4420 = vadd.f32 0.0, %v4419
      %v4421 = vpop.f32.mrb[0].mxu0
      %v4422 = vpop.f32.mrb[0].mxu0
      %v4423 = vadd.f32 0.0, %v4422
      %v4424 = vpop.f32.mrb[0].mxu0
      %4425 = vmatprep.mubr.bf16.mxu0 0
      %4426 = vmatmul.mubr.bf16.gmra.mrb[0].mxu0 %v4268
      %v4427 = vpop.f32.mrb[0].mxu0
      %v4428 = vadd.f32 0.0, %v4427
      %v4429 = vpop.f32.mrb[0].mxu0
      %v4430 = vpop.f32.mrb[0].mxu0
      %v4431 = vadd.f32 0.0, %v4430
      %v4432 = vpop.f32.mrb[0].mxu0
      %4433 = vdwg.mxu0
      %v4434 = vadd.f32 %v4044, %v4308
      %v4435 = vadd.f32 %v4045, %v4311
      %v4436 = vadd.f32 %v4046, %v4316
      %v4437 = vadd.f32 %v4047, %v4319
      %v4438 = vadd.f32 %v4048, %v4324
      %v4439 = vadd.f32 %v4049, %v4327
      %v4440 = vadd.f32 %v4050, %v4332
      %v4441 = vadd.f32 %v4051, %v4335
      %v4442 = vadd.f32 %v4052, %v4340
      %v4443 = vadd.f32 %v4053, %v4343
      %v4444 = vadd.f32 %v4054, %v4348
      %v4445 = vadd.f32 %v4055, %v4351
      %v4446 = vadd.f32 %v4056, %v4356
      %v4447 = vadd.f32 %v4057, %v4359
      %v4448 = vadd.f32 %v4058, %v4364
      %v4449 = vadd.f32 %v4059, %v4367
      %v4450 = vadd.f32 %v4060, %v4372
      %v4451 = vadd.f32 %v4061, %v4375
      %v4452 = vadd.f32 %v4062, %v4380
      %v4453 = vadd.f32 %v4063, %v4383
      %v4454 = vadd.f32 %v4064, %v4388
      %v4455 = vadd.f32 %v4065, %v4391
      %v4456 = vadd.f32 %v4066, %v4396
      %v4457 = vadd.f32 %v4067, %v4399
      %v4458 = vadd.f32 %v4068, %v4404
      %v4459 = vadd.f32 %v4069, %v4407
      %v4460 = vadd.f32 %v4070, %v4412
      %v4461 = vadd.f32 %v4071, %v4415
      %v4462 = vadd.f32 %v4072, %v4420
      %v4463 = vadd.f32 %v4073, %v4423
      %v4464 = vadd.f32 %v4074, %v4428
      %v4465 = vadd.f32 %v4075, %v4431
      %v4466 = vld [vmem:[%s239 + $0x10] sm:$0xf]
      %v4467 = vld [vmem:[%s239 + $0x14] sm:$0xf]
      %v4468 = vld [vmem:[%s239 + $0x18] sm:$0xf]
      %v4469 = vld [vmem:[%s239 + $0x1c] sm:$0xf]
      %v4470 = vld [vmem:[%s239 + $0x20] sm:$0xf]
      %v4471 = vld [vmem:[%s239 + $0x24] sm:$0xf]
      %v4472 = vld [vmem:[%s239 + $0x28] sm:$0xf]
      %v4473 = vld [vmem:[%s239 + $0x2c] sm:$0xf]
      %v4474 = vld [vmem:[%s239 + $0x30] sm:$0xf]
      %v4475 = vld [vmem:[%s239 + $0x34] sm:$0xf]
      %v4476 = vld [vmem:[%s239 + $0x38] sm:$0xf]
      %v4477 = vld [vmem:[%s239 + $0x3c] sm:$0xf]
      %v4478 = vld [vmem:[%s239 + $0x40] sm:$0xf]
      %v4479 = vld [vmem:[%s239 + $0x44] sm:$0xf]
      %v4480 = vld [vmem:[%s239 + $0x48] sm:$0xf]
      %v4481 = vld [vmem:[%s239 + $0x4c] sm:$0xf]
      %v4482 = vld [vmem:[%s239 + $0x50] sm:$0xf]
      %v4483 = vld [vmem:[%s239 + $0x54] sm:$0xf]
      %v4484 = vld [vmem:[%s239 + $0x58] sm:$0xf]
      %v4485 = vld [vmem:[%s239 + $0x5c] sm:$0xf]
      %v4486 = vld [vmem:[%s239 + $0x60] sm:$0xf]
      %v4487 = vld [vmem:[%s239 + $0x64] sm:$0xf]
      %v4488 = vld [vmem:[%s239 + $0x68] sm:$0xf]
      %v4489 = vld [vmem:[%s239 + $0x6c] sm:$0xf]
      %v4490 = vld [vmem:[%s239 + $0x70] sm:$0xf]
      %v4491 = vld [vmem:[%s239 + $0x74] sm:$0xf]
      %v4492 = vld [vmem:[%s239 + $0x78] sm:$0xf]
      %v4493 = vld [vmem:[%s239 + $0x7c] sm:$0xf]
      %v4494 = vld [vmem:[%s239 + $0x80] sm:$0xf]
      %v4495 = vld [vmem:[%s239 + $0x84] sm:$0xf]
      %v4496 = vld [vmem:[%s239 + $0x88] sm:$0xf]
      %v4497 = vld [vmem:[%s239 + $0x8c] sm:$0xf]
      %v4498 = vld [vmem:[%s239 + $0x90] sm:$0x1]
      %s4499 = scalar_lea.vmem %s3, 28
      %v4500 = vld [vmem:[%s4499] sm:$0xf]
      %v4534 = vunpack.c.l.b16 %v4466
      %v4535 = vunpack.c.l.b16 %v4467
      %v4536 = vunpack.c.l.b16 %v4468
      %v4537 = vunpack.c.l.b16 %v4469
      %v4538 = vunpack.c.l.b16 %v4470
      %v4539 = vunpack.c.l.b16 %v4471
      %v4540 = vunpack.c.l.b16 %v4472
      %v4541 = vunpack.c.l.b16 %v4473
      %v4542 = vunpack.c.l.b16 %v4474
      %v4543 = vunpack.c.l.b16 %v4475
      %v4544 = vunpack.c.l.b16 %v4476
      %v4545 = vunpack.c.l.b16 %v4477
      %v4546 = vunpack.c.l.b16 %v4478
      %v4547 = vunpack.c.l.b16 %v4479
      %v4548 = vunpack.c.l.b16 %v4480
      %v4549 = vunpack.c.l.b16 %v4481
      %v4550 = vunpack.c.l.b16 %v4482
      %v4551 = vunpack.c.l.b16 %v4483
      %v4552 = vunpack.c.l.b16 %v4484
      %v4553 = vunpack.c.l.b16 %v4485
      %v4554 = vunpack.c.l.b16 %v4486
      %v4555 = vunpack.c.l.b16 %v4487
      %v4556 = vunpack.c.l.b16 %v4488
      %v4557 = vunpack.c.l.b16 %v4489
      %v4558 = vunpack.c.l.b16 %v4490
      %v4559 = vunpack.c.l.b16 %v4491
      %v4560 = vunpack.c.l.b16 %v4492
      %v4561 = vunpack.c.l.b16 %v4493
      %v4562 = vunpack.c.l.b16 %v4494
      %v4563 = vunpack.c.l.b16 %v4495
      %v4564 = vunpack.c.l.b16 %v4496
      %v4565 = vunpack.c.l.b16 %v4497
      %v4566 = vunpack.c.l.b16 %v4498
      %v4567 = vpack.c.b16 %v4535, %v4534
      %v4568 = vpack.c.b16 %v4537, %v4536
      %v4569 = vpack.c.b16 %v4539, %v4538
      %v4570 = vpack.c.b16 %v4541, %v4540
      %v4571 = vpack.c.b16 %v4543, %v4542
      %v4572 = vpack.c.b16 %v4545, %v4544
      %v4573 = vpack.c.b16 %v4547, %v4546
      %v4574 = vpack.c.b16 %v4549, %v4548
      %v4575 = vpack.c.b16 %v4551, %v4550
      %v4576 = vpack.c.b16 %v4553, %v4552
      %v4577 = vpack.c.b16 %v4555, %v4554
      %v4578 = vpack.c.b16 %v4557, %v4556
      %v4579 = vpack.c.b16 %v4559, %v4558
      %v4580 = vpack.c.b16 %v4561, %v4560
      %v4581 = vpack.c.b16 %v4563, %v4562
      %v4582 = vpack.c.b16 %v4565, %v4564
      %v4583 = vpack.c.b16 %v4566, %v4566
      %v4585 = vshrl.u32 %v4567, 16
      %v4587 = vshll.u32 %v4567, 16
      %v4589 = vrot.slane %v4587, 1
      %v4590 = vor.u32 %v4585, %v4589
      %v4592 = vshll.u32 %v4568, 16
      %v4594 = vrot.slane %v4592, 1
      %v4595 = vsel %vm1503, %v4590, %v4594
      %v4596 = vshrl.u32 %v4568, 16
      %v4598 = vor.u32 %v4596, %v4594
      %v4600 = vshll.u32 %v4569, 16
      %v4602 = vrot.slane %v4600, 1
      %v4603 = vsel %vm1503, %v4598, %v4602
      %v4604 = vshrl.u32 %v4569, 16
      %v4606 = vor.u32 %v4604, %v4602
      %v4608 = vshll.u32 %v4570, 16
      %v4610 = vrot.slane %v4608, 1
      %v4611 = vsel %vm1503, %v4606, %v4610
      %v4612 = vshrl.u32 %v4570, 16
      %v4614 = vor.u32 %v4612, %v4610
      %v4616 = vshll.u32 %v4571, 16
      %v4618 = vrot.slane %v4616, 1
      %v4619 = vsel %vm1503, %v4614, %v4618
      %v4620 = vshrl.u32 %v4571, 16
      %v4622 = vor.u32 %v4620, %v4618
      %v4624 = vshll.u32 %v4572, 16
      %v4626 = vrot.slane %v4624, 1
      %v4627 = vsel %vm1503, %v4622, %v4626
      %v4628 = vshrl.u32 %v4572, 16
      %v4630 = vor.u32 %v4628, %v4626
      %v4632 = vshll.u32 %v4573, 16
      %v4634 = vrot.slane %v4632, 1
      %v4635 = vsel %vm1503, %v4630, %v4634
      %v4636 = vshrl.u32 %v4573, 16
      %v4638 = vor.u32 %v4636, %v4634
      %v4640 = vshll.u32 %v4574, 16
      %v4642 = vrot.slane %v4640, 1
      %v4643 = vsel %vm1503, %v4638, %v4642
      %v4644 = vshrl.u32 %v4574, 16
      %v4646 = vor.u32 %v4644, %v4642
      %v4648 = vshll.u32 %v4575, 16
      %v4650 = vrot.slane %v4648, 1
      %v4651 = vsel %vm1503, %v4646, %v4650
      %v4652 = vshrl.u32 %v4575, 16
      %v4654 = vor.u32 %v4652, %v4650
      %v4656 = vshll.u32 %v4576, 16
      %v4658 = vrot.slane %v4656, 1
      %v4659 = vsel %vm1503, %v4654, %v4658
      %v4660 = vshrl.u32 %v4576, 16
      %v4662 = vor.u32 %v4660, %v4658
      %v4664 = vshll.u32 %v4577, 16
      %v4666 = vrot.slane %v4664, 1
      %v4667 = vsel %vm1503, %v4662, %v4666
      %v4668 = vshrl.u32 %v4577, 16
      %v4670 = vor.u32 %v4668, %v4666
      %v4672 = vshll.u32 %v4578, 16
      %v4674 = vrot.slane %v4672, 1
      %v4675 = vsel %vm1503, %v4670, %v4674
      %v4676 = vshrl.u32 %v4578, 16
      %v4678 = vor.u32 %v4676, %v4674
      %v4680 = vshll.u32 %v4579, 16
      %v4682 = vrot.slane %v4680, 1
      %v4683 = vsel %vm1503, %v4678, %v4682
      %v4684 = vshrl.u32 %v4579, 16
      %v4686 = vor.u32 %v4684, %v4682
      %v4688 = vshll.u32 %v4580, 16
      %v4690 = vrot.slane %v4688, 1
      %v4691 = vsel %vm1503, %v4686, %v4690
      %v4692 = vshrl.u32 %v4580, 16
      %v4694 = vor.u32 %v4692, %v4690
      %v4696 = vshll.u32 %v4581, 16
      %v4698 = vrot.slane %v4696, 1
      %v4699 = vsel %vm1503, %v4694, %v4698
      %v4700 = vshrl.u32 %v4581, 16
      %v4702 = vor.u32 %v4700, %v4698
      %v4704 = vshll.u32 %v4582, 16
      %v4706 = vrot.slane %v4704, 1
      %v4707 = vsel %vm1503, %v4702, %v4706
      %v4708 = vshrl.u32 %v4582, 16
      %v4710 = vor.u32 %v4708, %v4706
      %v4712 = vshll.u32 %v4583, 16
      %v4714 = vrot.slane %v4712, 1
      %v4715 = vsel %vm1503, %v4710, %v4714
      %v4717 = vsel %vm368, %v4595, 0
      %v4720 = vsel %vm368, %v4603, 0
      %v4723 = vsel %vm368, %v4611, 0
      %v4726 = vsel %vm368, %v4619, 0
      %v4729 = vsel %vm368, %v4627, 0
      %v4732 = vsel %vm368, %v4635, 0
      %v4735 = vsel %vm368, %v4643, 0
      %v4738 = vsel %vm368, %v4651, 0
      %v4741 = vsel %vm368, %v4659, 0
      %v4744 = vsel %vm368, %v4667, 0
      %v4747 = vsel %vm368, %v4675, 0
      %v4750 = vsel %vm368, %v4683, 0
      %v4753 = vsel %vm368, %v4691, 0
      %v4756 = vsel %vm368, %v4699, 0
      %v4759 = vsel %vm368, %v4707, 0
      %v4762 = vsel %vm368, %v4715, 0
      %v4765 = vsel %vm417, %v4500, 0
      %4767 = vmatprep.subr.bf16.mxu0 0
      %4768 = vmatpush1.bf16.msra.mxu0 %v4765
      %4769 = vmatprep.subr.bf16.mxu0 0
      %4770 = vmatpush1.bf16.msra.mxu0 0
      %4771 = vmatprep.subr.bf16.mxu0 0
      %4772 = vmatpush1.bf16.msra.mxu0 0
      %4773 = vmatprep.subr.bf16.mxu0 0
      %4774 = vmatpush1.bf16.msra.mxu0 0
      %4775 = vmatprep.subr.bf16.mxu0 0
      %4776 = vmatpush1.bf16.msra.mxu0 0
      %4777 = vmatprep.subr.bf16.mxu0 0
      %4778 = vmatpush1.bf16.msra.mxu0 0
      %4779 = vmatprep.subr.bf16.mxu0 0
      %4780 = vmatpush1.bf16.msra.mxu0 0
      %4781 = vmatprep.subr.bf16.mxu0 0
      %4782 = vmatpush1.bf16.msra.mxu0 0
      %4783 = vmatprep.subr.bf16.mxu0 0
      %4784 = vmatpush1.bf16.msra.mxu0 0
      %4785 = vmatprep.subr.bf16.mxu0 0
      %4786 = vmatpush1.bf16.msra.mxu0 0
      %4787 = vmatprep.subr.bf16.mxu0 0
      %4788 = vmatpush1.bf16.msra.mxu0 0
      %4789 = vmatprep.subr.bf16.mxu0 0
      %4790 = vmatpush1.bf16.msra.mxu0 0
      %4791 = vmatprep.subr.bf16.mxu0 0
      %4792 = vmatpush1.bf16.msra.mxu0 0
      %4793 = vmatprep.subr.bf16.mxu0 0
      %4794 = vmatpush1.bf16.msra.mxu0 0
      %4795 = vmatprep.subr.bf16.mxu0 0
      %4796 = vmatpush1.bf16.msra.mxu0 0
      %4797 = vmatprep.subr.bf16.mxu0 0
      %4798 = vmatpush1.bf16.msra.mxu0 0
      %4799 = vmatprep.mubr.bf16.mxu0 0
      %4800 = vmatmul.mubr.bf16.gmra.mrb[0].mxu0 %v4717
      %v4801 = vpop.f32.mrb[0].mxu0
      %v4802 = vadd.f32 0.0, %v4801
      %v4803 = vpop.f32.mrb[0].mxu0
      %v4804 = vpop.f32.mrb[0].mxu0
      %v4805 = vadd.f32 0.0, %v4804
      %v4806 = vpop.f32.mrb[0].mxu0
      %4807 = vmatprep.mubr.bf16.mxu0 0
      %4808 = vmatmul.mubr.bf16.gmra.mrb[0].mxu0 %v4720
      %v4809 = vpop.f32.mrb[0].mxu0
      %v4810 = vadd.f32 0.0, %v4809
      %v4811 = vpop.f32.mrb[0].mxu0
      %v4812 = vpop.f32.mrb[0].mxu0
      %v4813 = vadd.f32 0.0, %v4812
      %v4814 = vpop.f32.mrb[0].mxu0
      %4815 = vmatprep.mubr.bf16.mxu0 0
      %4816 = vmatmul.mubr.bf16.gmra.mrb[0].mxu0 %v4723
      %v4817 = vpop.f32.mrb[0].mxu0
      %v4818 = vadd.f32 0.0, %v4817
      %v4819 = vpop.f32.mrb[0].mxu0
      %v4820 = vpop.f32.mrb[0].mxu0
      %v4821 = vadd.f32 0.0, %v4820
      %v4822 = vpop.f32.mrb[0].mxu0
      %4823 = vmatprep.mubr.bf16.mxu0 0
      %4824 = vmatmul.mubr.bf16.gmra.mrb[0].mxu0 %v4726
      %v4825 = vpop.f32.mrb[0].mxu0
      %v4826 = vadd.f32 0.0, %v4825
      %v4827 = vpop.f32.mrb[0].mxu0
      %v4828 = vpop.f32.mrb[0].mxu0
      %v4829 = vadd.f32 0.0, %v4828
      %v4830 = vpop.f32.mrb[0].mxu0
      %4831 = vmatprep.mubr.bf16.mxu0 0
      %4832 = vmatmul.mubr.bf16.gmra.mrb[0].mxu0 %v4729
      %v4833 = vpop.f32.mrb[0].mxu0
      %v4834 = vadd.f32 0.0, %v4833
      %v4835 = vpop.f32.mrb[0].mxu0
      %v4836 = vpop.f32.mrb[0].mxu0
      %v4837 = vadd.f32 0.0, %v4836
      %v4838 = vpop.f32.mrb[0].mxu0
      %4839 = vmatprep.mubr.bf16.mxu0 0
      %4840 = vmatmul.mubr.bf16.gmra.mrb[0].mxu0 %v4732
      %v4841 = vpop.f32.mrb[0].mxu0
      %v4842 = vadd.f32 0.0, %v4841
      %v4843 = vpop.f32.mrb[0].mxu0
      %v4844 = vpop.f32.mrb[0].mxu0
      %v4845 = vadd.f32 0.0, %v4844
      %v4846 = vpop.f32.mrb[0].mxu0
      %4847 = vmatprep.mubr.bf16.mxu0 0
      %4848 = vmatmul.mubr.bf16.gmra.mrb[0].mxu0 %v4735
      %v4849 = vpop.f32.mrb[0].mxu0
      %v4850 = vadd.f32 0.0, %v4849
      %v4851 = vpop.f32.mrb[0].mxu0
      %v4852 = vpop.f32.mrb[0].mxu0
      %v4853 = vadd.f32 0.0, %v4852
      %v4854 = vpop.f32.mrb[0].mxu0
      %4855 = vmatprep.mubr.bf16.mxu0 0
      %4856 = vmatmul.mubr.bf16.gmra.mrb[0].mxu0 %v4738
      %v4857 = vpop.f32.mrb[0].mxu0
      %v4858 = vadd.f32 0.0, %v4857
      %v4859 = vpop.f32.mrb[0].mxu0
      %v4860 = vpop.f32.mrb[0].mxu0
      %v4861 = vadd.f32 0.0, %v4860
      %v4862 = vpop.f32.mrb[0].mxu0
      %4863 = vmatprep.mubr.bf16.mxu0 0
      %4864 = vmatmul.mubr.bf16.gmra.mrb[0].mxu0 %v4741
      %v4865 = vpop.f32.mrb[0].mxu0
      %v4866 = vadd.f32 0.0, %v4865
      %v4867 = vpop.f32.mrb[0].mxu0
      %v4868 = vpop.f32.mrb[0].mxu0
      %v4869 = vadd.f32 0.0, %v4868
      %v4870 = vpop.f32.mrb[0].mxu0
      %4871 = vmatprep.mubr.bf16.mxu0 0
      %4872 = vmatmul.mubr.bf16.gmra.mrb[0].mxu0 %v4744
      %v4873 = vpop.f32.mrb[0].mxu0
      %v4874 = vadd.f32 0.0, %v4873
      %v4875 = vpop.f32.mrb[0].mxu0
      %v4876 = vpop.f32.mrb[0].mxu0
      %v4877 = vadd.f32 0.0, %v4876
      %v4878 = vpop.f32.mrb[0].mxu0
      %4879 = vmatprep.mubr.bf16.mxu0 0
      %4880 = vmatmul.mubr.bf16.gmra.mrb[0].mxu0 %v4747
      %v4881 = vpop.f32.mrb[0].mxu0
      %v4882 = vadd.f32 0.0, %v4881
      %v4883 = vpop.f32.mrb[0].mxu0
      %v4884 = vpop.f32.mrb[0].mxu0
      %v4885 = vadd.f32 0.0, %v4884
      %v4886 = vpop.f32.mrb[0].mxu0
      %4887 = vmatprep.mubr.bf16.mxu0 0
      %4888 = vmatmul.mubr.bf16.gmra.mrb[0].mxu0 %v4750
      %v4889 = vpop.f32.mrb[0].mxu0
      %v4890 = vadd.f32 0.0, %v4889
      %v4891 = vpop.f32.mrb[0].mxu0
      %v4892 = vpop.f32.mrb[0].mxu0
      %v4893 = vadd.f32 0.0, %v4892
      %v4894 = vpop.f32.mrb[0].mxu0
      %4895 = vmatprep.mubr.bf16.mxu0 0
      %4896 = vmatmul.mubr.bf16.gmra.mrb[0].mxu0 %v4753
      %v4897 = vpop.f32.mrb[0].mxu0
      %v4898 = vadd.f32 0.0, %v4897
      %v4899 = vpop.f32.mrb[0].mxu0
      %v4900 = vpop.f32.mrb[0].mxu0
      %v4901 = vadd.f32 0.0, %v4900
      %v4902 = vpop.f32.mrb[0].mxu0
      %4903 = vmatprep.mubr.bf16.mxu0 0
      %4904 = vmatmul.mubr.bf16.gmra.mrb[0].mxu0 %v4756
      %v4905 = vpop.f32.mrb[0].mxu0
      %v4906 = vadd.f32 0.0, %v4905
      %v4907 = vpop.f32.mrb[0].mxu0
      %v4908 = vpop.f32.mrb[0].mxu0
      %v4909 = vadd.f32 0.0, %v4908
      %v4910 = vpop.f32.mrb[0].mxu0
      %4911 = vmatprep.mubr.bf16.mxu0 0
      %4912 = vmatmul.mubr.bf16.gmra.mrb[0].mxu0 %v4759
      %v4913 = vpop.f32.mrb[0].mxu0
      %v4914 = vadd.f32 0.0, %v4913
      %v4915 = vpop.f32.mrb[0].mxu0
      %v4916 = vpop.f32.mrb[0].mxu0
      %v4917 = vadd.f32 0.0, %v4916
      %v4918 = vpop.f32.mrb[0].mxu0
      %4919 = vmatprep.mubr.bf16.mxu0 0
      %4920 = vmatmul.mubr.bf16.gmra.mrb[0].mxu0 %v4762
      %v4921 = vpop.f32.mrb[0].mxu0
      %v4922 = vadd.f32 0.0, %v4921
      %v4923 = vpop.f32.mrb[0].mxu0
      %v4924 = vpop.f32.mrb[0].mxu0
      %v4925 = vadd.f32 0.0, %v4924
      %v4926 = vpop.f32.mrb[0].mxu0
      %4927 = vdwg.mxu0
      %v4928 = vadd.f32 %v4434, %v4802
      %v4929 = vadd.f32 %v4435, %v4805
      %v4930 = vadd.f32 %v4436, %v4810
      %v4931 = vadd.f32 %v4437, %v4813
      %v4932 = vadd.f32 %v4438, %v4818
      %v4933 = vadd.f32 %v4439, %v4821
      %v4934 = vadd.f32 %v4440, %v4826
      %v4935 = vadd.f32 %v4441, %v4829
      %v4936 = vadd.f32 %v4442, %v4834
      %v4937 = vadd.f32 %v4443, %v4837
      %v4938 = vadd.f32 %v4444, %v4842
      %v4939 = vadd.f32 %v4445, %v4845
      %v4940 = vadd.f32 %v4446, %v4850
      %v4941 = vadd.f32 %v4447, %v4853
      %v4942 = vadd.f32 %v4448, %v4858
      %v4943 = vadd.f32 %v4449, %v4861
      %v4944 = vadd.f32 %v4450, %v4866
      %v4945 = vadd.f32 %v4451, %v4869
      %v4946 = vadd.f32 %v4452, %v4874
      %v4947 = vadd.f32 %v4453, %v4877
      %v4948 = vadd.f32 %v4454, %v4882
      %v4949 = vadd.f32 %v4455, %v4885
      %v4950 = vadd.f32 %v4456, %v4890
      %v4951 = vadd.f32 %v4457, %v4893
      %v4952 = vadd.f32 %v4458, %v4898
      %v4953 = vadd.f32 %v4459, %v4901
      %v4954 = vadd.f32 %v4460, %v4906
      %v4955 = vadd.f32 %v4461, %v4909
      %v4956 = vadd.f32 %v4462, %v4914
      %v4957 = vadd.f32 %v4463, %v4917
      %v4958 = vadd.f32 %v4464, %v4922
      %v4959 = vadd.f32 %v4465, %v4925
      %v4960 = vld [vmem:[%s239 + $0x10] sm:$0xe]
      %v4961 = vsel %vm2367, 0, %v4960
      %v4962 = vsel %vm2368, 0, %v4467
      %v4963 = vsel %vm2369, 0, %v4468
      %v4964 = vsel %vm2370, 0, %v4469
      %v4965 = vsel %vm2371, 0, %v4470
      %v4966 = vsel %vm2372, 0, %v4471
      %v4967 = vsel %vm2373, 0, %v4472
      %v4968 = vsel %vm2374, 0, %v4473
      %v4969 = vsel %vm2375, 0, %v4474
      %v4970 = vsel %vm2376, 0, %v4475
      %v4971 = vsel %vm2377, 0, %v4476
      %v4972 = vsel %vm2378, 0, %v4477
      %v4973 = vsel %vm2379, 0, %v4478
      %v4974 = vsel %vm2380, 0, %v4479
      %v4975 = vsel %vm2381, 0, %v4480
      %v4976 = vsel %vm2382, 0, %v4481
      %v4977 = vsel %vm2383, 0, %v4482
      %v4978 = vsel %vm2384, 0, %v4483
      %v4979 = vsel %vm2385, 0, %v4484
      %v4980 = vsel %vm2386, 0, %v4485
      %v4981 = vsel %vm2387, 0, %v4486
      %v4982 = vsel %vm2388, 0, %v4487
      %v4983 = vsel %vm2389, 0, %v4488
      %v4984 = vsel %vm2390, 0, %v4489
      %v4985 = vsel %vm2391, 0, %v4490
      %v4986 = vsel %vm2392, 0, %v4491
      %v4987 = vsel %vm2393, 0, %v4492
      %v4988 = vsel %vm2394, 0, %v4493
      %v4989 = vsel %vm2395, 0, %v4494
      %v4990 = vsel %vm2396, 0, %v4495
      %v4991 = vsel %vm2397, 0, %v4496
      %v4992 = vsel %vm2398, 0, %v4497
      %v4993 = vsel %vm2399, 0, %v4498
      %s4994 = scalar_lea.vmem %s3, 32
      %v4995 = vld [vmem:[%s4994] sm:$0xf]
      %v5029 = vunpack.c.l.b16 %v4961
      %v5030 = vunpack.c.l.b16 %v4962
      %v5031 = vunpack.c.l.b16 %v4963
      %v5032 = vunpack.c.l.b16 %v4964
      %v5033 = vunpack.c.l.b16 %v4965
      %v5034 = vunpack.c.l.b16 %v4966
      %v5035 = vunpack.c.l.b16 %v4967
      %v5036 = vunpack.c.l.b16 %v4968
      %v5037 = vunpack.c.l.b16 %v4969
      %v5038 = vunpack.c.l.b16 %v4970
      %v5039 = vunpack.c.l.b16 %v4971
      %v5040 = vunpack.c.l.b16 %v4972
      %v5041 = vunpack.c.l.b16 %v4973
      %v5042 = vunpack.c.l.b16 %v4974
      %v5043 = vunpack.c.l.b16 %v4975
      %v5044 = vunpack.c.l.b16 %v4976
      %v5045 = vunpack.c.l.b16 %v4977
      %v5046 = vunpack.c.l.b16 %v4978
      %v5047 = vunpack.c.l.b16 %v4979
      %v5048 = vunpack.c.l.b16 %v4980
      %v5049 = vunpack.c.l.b16 %v4981
      %v5050 = vunpack.c.l.b16 %v4982
      %v5051 = vunpack.c.l.b16 %v4983
      %v5052 = vunpack.c.l.b16 %v4984
      %v5053 = vunpack.c.l.b16 %v4985
      %v5054 = vunpack.c.l.b16 %v4986
      %v5055 = vunpack.c.l.b16 %v4987
      %v5056 = vunpack.c.l.b16 %v4988
      %v5057 = vunpack.c.l.b16 %v4989
      %v5058 = vunpack.c.l.b16 %v4990
      %v5059 = vunpack.c.l.b16 %v4991
      %v5060 = vunpack.c.l.b16 %v4992
      %v5061 = vunpack.c.l.b16 %v4993
      %v5062 = vpack.c.b16 %v5030, %v5029
      %v5063 = vpack.c.b16 %v5032, %v5031
      %v5064 = vpack.c.b16 %v5034, %v5033
      %v5065 = vpack.c.b16 %v5036, %v5035
      %v5066 = vpack.c.b16 %v5038, %v5037
      %v5067 = vpack.c.b16 %v5040, %v5039
      %v5068 = vpack.c.b16 %v5042, %v5041
      %v5069 = vpack.c.b16 %v5044, %v5043
      %v5070 = vpack.c.b16 %v5046, %v5045
      %v5071 = vpack.c.b16 %v5048, %v5047
      %v5072 = vpack.c.b16 %v5050, %v5049
      %v5073 = vpack.c.b16 %v5052, %v5051
      %v5074 = vpack.c.b16 %v5054, %v5053
      %v5075 = vpack.c.b16 %v5056, %v5055
      %v5076 = vpack.c.b16 %v5058, %v5057
      %v5077 = vpack.c.b16 %v5060, %v5059
      %v5078 = vpack.c.b16 %v5061, %v5061
      %v5079 = vrot.slane %v5062, 1
      %v5080 = vrot.slane %v5063, 1
      %v5081 = vsel %vm2518, %v5079, %v5080
      %v5082 = vrot.slane %v5064, 1
      %v5083 = vsel %vm2518, %v5080, %v5082
      %v5084 = vrot.slane %v5065, 1
      %v5085 = vsel %vm2518, %v5082, %v5084
      %v5086 = vrot.slane %v5066, 1
      %v5087 = vsel %vm2518, %v5084, %v5086
      %v5088 = vrot.slane %v5067, 1
      %v5089 = vsel %vm2518, %v5086, %v5088
      %v5090 = vrot.slane %v5068, 1
      %v5091 = vsel %vm2518, %v5088, %v5090
      %v5092 = vrot.slane %v5069, 1
      %v5093 = vsel %vm2518, %v5090, %v5092
      %v5094 = vrot.slane %v5070, 1
      %v5095 = vsel %vm2518, %v5092, %v5094
      %v5096 = vrot.slane %v5071, 1
      %v5097 = vsel %vm2518, %v5094, %v5096
      %v5098 = vrot.slane %v5072, 1
      %v5099 = vsel %vm2518, %v5096, %v5098
      %v5100 = vrot.slane %v5073, 1
      %v5101 = vsel %vm2518, %v5098, %v5100
      %v5102 = vrot.slane %v5074, 1
      %v5103 = vsel %vm2518, %v5100, %v5102
      %v5104 = vrot.slane %v5075, 1
      %v5105 = vsel %vm2518, %v5102, %v5104
      %v5106 = vrot.slane %v5076, 1
      %v5107 = vsel %vm2518, %v5104, %v5106
      %v5108 = vrot.slane %v5077, 1
      %v5109 = vsel %vm2518, %v5106, %v5108
      %v5110 = vrot.slane %v5078, 1
      %v5111 = vsel %vm2518, %v5108, %v5110
      %v5113 = vsel %vm368, %v5081, 0
      %v5116 = vsel %vm368, %v5083, 0
      %v5119 = vsel %vm368, %v5085, 0
      %v5122 = vsel %vm368, %v5087, 0
      %v5125 = vsel %vm368, %v5089, 0
      %v5128 = vsel %vm368, %v5091, 0
      %v5131 = vsel %vm368, %v5093, 0
      %v5134 = vsel %vm368, %v5095, 0
      %v5137 = vsel %vm368, %v5097, 0
      %v5140 = vsel %vm368, %v5099, 0
      %v5143 = vsel %vm368, %v5101, 0
      %v5146 = vsel %vm368, %v5103, 0
      %v5149 = vsel %vm368, %v5105, 0
      %v5152 = vsel %vm368, %v5107, 0
      %v5155 = vsel %vm368, %v5109, 0
      %v5158 = vsel %vm368, %v5111, 0
      %v5161 = vsel %vm417, %v4995, 0
      %5163 = vmatprep.subr.bf16.mxu0 0
      %5164 = vmatpush1.bf16.msra.mxu0 %v5161
      %5165 = vmatprep.subr.bf16.mxu0 0
      %5166 = vmatpush1.bf16.msra.mxu0 0
      %5167 = vmatprep.subr.bf16.mxu0 0
      %5168 = vmatpush1.bf16.msra.mxu0 0
      %5169 = vmatprep.subr.bf16.mxu0 0
      %5170 = vmatpush1.bf16.msra.mxu0 0
      %5171 = vmatprep.subr.bf16.mxu0 0
      %5172 = vmatpush1.bf16.msra.mxu0 0
      %5173 = vmatprep.subr.bf16.mxu0 0
      %5174 = vmatpush1.bf16.msra.mxu0 0
      %5175 = vmatprep.subr.bf16.mxu0 0
      %5176 = vmatpush1.bf16.msra.mxu0 0
      %5177 = vmatprep.subr.bf16.mxu0 0
      %5178 = vmatpush1.bf16.msra.mxu0 0
      %5179 = vmatprep.subr.bf16.mxu0 0
      %5180 = vmatpush1.bf16.msra.mxu0 0
      %5181 = vmatprep.subr.bf16.mxu0 0
      %5182 = vmatpush1.bf16.msra.mxu0 0
      %5183 = vmatprep.subr.bf16.mxu0 0
      %5184 = vmatpush1.bf16.msra.mxu0 0
      %5185 = vmatprep.subr.bf16.mxu0 0
      %5186 = vmatpush1.bf16.msra.mxu0 0
      %5187 = vmatprep.subr.bf16.mxu0 0
      %5188 = vmatpush1.bf16.msra.mxu0 0
      %5189 = vmatprep.subr.bf16.mxu0 0
      %5190 = vmatpush1.bf16.msra.mxu0 0
      %5191 = vmatprep.subr.bf16.mxu0 0
      %5192 = vmatpush1.bf16.msra.mxu0 0
      %5193 = vmatprep.subr.bf16.mxu0 0
      %5194 = vmatpush1.bf16.msra.mxu0 0
      %5195 = vmatprep.mubr.bf16.mxu0 0
      %5196 = vmatmul.mubr.bf16.gmra.mrb[0].mxu0 %v5113
      %v5197 = vpop.f32.mrb[0].mxu0
      %v5198 = vadd.f32 0.0, %v5197
      %v5199 = vpop.f32.mrb[0].mxu0
      %v5200 = vpop.f32.mrb[0].mxu0
      %v5201 = vadd.f32 0.0, %v5200
      %v5202 = vpop.f32.mrb[0].mxu0
      %5203 = vmatprep.mubr.bf16.mxu0 0
      %5204 = vmatmul.mubr.bf16.gmra.mrb[0].mxu0 %v5116
      %v5205 = vpop.f32.mrb[0].mxu0
      %v5206 = vadd.f32 0.0, %v5205
      %v5207 = vpop.f32.mrb[0].mxu0
      %v5208 = vpop.f32.mrb[0].mxu0
      %v5209 = vadd.f32 0.0, %v5208
      %v5210 = vpop.f32.mrb[0].mxu0
      %5211 = vmatprep.mubr.bf16.mxu0 0
      %5212 = vmatmul.mubr.bf16.gmra.mrb[0].mxu0 %v5119
      %v5213 = vpop.f32.mrb[0].mxu0
      %v5214 = vadd.f32 0.0, %v5213
      %v5215 = vpop.f32.mrb[0].mxu0
      %v5216 = vpop.f32.mrb[0].mxu0
      %v5217 = vadd.f32 0.0, %v5216
      %v5218 = vpop.f32.mrb[0].mxu0
      %5219 = vmatprep.mubr.bf16.mxu0 0
      %5220 = vmatmul.mubr.bf16.gmra.mrb[0].mxu0 %v5122
      %v5221 = vpop.f32.mrb[0].mxu0
      %v5222 = vadd.f32 0.0, %v5221
      %v5223 = vpop.f32.mrb[0].mxu0
      %v5224 = vpop.f32.mrb[0].mxu0
      %v5225 = vadd.f32 0.0, %v5224
      %v5226 = vpop.f32.mrb[0].mxu0
      %5227 = vmatprep.mubr.bf16.mxu0 0
      %5228 = vmatmul.mubr.bf16.gmra.mrb[0].mxu0 %v5125
      %v5229 = vpop.f32.mrb[0].mxu0
      %v5230 = vadd.f32 0.0, %v5229
      %v5231 = vpop.f32.mrb[0].mxu0
      %v5232 = vpop.f32.mrb[0].mxu0
      %v5233 = vadd.f32 0.0, %v5232
      %v5234 = vpop.f32.mrb[0].mxu0
      %5235 = vmatprep.mubr.bf16.mxu0 0
      %5236 = vmatmul.mubr.bf16.gmra.mrb[0].mxu0 %v5128
      %v5237 = vpop.f32.mrb[0].mxu0
      %v5238 = vadd.f32 0.0, %v5237
      %v5239 = vpop.f32.mrb[0].mxu0
      %v5240 = vpop.f32.mrb[0].mxu0
      %v5241 = vadd.f32 0.0, %v5240
      %v5242 = vpop.f32.mrb[0].mxu0
      %5243 = vmatprep.mubr.bf16.mxu0 0
      %5244 = vmatmul.mubr.bf16.gmra.mrb[0].mxu0 %v5131
      %v5245 = vpop.f32.mrb[0].mxu0
      %v5246 = vadd.f32 0.0, %v5245
      %v5247 = vpop.f32.mrb[0].mxu0
      %v5248 = vpop.f32.mrb[0].mxu0
      %v5249 = vadd.f32 0.0, %v5248
      %v5250 = vpop.f32.mrb[0].mxu0
      %5251 = vmatprep.mubr.bf16.mxu0 0
      %5252 = vmatmul.mubr.bf16.gmra.mrb[0].mxu0 %v5134
      %v5253 = vpop.f32.mrb[0].mxu0
      %v5254 = vadd.f32 0.0, %v5253
      %v5255 = vpop.f32.mrb[0].mxu0
      %v5256 = vpop.f32.mrb[0].mxu0
      %v5257 = vadd.f32 0.0, %v5256
      %v5258 = vpop.f32.mrb[0].mxu0
      %5259 = vmatprep.mubr.bf16.mxu0 0
      %5260 = vmatmul.mubr.bf16.gmra.mrb[0].mxu0 %v5137
      %v5261 = vpop.f32.mrb[0].mxu0
      %v5262 = vadd.f32 0.0, %v5261
      %v5263 = vpop.f32.mrb[0].mxu0
      %v5264 = vpop.f32.mrb[0].mxu0
      %v5265 = vadd.f32 0.0, %v5264
      %v5266 = vpop.f32.mrb[0].mxu0
      %5267 = vmatprep.mubr.bf16.mxu0 0
      %5268 = vmatmul.mubr.bf16.gmra.mrb[0].mxu0 %v5140
      %v5269 = vpop.f32.mrb[0].mxu0
      %v5270 = vadd.f32 0.0, %v5269
      %v5271 = vpop.f32.mrb[0].mxu0
      %v5272 = vpop.f32.mrb[0].mxu0
      %v5273 = vadd.f32 0.0, %v5272
      %v5274 = vpop.f32.mrb[0].mxu0
      %5275 = vmatprep.mubr.bf16.mxu0 0
      %5276 = vmatmul.mubr.bf16.gmra.mrb[0].mxu0 %v5143
      %v5277 = vpop.f32.mrb[0].mxu0
      %v5278 = vadd.f32 0.0, %v5277
      %v5279 = vpop.f32.mrb[0].mxu0
      %v5280 = vpop.f32.mrb[0].mxu0
      %v5281 = vadd.f32 0.0, %v5280
      %v5282 = vpop.f32.mrb[0].mxu0
      %5283 = vmatprep.mubr.bf16.mxu0 0
      %5284 = vmatmul.mubr.bf16.gmra.mrb[0].mxu0 %v5146
      %v5285 = vpop.f32.mrb[0].mxu0
      %v5286 = vadd.f32 0.0, %v5285
      %v5287 = vpop.f32.mrb[0].mxu0
      %v5288 = vpop.f32.mrb[0].mxu0
      %v5289 = vadd.f32 0.0, %v5288
      %v5290 = vpop.f32.mrb[0].mxu0
      %5291 = vmatprep.mubr.bf16.mxu0 0
      %5292 = vmatmul.mubr.bf16.gmra.mrb[0].mxu0 %v5149
      %v5293 = vpop.f32.mrb[0].mxu0
      %v5294 = vadd.f32 0.0, %v5293
      %v5295 = vpop.f32.mrb[0].mxu0
      %v5296 = vpop.f32.mrb[0].mxu0
      %v5297 = vadd.f32 0.0, %v5296
      %v5298 = vpop.f32.mrb[0].mxu0
      %5299 = vmatprep.mubr.bf16.mxu0 0
      %5300 = vmatmul.mubr.bf16.gmra.mrb[0].mxu0 %v5152
      %v5301 = vpop.f32.mrb[0].mxu0
      %v5302 = vadd.f32 0.0, %v5301
      %v5303 = vpop.f32.mrb[0].mxu0
      %v5304 = vpop.f32.mrb[0].mxu0
      %v5305 = vadd.f32 0.0, %v5304
      %v5306 = vpop.f32.mrb[0].mxu0
      %5307 = vmatprep.mubr.bf16.mxu0 0
      %5308 = vmatmul.mubr.bf16.gmra.mrb[0].mxu0 %v5155
      %v5309 = vpop.f32.mrb[0].mxu0
      %v5310 = vadd.f32 0.0, %v5309
      %v5311 = vpop.f32.mrb[0].mxu0
      %v5312 = vpop.f32.mrb[0].mxu0
      %v5313 = vadd.f32 0.0, %v5312
      %v5314 = vpop.f32.mrb[0].mxu0
      %5315 = vmatprep.mubr.bf16.mxu0 0
      %5316 = vmatmul.mubr.bf16.gmra.mrb[0].mxu0 %v5158
      %v5317 = vpop.f32.mrb[0].mxu0
      %v5318 = vadd.f32 0.0, %v5317
      %v5319 = vpop.f32.mrb[0].mxu0
      %v5320 = vpop.f32.mrb[0].mxu0
      %v5321 = vadd.f32 0.0, %v5320
      %v5322 = vpop.f32.mrb[0].mxu0
      %5323 = vdwg.mxu0
      %v5324 = vadd.f32 %v4928, %v5198
      %v5325 = vadd.f32 %v4929, %v5201
      %v5326 = vadd.f32 %v4930, %v5206
      %v5327 = vadd.f32 %v4931, %v5209
      %v5328 = vadd.f32 %v4932, %v5214
      %v5329 = vadd.f32 %v4933, %v5217
      %v5330 = vadd.f32 %v4934, %v5222
      %v5331 = vadd.f32 %v4935, %v5225
      %v5332 = vadd.f32 %v4936, %v5230
      %v5333 = vadd.f32 %v4937, %v5233
      %v5334 = vadd.f32 %v4938, %v5238
      %v5335 = vadd.f32 %v4939, %v5241
      %v5336 = vadd.f32 %v4940, %v5246
      %v5337 = vadd.f32 %v4941, %v5249
      %v5338 = vadd.f32 %v4942, %v5254
      %v5339 = vadd.f32 %v4943, %v5257
      %v5340 = vadd.f32 %v4944, %v5262
      %v5341 = vadd.f32 %v4945, %v5265
      %v5342 = vadd.f32 %v4946, %v5270
      %v5343 = vadd.f32 %v4947, %v5273
      %v5344 = vadd.f32 %v4948, %v5278
      %v5345 = vadd.f32 %v4949, %v5281
      %v5346 = vadd.f32 %v4950, %v5286
      %v5347 = vadd.f32 %v4951, %v5289
      %v5348 = vadd.f32 %v4952, %v5294
      %v5349 = vadd.f32 %v4953, %v5297
      %v5350 = vadd.f32 %v4954, %v5302
      %v5351 = vadd.f32 %v4955, %v5305
      %v5352 = vadd.f32 %v4956, %v5310
      %v5353 = vadd.f32 %v4957, %v5313
      %v5354 = vadd.f32 %v4958, %v5318
      %v5355 = vadd.f32 %v4959, %v5321
      %v5356 = vld [vmem:[%s4] sm:$0x1]
      %v5358 = vlaneseq
      %v5359 = vshrl.u32 %v5358, 7
      %v5360 = vsub.s32 0, %v5359
      %v5361 = vrot.slane %v5356, %v5360
      %5362 = vrot.lane.b32.xlu0 %v5361, 120
      %v5363 = vpop.permute.xlu0 %5362
      %v5365 = vadd.f32 %v5324, %v5363
      %v5366 = vadd.f32 %v5325, %v5363
      %v5367 = vadd.f32 %v5326, %v5363
      %v5368 = vadd.f32 %v5327, %v5363
      %v5369 = vadd.f32 %v5328, %v5363
      %v5370 = vadd.f32 %v5329, %v5363
      %v5371 = vadd.f32 %v5330, %v5363
      %v5372 = vadd.f32 %v5331, %v5363
      %v5373 = vadd.f32 %v5332, %v5363
      %v5374 = vadd.f32 %v5333, %v5363
      %v5375 = vadd.f32 %v5334, %v5363
      %v5376 = vadd.f32 %v5335, %v5363
      %v5377 = vadd.f32 %v5336, %v5363
      %v5378 = vadd.f32 %v5337, %v5363
      %v5379 = vadd.f32 %v5338, %v5363
      %v5380 = vadd.f32 %v5339, %v5363
      %v5381 = vadd.f32 %v5340, %v5363
      %v5382 = vadd.f32 %v5341, %v5363
      %v5383 = vadd.f32 %v5342, %v5363
      %v5384 = vadd.f32 %v5343, %v5363
      %v5385 = vadd.f32 %v5344, %v5363
      %v5386 = vadd.f32 %v5345, %v5363
      %v5387 = vadd.f32 %v5346, %v5363
      %v5388 = vadd.f32 %v5347, %v5363
      %v5389 = vadd.f32 %v5348, %v5363
      %v5390 = vadd.f32 %v5349, %v5363
      %v5391 = vadd.f32 %v5350, %v5363
      %v5392 = vadd.f32 %v5351, %v5363
      %v5393 = vadd.f32 %v5352, %v5363
      %v5394 = vadd.f32 %v5353, %v5363
      %v5395 = vadd.f32 %v5354, %v5363
      %v5396 = vadd.f32 %v5355, %v5363
      %v5397 = vmax.f32 %v5365, 0.0
      %v5398 = vmax.f32 %v5366, 0.0
      %v5399 = vmax.f32 %v5367, 0.0
      %v5400 = vmax.f32 %v5368, 0.0
      %v5401 = vmax.f32 %v5369, 0.0
      %v5402 = vmax.f32 %v5370, 0.0
      %v5403 = vmax.f32 %v5371, 0.0
      %v5404 = vmax.f32 %v5372, 0.0
      %v5405 = vmax.f32 %v5373, 0.0
      %v5406 = vmax.f32 %v5374, 0.0
      %v5407 = vmax.f32 %v5375, 0.0
      %v5408 = vmax.f32 %v5376, 0.0
      %v5409 = vmax.f32 %v5377, 0.0
      %v5410 = vmax.f32 %v5378, 0.0
      %v5411 = vmax.f32 %v5379, 0.0
      %v5412 = vmax.f32 %v5380, 0.0
      %v5413 = vmax.f32 %v5381, 0.0
      %v5414 = vmax.f32 %v5382, 0.0
      %v5415 = vmax.f32 %v5383, 0.0
      %v5416 = vmax.f32 %v5384, 0.0
      %v5417 = vmax.f32 %v5385, 0.0
      %v5418 = vmax.f32 %v5386, 0.0
      %v5419 = vmax.f32 %v5387, 0.0
      %v5420 = vmax.f32 %v5388, 0.0
      %v5421 = vmax.f32 %v5389, 0.0
      %v5422 = vmax.f32 %v5390, 0.0
      %v5423 = vmax.f32 %v5391, 0.0
      %v5424 = vmax.f32 %v5392, 0.0
      %v5425 = vmax.f32 %v5393, 0.0
      %v5426 = vmax.f32 %v5394, 0.0
      %v5427 = vmax.f32 %v5395, 0.0
      %v5428 = vmax.f32 %v5396, 0.0
      %v5429 = vpack.c.bf16 %v5398, %v5397
      %v5430 = vpack.c.bf16 %v5400, %v5399
      %v5431 = vpack.c.bf16 %v5402, %v5401
      %v5432 = vpack.c.bf16 %v5404, %v5403
      %v5433 = vpack.c.bf16 %v5406, %v5405
      %v5434 = vpack.c.bf16 %v5408, %v5407
      %v5435 = vpack.c.bf16 %v5410, %v5409
      %v5436 = vpack.c.bf16 %v5412, %v5411
      %v5437 = vpack.c.bf16 %v5414, %v5413
      %v5438 = vpack.c.bf16 %v5416, %v5415
      %v5439 = vpack.c.bf16 %v5418, %v5417
      %v5440 = vpack.c.bf16 %v5420, %v5419
      %v5441 = vpack.c.bf16 %v5422, %v5421
      %v5442 = vpack.c.bf16 %v5424, %v5423
      %v5443 = vpack.c.bf16 %v5426, %v5425
      %v5444 = vpack.c.bf16 %v5428, %v5427
      %v5461 = vunpack.c.l.b16 %v5429
      %v5462 = vunpack.c.h.b16 %v5429
      %v5463 = vunpack.c.l.b16 %v5430
      %v5464 = vunpack.c.h.b16 %v5430
      %v5465 = vunpack.c.l.b16 %v5431
      %v5466 = vunpack.c.h.b16 %v5431
      %v5467 = vunpack.c.l.b16 %v5432
      %v5468 = vunpack.c.h.b16 %v5432
      %v5469 = vunpack.c.l.b16 %v5433
      %v5470 = vunpack.c.h.b16 %v5433
      %v5471 = vunpack.c.l.b16 %v5434
      %v5472 = vunpack.c.h.b16 %v5434
      %v5473 = vunpack.c.l.b16 %v5435
      %v5474 = vunpack.c.h.b16 %v5435
      %v5475 = vunpack.c.l.b16 %v5436
      %v5476 = vunpack.c.h.b16 %v5436
      %v5477 = vunpack.c.l.b16 %v5437
      %v5478 = vunpack.c.h.b16 %v5437
      %v5479 = vunpack.c.l.b16 %v5438
      %v5480 = vunpack.c.h.b16 %v5438
      %v5481 = vunpack.c.l.b16 %v5439
      %v5482 = vunpack.c.h.b16 %v5439
      %v5483 = vunpack.c.l.b16 %v5440
      %v5484 = vunpack.c.h.b16 %v5440
      %v5485 = vunpack.c.l.b16 %v5441
      %v5486 = vunpack.c.h.b16 %v5441
      %v5487 = vunpack.c.l.b16 %v5442
      %v5488 = vunpack.c.h.b16 %v5442
      %v5489 = vunpack.c.l.b16 %v5443
      %v5490 = vunpack.c.h.b16 %v5443
      %v5491 = vunpack.c.l.b16 %v5444
      %v5492 = vunpack.c.h.b16 %v5444
      %v5493 = vpack.c.b16 %v5461, %v5461
      %v5494 = vpack.c.b16 %v5462, %v5462
      %v5495 = vpack.c.b16 %v5463, %v5463
      %v5496 = vpack.c.b16 %v5464, %v5464
      %v5497 = vpack.c.b16 %v5465, %v5465
      %v5498 = vpack.c.b16 %v5466, %v5466
      %v5499 = vpack.c.b16 %v5467, %v5467
      %v5500 = vpack.c.b16 %v5468, %v5468
      %v5501 = vpack.c.b16 %v5469, %v5469
      %v5502 = vpack.c.b16 %v5470, %v5470
      %v5503 = vpack.c.b16 %v5471, %v5471
      %v5504 = vpack.c.b16 %v5472, %v5472
      %v5505 = vpack.c.b16 %v5473, %v5473
      %v5506 = vpack.c.b16 %v5474, %v5474
      %v5507 = vpack.c.b16 %v5475, %v5475
      %v5508 = vpack.c.b16 %v5476, %v5476
      %v5509 = vpack.c.b16 %v5477, %v5477
      %v5510 = vpack.c.b16 %v5478, %v5478
      %v5511 = vpack.c.b16 %v5479, %v5479
      %v5512 = vpack.c.b16 %v5480, %v5480
      %v5513 = vpack.c.b16 %v5481, %v5481
      %v5514 = vpack.c.b16 %v5482, %v5482
      %v5515 = vpack.c.b16 %v5483, %v5483
      %v5516 = vpack.c.b16 %v5484, %v5484
      %v5517 = vpack.c.b16 %v5485, %v5485
      %v5518 = vpack.c.b16 %v5486, %v5486
      %v5519 = vpack.c.b16 %v5487, %v5487
      %v5520 = vpack.c.b16 %v5488, %v5488
      %v5521 = vpack.c.b16 %v5489, %v5489
      %v5522 = vpack.c.b16 %v5490, %v5490
      %v5523 = vpack.c.b16 %v5491, %v5491
      %v5524 = vpack.c.b16 %v5492, %v5492
      %5525 = vrot.lane.b32.xlu0 %v5493, 8
      %v5526 = vpop.permute.xlu0 %5525
      %5527 = vrot.lane.b32.xlu0 %v5494, 8
      %v5528 = vpop.permute.xlu0 %5527
      %5529 = vrot.lane.b32.xlu0 %v5495, 8
      %v5530 = vpop.permute.xlu0 %5529
      %5531 = vrot.lane.b32.xlu0 %v5496, 8
      %v5532 = vpop.permute.xlu0 %5531
      %5533 = vrot.lane.b32.xlu0 %v5497, 8
      %v5534 = vpop.permute.xlu0 %5533
      %5535 = vrot.lane.b32.xlu0 %v5498, 8
      %v5536 = vpop.permute.xlu0 %5535
      %5537 = vrot.lane.b32.xlu0 %v5499, 8
      %v5538 = vpop.permute.xlu0 %5537
      %5539 = vrot.lane.b32.xlu0 %v5500, 8
      %v5540 = vpop.permute.xlu0 %5539
      %5541 = vrot.lane.b32.xlu0 %v5501, 8
      %v5542 = vpop.permute.xlu0 %5541
      %5543 = vrot.lane.b32.xlu0 %v5502, 8
      %v5544 = vpop.permute.xlu0 %5543
      %5545 = vrot.lane.b32.xlu0 %v5503, 8
      %v5546 = vpop.permute.xlu0 %5545
      %5547 = vrot.lane.b32.xlu0 %v5504, 8
      %v5548 = vpop.permute.xlu0 %5547
      %5549 = vrot.lane.b32.xlu0 %v5505, 8
      %v5550 = vpop.permute.xlu0 %5549
      %5551 = vrot.lane.b32.xlu0 %v5506, 8
      %v5552 = vpop.permute.xlu0 %5551
      %5553 = vrot.lane.b32.xlu0 %v5507, 8
      %v5554 = vpop.permute.xlu0 %5553
      %5555 = vrot.lane.b32.xlu0 %v5508, 8
      %v5556 = vpop.permute.xlu0 %5555
      %5557 = vrot.lane.b32.xlu0 %v5509, 8
      %v5558 = vpop.permute.xlu0 %5557
      %5559 = vrot.lane.b32.xlu0 %v5510, 8
      %v5560 = vpop.permute.xlu0 %5559
      %5561 = vrot.lane.b32.xlu0 %v5511, 8
      %v5562 = vpop.permute.xlu0 %5561
      %5563 = vrot.lane.b32.xlu0 %v5512, 8
      %v5564 = vpop.permute.xlu0 %5563
      %5565 = vrot.lane.b32.xlu0 %v5513, 8
      %v5566 = vpop.permute.xlu0 %5565
      %5567 = vrot.lane.b32.xlu0 %v5514, 8
      %v5568 = vpop.permute.xlu0 %5567
      %5569 = vrot.lane.b32.xlu0 %v5515, 8
      %v5570 = vpop.permute.xlu0 %5569
      %5571 = vrot.lane.b32.xlu0 %v5516, 8
      %v5572 = vpop.permute.xlu0 %5571
      %5573 = vrot.lane.b32.xlu0 %v5517, 8
      %v5574 = vpop.permute.xlu0 %5573
      %5575 = vrot.lane.b32.xlu0 %v5518, 8
      %v5576 = vpop.permute.xlu0 %5575
      %5577 = vrot.lane.b32.xlu0 %v5519, 8
      %v5578 = vpop.permute.xlu0 %5577
      %5579 = vrot.lane.b32.xlu0 %v5520, 8
      %v5580 = vpop.permute.xlu0 %5579
      %5581 = vrot.lane.b32.xlu0 %v5521, 8
      %v5582 = vpop.permute.xlu0 %5581
      %5583 = vrot.lane.b32.xlu0 %v5522, 8
      %v5584 = vpop.permute.xlu0 %5583
      %5585 = vrot.lane.b32.xlu0 %v5523, 8
      %v5586 = vpop.permute.xlu0 %5585
      %5587 = vrot.lane.b32.xlu0 %v5524, 8
      %v5588 = vpop.permute.xlu0 %5587
      %vm5621 = vcmask 126016
      %5622 = vst.msk [vmem:[%s244] sm:$0xf] %vm5621, %v5526
      %5623 = vst.msk [vmem:[%s244 + $0x4] sm:$0xf] %vm5621, %v5528
      %5624 = vst.msk [vmem:[%s244 + $0x8] sm:$0xf] %vm5621, %v5530
      %5625 = vst.msk [vmem:[%s244 + $0xc] sm:$0xf] %vm5621, %v5532
      %5626 = vst.msk [vmem:[%s244 + $0x10] sm:$0xf] %vm5621, %v5534
      %5627 = vst.msk [vmem:[%s244 + $0x14] sm:$0xf] %vm5621, %v5536
      %5628 = vst.msk [vmem:[%s244 + $0x18] sm:$0xf] %vm5621, %v5538
      %5629 = vst.msk [vmem:[%s244 + $0x1c] sm:$0xf] %vm5621, %v5540
      %5630 = vst.msk [vmem:[%s244 + $0x20] sm:$0xf] %vm5621, %v5542
      %5631 = vst.msk [vmem:[%s244 + $0x24] sm:$0xf] %vm5621, %v5544
      %5632 = vst.msk [vmem:[%s244 + $0x28] sm:$0xf] %vm5621, %v5546
      %5633 = vst.msk [vmem:[%s244 + $0x2c] sm:$0xf] %vm5621, %v5548
      %5634 = vst.msk [vmem:[%s244 + $0x30] sm:$0xf] %vm5621, %v5550
      %5635 = vst.msk [vmem:[%s244 + $0x34] sm:$0xf] %vm5621, %v5552
      %5636 = vst.msk [vmem:[%s244 + $0x38] sm:$0xf] %vm5621, %v5554
      %5637 = vst.msk [vmem:[%s244 + $0x3c] sm:$0xf] %vm5621, %v5556
      %5638 = vst.msk [vmem:[%s244 + $0x40] sm:$0xf] %vm5621, %v5558
      %5639 = vst.msk [vmem:[%s244 + $0x44] sm:$0xf] %vm5621, %v5560
      %5640 = vst.msk [vmem:[%s244 + $0x48] sm:$0xf] %vm5621, %v5562
      %5641 = vst.msk [vmem:[%s244 + $0x4c] sm:$0xf] %vm5621, %v5564
      %5642 = vst.msk [vmem:[%s244 + $0x50] sm:$0xf] %vm5621, %v5566
      %5643 = vst.msk [vmem:[%s244 + $0x54] sm:$0xf] %vm5621, %v5568
      %5644 = vst.msk [vmem:[%s244 + $0x58] sm:$0xf] %vm5621, %v5570
      %5645 = vst.msk [vmem:[%s244 + $0x5c] sm:$0xf] %vm5621, %v5572
      %5646 = vst.msk [vmem:[%s244 + $0x60] sm:$0xf] %vm5621, %v5574
      %5647 = vst.msk [vmem:[%s244 + $0x64] sm:$0xf] %vm5621, %v5576
      %5648 = vst.msk [vmem:[%s244 + $0x68] sm:$0xf] %vm5621, %v5578
      %5649 = vst.msk [vmem:[%s244 + $0x6c] sm:$0xf] %vm5621, %v5580
      %5650 = vst.msk [vmem:[%s244 + $0x70] sm:$0xf] %vm5621, %v5582
      %5651 = vst.msk [vmem:[%s244 + $0x74] sm:$0xf] %vm5621, %v5584
      %5652 = vst.msk [vmem:[%s244 + $0x78] sm:$0xf] %vm5621, %v5586
      %5653 = vst.msk [vmem:[%s244 + $0x7c] sm:$0xf] %vm5621, %v5588
      %p5654 = scmp.lt.s32.totalorder %s16, 1
      %s5655 = scalar_select %p5654, %s16, 1
      %s5656 = smul.addr %s5655, 32
      %s5657 = smul.addr %s5656, 4
      %s5658 = scalar_lea.vmem %s5, %s5657
      // Predicated region
      $region41: #{tpu_custom_call.1} parent=39 // pred_check
        %p5659 = pneg %p149
      $region42: #{tpu_custom_call.1} parent=39 // pred_check_branch
        %5661 = sbr.rel (%p5659) target = $region44
      $region43: #{tpu_custom_call.1} parent=39 // pred_region
        _
      $region44: #{tpu_custom_call.1} parent=39 // pred_fallthru
        _
    $region40: #{tpu_custom_call.1} parent=5 // pred_fallthru
      _
    %p5662 = scmp.le.s32.totalorder 2, %s11
    // Predicated region
    $region45: #{tpu_custom_call.1} parent=5 // pred_check
      %p5663 = pneg %p5662
    $region46: #{tpu_custom_call.1} parent=5 // pred_check_branch
      %5665 = sbr.rel (%p5663) target = $region48
    $region47: #{tpu_custom_call.1} parent=5 // pred_region
      %s5666 = ssub.s32 %s11, 2
      // Predicated region
      $region49: #{tpu_custom_call.1} parent=47 // pred_check
        %p5667 = pneg %p155
      $region50: #{tpu_custom_call.1} parent=47 // pred_check_branch
        %5669 = sbr.rel (%p5667) target = $region52
      $region51: #{tpu_custom_call.1} parent=47 // pred_region
        %p5670 = scmp.lt.s32.totalorder %s17, 1
        %s5671 = scalar_select %p5670, %s17, 1
        %s5672 = smul.addr %s5671, 32
        %s5673 = smul.addr %s5672, 4
        %s5674 = scalar_lea.vmem %s5, %s5673
      $region52: #{tpu_custom_call.1} parent=47 // pred_fallthru
        _
    $region48: #{tpu_custom_call.1} parent=5 // pred_fallthru
      _
  $region6: #{tpu_custom_call.1} parent=0 // loop_footer
    %s15 = sadd.s32 1, %s11
  $region7: #{tpu_custom_call.1} parent=0 // loop_footer_branch
    %10 = sbr.rel target = $region3
  $region8: #{tpu_custom_call.1} parent=0 // loop_exit
    _

</llo_original>
